<compile_context>
chip_gen: v7x
topology: tpu7x:2x2x1
jax: 0.10.0
libtpu: 0.0.40
codegen_flags: <defaults>
</compile_context>

<pallas_src>
import functools

import jax
import jax.numpy as jnp
import numpy as np
from jax.experimental import pallas as pl
from jax.experimental.pallas import tpu as pltpu

BN_EPS = 1e-5


# -----------------------------------------------------------------------------
# Kernel 1: fused AvgPool(ds, stride=ds) + 1x1 Conv (no bias) + BN partial stats.
# Grid: (N, pooled_rows); each program consumes `ds` input rows of one image.
# -----------------------------------------------------------------------------
def _pool_conv_stats_kernel(x_ref, w_ref, y_ref, s_ref, ss_ref):
    # x_ref : (1, ds, W, Cin)   f32   input rows feeding one pooled row
    # w_ref : (Cin, Cout)       bf16  1x1 conv weight (pre-transposed)
    # y_ref : (1, 1, w, Cout)   f32   pooled-conv output row
    # s_ref / ss_ref : (1, 1, 1, Cout) f32 per-program BN partial sum / sumsq
    ds = x_ref.shape[1]
    cin = x_ref.shape[3]
    w_out = y_ref.shape[2]

    x = x_ref[0]                                              # (ds, W, Cin)
    xm = jnp.mean(x, axis=0)                                  # (W, Cin) vertical mean
    pooled = jnp.mean(xm.reshape(w_out, ds, cin), axis=1)     # (w, Cin)  full avg-pool

    y = jnp.dot(pooled.astype(jnp.bfloat16), w_ref[...],
                preferred_element_type=jnp.float32)           # (w, Cout) on the MXU

    y_ref[0, 0] = y
    s_ref[0, 0] = jnp.sum(y, axis=0, keepdims=True)
    ss_ref[0, 0] = jnp.sum(y * y, axis=0, keepdims=True)


# -----------------------------------------------------------------------------
# Kernel 2: fused BatchNorm (folded scale/shift) + ReLU + bilinear upsample.
# Grid: (N, output_row_tiles). Upsample = one matmul with kron(Wr_tile, Wc).
# -----------------------------------------------------------------------------
def _bn_relu_upsample_kernel(y_ref, scale_ref, shift_ref, wk_ref, o_ref):
    # y_ref  : (1, h, w, Cout)      f32  pooled-conv features of one image (tiny)
    # scale_ref / shift_ref : (1, Cout)  folded BN scale / shift
    # wk_ref : (1, TU*U, h*w)       f32  interpolation weights for this row tile
    # o_ref  : (1, 1, TU*U, Cout)   f32  flattened (row, col) tile of the output
    h, w, cout = y_ref.shape[1], y_ref.shape[2], y_ref.shape[3]
    z = jnp.maximum(y_ref[0] * scale_ref[...] + shift_ref[...], 0.0)  # BN + ReLU
    z_flat = z.reshape(h * w, cout)
    o_ref[0, 0] = jnp.dot(wk_ref[0], z_flat, preferred_element_type=jnp.float32)


# -----------------------------------------------------------------------------
# Host-side helpers (hoisted, trace-time constants).
# -----------------------------------------------------------------------------
def _bilinear_matrix(out_size, in_size):
    """UpsamplingBilinear2d (align_corners=True) interpolation matrix (out, in)."""
    m = np.zeros((out_size, in_size), np.float32)
    if in_size == 1 or out_size == 1:
        m[:, 0] = 1.0
        return m
    scale = (in_size - 1) / (out_size - 1)
    for o in range(out_size):
        src = o * scale
        i0 = min(int(np.floor(src)), in_size - 1)
        i1 = min(i0 + 1, in_size - 1)
        f = src - i0
        m[o, i0] += 1.0 - f
        m[o, i1] += f
    return m


def _pick_row_tile(u, cap=32):
    for t in range(min(u, cap), 0, -1):
        if u % t == 0:
            return t
    return u


# -----------------------------------------------------------------------------
# Forward pass (PSPDec semantics).
# -----------------------------------------------------------------------------
def psp_dec_forward(x_nchw, conv_w, gamma, beta, *, downsize, upsize):
    """x: (N, Cin, H, W) f32; conv_w: (Cin, Cout) bf16 (pre-prepped); gamma/beta: (Cout,).
    Returns (N, Cout, upsize, upsize) f32."""
    n, cin, hh, ww = x_nchw.shape
    ds, u = downsize, upsize
    assert hh % ds == 0 and ww % ds == 0, "spatial dims must be divisible by downsize"
    h, w = hh // ds, ww // ds
    cout = conv_w.shape[1]

    x_nhwc = jnp.transpose(x_nchw, (0, 2, 3, 1))              # NCHW -> NHWC (channels on lanes)

    # ---- kernel 1: avgpool + 1x1 conv + one-pass BN partial sums ------------
    y, s_part, ss_part = pl.pallas_call(
        _pool_conv_stats_kernel,
        out_shape=(
            jax.ShapeDtypeStruct((n, h, w, cout), jnp.float32),
            jax.ShapeDtypeStruct((n, h, 1, cout), jnp.float32),
            jax.ShapeDtypeStruct((n, h, 1, cout), jnp.float32),
        ),
        grid=(n, h),
        in_specs=[
            pl.BlockSpec((1, ds, ww, cin), lambda b, i: (b, i, 0, 0)),
            pl.BlockSpec((cin, cout), lambda b, i: (0, 0)),
        ],
        out_specs=(
            pl.BlockSpec((1, 1, w, cout), lambda b, i: (b, i, 0, 0)),
            pl.BlockSpec((1, 1, 1, cout), lambda b, i: (b, i, 0, 0)),
            pl.BlockSpec((1, 1, 1, cout), lambda b, i: (b, i, 0, 0)),
        ),
        compiler_params=pltpu.CompilerParams(
            dimension_semantics=("parallel", "parallel")),
    )(x_nhwc, conv_w)

    # ---- BN finalize: tiny (Cout,) math (train-mode batch statistics) -------
    m = float(n * h * w)
    tot = jnp.sum(s_part, axis=(0, 1, 2))
    tot2 = jnp.sum(ss_part, axis=(0, 1, 2))
    mean = tot / m
    var = jnp.maximum(tot2 / m - mean * mean, 0.0)            # biased variance
    inv = gamma * jax.lax.rsqrt(var + BN_EPS)
    scale = inv.reshape(1, cout)
    shift = (beta - mean * inv).reshape(1, cout)

    # ---- kernel 2: BN + ReLU + bilinear(align_corners=True) upsample --------
    tu = _pick_row_tile(u)
    n_tiles = u // tu
    wr = _bilinear_matrix(u, h)                               # (U, h)
    wc = _bilinear_matrix(u, w)                               # (U, w)
    # Per-row-tile kron matrix: (nT, TU*U, h*w). K = h*w stays tiny because the
    # PSP pooling stage shrinks the grid; for large pooled grids prefer a
    # separable two-matmul formulation instead.
    wk = jnp.asarray(np.stack(
        [np.kron(wr[t * tu:(t + 1) * tu], wc) for t in range(n_tiles)]))

    res = pl.pallas_call(
        _bn_relu_upsample_kernel,
        out_shape=jax.ShapeDtypeStruct((n, n_tiles, tu * u, cout), jnp.float32),
        grid=(n, n_tiles),
        in_specs=[
            pl.BlockSpec((1, h, w, cout), lambda b, t: (b, 0, 0, 0)),
            pl.BlockSpec((1, cout), lambda b, t: (0, 0)),
            pl.BlockSpec((1, cout), lambda b, t: (0, 0)),
            pl.BlockSpec((1, tu * u, h * w), lambda b, t: (t, 0, 0)),
        ],
        out_specs=pl.BlockSpec((1, 1, tu * u, cout), lambda b, t: (b, t, 0, 0)),
        compiler_params=pltpu.CompilerParams(
            dimension_semantics=("parallel", "parallel")),
    )(y, scale, shift, wk)

    out_nhwc = res.reshape(n, u, u, cout)                     # contiguous, layout-free
    return jnp.transpose(out_nhwc, (0, 3, 1, 2))              # NHWC -> NCHW


# -----------------------------------------------------------------------------
# Parameter init / prep and pure-JAX reference.
# -----------------------------------------------------------------------------
def init_params(key, in_features, out_features):
    k1, k2, k3 = jax.random.split(key, 3)
    conv_w_pt = (jax.random.normal(k1, (out_features, in_features, 1, 1), jnp.float32)
                 * (1.0 / np.sqrt(in_features)))
    gamma = 1.0 + 0.1 * jax.random.normal(k2, (out_features,), jnp.float32)
    beta = 0.1 * jax.random.normal(k3, (out_features,), jnp.float32)
    return dict(conv_w=conv_w_pt, gamma=gamma, beta=beta)


def prepare_params(params):
    """One-time (hoisted) weight prep: PyTorch (Cout, Cin, 1, 1) -> (Cin, Cout) bf16."""
    cw = params["conv_w"]
    cout, cin = cw.shape[0], cw.shape[1]
    conv_w = jnp.transpose(cw.reshape(cout, cin), (1, 0)).astype(jnp.bfloat16)
    return conv_w, params["gamma"], params["beta"]


def reference_forward(x_nchw, params, *, downsize, upsize):
    n, cin, hh, ww = x_nchw.shape
    h, w = hh // downsize, ww // downsize
    cw = params["conv_w"].reshape(params["conv_w"].shape[0], cin)
    xp = x_nchw.reshape(n, cin, h, downsize, w, downsize).mean(axis=(3, 5))
    y = jnp.einsum("oc,nchw->nohw", cw, xp)
    mean = y.mean(axis=(0, 2, 3), keepdims=True)
    var = y.var(axis=(0, 2, 3), keepdims=True)
    z = (y - mean) * jax.lax.rsqrt(var + BN_EPS)
    z = z * params["gamma"].reshape(1, -1, 1, 1) + params["beta"].reshape(1, -1, 1, 1)
    z = jnp.maximum(z, 0.0)
    wr = jnp.asarray(_bilinear_matrix(upsize, h))
    wc = jnp.asarray(_bilinear_matrix(upsize, w))
    return jnp.einsum("uh,vw,nchw->ncuv", wr, wc, z)


if __name__ == "__main__":
    N, C_IN, C_OUT = 2, 256, 128
    H = W = 16
    DOWNSIZE, UPSIZE = 4, 60        # module default upsize=60

    key = jax.random.PRNGKey(0)
    key, kx = jax.random.split(key)
    x = jax.random.normal(kx, (N, C_IN, H, W), jnp.float32)
    params = init_params(key, C_IN, C_OUT)
    conv_w, gamma, beta = prepare_params(params)

    fwd = jax.jit(functools.partial(psp_dec_forward, downsize=DOWNSIZE, upsize=UPSIZE))
    out = jax.block_until_ready(fwd(x, conv_w, gamma, beta))

    assert out.shape == (N, C_OUT, UPSIZE, UPSIZE), out.shape
    assert bool(jnp.isfinite(out).all())

    ref = reference_forward(x, params, downsize=DOWNSIZE, upsize=UPSIZE)
    max_err = float(jnp.max(jnp.abs(out - ref)))
    assert max_err < 6e-2, f"max abs err {max_err}"

    print("KERNEL_OK")
</pallas_src>

<mosaic_0001>
module attributes {stable_mosaic.version = 11 : i64} {
  func.func @_bn_relu_upsample_kernel(%arg0: i32, %arg1: i32, %arg2: memref<1x4x4x128xf32, #tpu.memory_space<vmem>>, %arg3: memref<1x128xf32, #tpu.memory_space<vmem>>, %arg4: memref<1x128xf32, #tpu.memory_space<vmem>>, %arg5: memref<1x1800x16xf32, #tpu.memory_space<vmem>>, %arg6: memref<1x1x1800x128xf32, #tpu.memory_space<vmem>>) attributes {dimension_semantics = [#tpu.dimension_semantics<parallel>, #tpu.dimension_semantics<parallel>], iteration_bounds = array<i64: 2, 2>, scalar_prefetch = 0 : i64, scratch_operands = 0 : i64, tpu.core_type = #tpu.core_type<tc>, window_params = [{transform_indices = @transform_0, window_bounds = array<i64: 1, 4, 4, 128>}, {pipeline_mode = #tpu.pipeline_mode<synchronous>, transform_indices = @transform_1, window_bounds = array<i64: 1, 128>}, {pipeline_mode = #tpu.pipeline_mode<synchronous>, transform_indices = @transform_2, window_bounds = array<i64: 1, 128>}, {transform_indices = @transform_3, window_bounds = array<i64: 1, 1800, 16>}, {transform_indices = @transform_4, window_bounds = array<i64: 1, 1, 1800, 128>}]} {
    %c0 = arith.constant 0 : index
    %c0_0 = arith.constant 0 : index
    %c0_1 = arith.constant 0 : index
    %c0_2 = arith.constant 0 : index
    %0 = vector.load %arg2[%c0, %c0_0, %c0_1, %c0_2] : memref<1x4x4x128xf32, #tpu.memory_space<vmem>>, vector<1x4x4x128xf32>
    %1 = vector.shape_cast %0 : vector<1x4x4x128xf32> to vector<4x4x128xf32>
    %c0_3 = arith.constant 0 : index
    %c0_4 = arith.constant 0 : index
    %2 = vector.load %arg3[%c0_3, %c0_4] : memref<1x128xf32, #tpu.memory_space<vmem>>, vector<1x128xf32>
    %3 = vector.shape_cast %2 : vector<1x128xf32> to vector<1x1x128xf32>
    %4 = vector.broadcast %3 : vector<1x1x128xf32> to vector<4x4x128xf32>
    %5 = arith.mulf %1, %4 : vector<4x4x128xf32>
    %c0_5 = arith.constant 0 : index
    %c0_6 = arith.constant 0 : index
    %6 = vector.load %arg4[%c0_5, %c0_6] : memref<1x128xf32, #tpu.memory_space<vmem>>, vector<1x128xf32>
    %7 = vector.shape_cast %6 : vector<1x128xf32> to vector<1x1x128xf32>
    %8 = vector.broadcast %7 : vector<1x1x128xf32> to vector<4x4x128xf32>
    %9 = arith.addf %5, %8 : vector<4x4x128xf32>
    %cst = arith.constant 0.000000e+00 : f32
    %10 = vector.broadcast %cst : f32 to vector<4x4x128xf32>
    %11 = arith.maximumf %9, %10 : vector<4x4x128xf32>
    %12 = vector.shape_cast %11 : vector<4x4x128xf32> to vector<16x128xf32>
    %c0_7 = arith.constant 0 : index
    %c0_8 = arith.constant 0 : index
    %c0_9 = arith.constant 0 : index
    %13 = vector.load %arg5[%c0_7, %c0_8, %c0_9] : memref<1x1800x16xf32, #tpu.memory_space<vmem>>, vector<1x1800x16xf32>
    %14 = vector.shape_cast %13 : vector<1x1800x16xf32> to vector<1800x16xf32>
    %cst_10 = arith.constant dense<0.000000e+00> : vector<1800x128xf32>
    %15 = tpu.matmul %14, %12, %cst_10 {dimension_numbers = #tpu.dot_dimension_numbers<[1], [0], [0], [1], [0, 0, 1, 1], [], []>} : vector<1800x16xf32>, vector<16x128xf32>, vector<1800x128xf32> -> vector<1800x128xf32>
    %c0_11 = arith.constant 0 : index
    %c0_12 = arith.constant 0 : index
    %c0_13 = arith.constant 0 : index
    %c0_14 = arith.constant 0 : index
    %16 = vector.load %arg6[%c0_11, %c0_12, %c0_13, %c0_14] : memref<1x1x1800x128xf32, #tpu.memory_space<vmem>>, vector<1x1x1800x128xf32>
    %17 = vector.shape_cast %16 : vector<1x1x1800x128xf32> to vector<1800x128xf32>
    %18 = vector.shape_cast %15 : vector<1800x128xf32> to vector<1x1x1800x128xf32>
    tpu.vector_store %arg6[%c0_11, %c0_12, %c0_13, %c0_14], %18 {strides = array<i32>} : memref<1x1x1800x128xf32, #tpu.memory_space<vmem>>, vector<1x1x1800x128xf32>,
    return
  }
  func.func @transform_0(%arg0: i32, %arg1: i32) -> (i32, i32, i32, i32) {
    %c0_i32 = arith.constant 0 : i32
    %c0_i32_0 = arith.constant 0 : i32
    %c0_i32_1 = arith.constant 0 : i32
    %c0_i32_2 = arith.constant 0 : i32
    return %arg0, %c0_i32, %c0_i32_0, %c0_i32_1 : i32, i32, i32, i32
  }
  func.func @transform_1(%arg0: i32, %arg1: i32) -> (i32, i32) {
    %c0_i32 = arith.constant 0 : i32
    %c0_i32_0 = arith.constant 0 : i32
    %c0_i32_1 = arith.constant 0 : i32
    return %c0_i32, %c0_i32_0 : i32, i32
  }
  func.func @transform_2(%arg0: i32, %arg1: i32) -> (i32, i32) {
    %c0_i32 = arith.constant 0 : i32
    %c0_i32_0 = arith.constant 0 : i32
    %c0_i32_1 = arith.constant 0 : i32
    return %c0_i32, %c0_i32_0 : i32, i32
  }
  func.func @transform_3(%arg0: i32, %arg1: i32) -> (i32, i32, i32) {
    %c0_i32 = arith.constant 0 : i32
    %c0_i32_0 = arith.constant 0 : i32
    %c0_i32_1 = arith.constant 0 : i32
    return %arg1, %c0_i32, %c0_i32_0 : i32, i32, i32
  }
  func.func @transform_4(%arg0: i32, %arg1: i32) -> (i32, i32, i32, i32) {
    %c0_i32 = arith.constant 0 : i32
    %c0_i32_0 = arith.constant 0 : i32
    %c0_i32_1 = arith.constant 0 : i32
    return %arg0, %arg1, %c0_i32, %c0_i32_0 : i32, i32, i32, i32
  }
}

module attributes {stable_mosaic.version = 11 : i64} {
  func.func @_pool_conv_stats_kernel(%arg0: i32, %arg1: i32, %arg2: memref<1x4x16x256xf32, #tpu.memory_space<vmem>>, %arg3: memref<256x128xbf16, #tpu.memory_space<vmem>>, %arg4: memref<1x1x4x128xf32, #tpu.memory_space<vmem>>, %arg5: memref<1x1x1x128xf32, #tpu.memory_space<vmem>>, %arg6: memref<1x1x1x128xf32, #tpu.memory_space<vmem>>) attributes {dimension_semantics = [#tpu.dimension_semantics<parallel>, #tpu.dimension_semantics<parallel>], iteration_bounds = array<i64: 2, 4>, scalar_prefetch = 0 : i64, scratch_operands = 0 : i64, tpu.core_type = #tpu.core_type<tc>, window_params = [{transform_indices = @transform_0, window_bounds = array<i64: 1, 4, 16, 256>}, {pipeline_mode = #tpu.pipeline_mode<synchronous>, transform_indices = @transform_1, window_bounds = array<i64: 256, 128>}, {transform_indices = @transform_2, window_bounds = array<i64: 1, 1, 4, 128>}, {transform_indices = @transform_3, window_bounds = array<i64: 1, 1, 1, 128>}, {transform_indices = @transform_4, window_bounds = array<i64: 1, 1, 1, 128>}]} {
    %c0 = arith.constant 0 : index
    %c0_0 = arith.constant 0 : index
    %c0_1 = arith.constant 0 : index
    %c0_2 = arith.constant 0 : index
    %0 = vector.load %arg2[%c0, %c0_0, %c0_1, %c0_2] : memref<1x4x16x256xf32, #tpu.memory_space<vmem>>, vector<1x4x16x256xf32>
    %1 = vector.shape_cast %0 : vector<1x4x16x256xf32> to vector<4x16x256xf32>
    %cst = arith.constant dense<0.000000e+00> : vector<16x256xf32>
    %2 = vector.multi_reduction <add>, %1, %cst [0] : vector<4x16x256xf32> to vector<16x256xf32>
    %cst_3 = arith.constant 4.000000e+00 : f32
    %3 = vector.broadcast %cst_3 : f32 to vector<16x256xf32>
    %4 = arith.divf %2, %3 : vector<16x256xf32>
    %5 = vector.shape_cast %4 : vector<16x256xf32> to vector<4x4x256xf32>
    %cst_4 = arith.constant dense<0.000000e+00> : vector<4x256xf32>
    %6 = vector.multi_reduction <add>, %5, %cst_4 [1] : vector<4x4x256xf32> to vector<4x256xf32>
    %cst_5 = arith.constant 4.000000e+00 : f32
    %7 = vector.broadcast %cst_5 : f32 to vector<4x256xf32>
    %8 = arith.divf %6, %7 : vector<4x256xf32>
    %9 = arith.truncf %8 : vector<4x256xf32> to vector<4x256xbf16>
    %c0_6 = arith.constant 0 : index
    %c0_7 = arith.constant 0 : index
    %10 = vector.load %arg3[%c0_6, %c0_7] : memref<256x128xbf16, #tpu.memory_space<vmem>>, vector<256x128xbf16>
    %cst_8 = arith.constant dense<0.000000e+00> : vector<4x128xf32>
    %11 = tpu.matmul %9, %10, %cst_8 {dimension_numbers = #tpu.dot_dimension_numbers<[1], [0], [0], [1], [0, 0, 1, 1], [], []>} : vector<4x256xbf16>, vector<256x128xbf16>, vector<4x128xf32> -> vector<4x128xf32>
    %c0_9 = arith.constant 0 : index
    %c0_10 = arith.constant 0 : index
    %c0_11 = arith.constant 0 : index
    %c0_12 = arith.constant 0 : index
    %12 = vector.load %arg4[%c0_9, %c0_10, %c0_11, %c0_12] : memref<1x1x4x128xf32, #tpu.memory_space<vmem>>, vector<1x1x4x128xf32>
    %13 = vector.shape_cast %12 : vector<1x1x4x128xf32> to vector<4x128xf32>
    %14 = vector.shape_cast %11 : vector<4x128xf32> to vector<1x1x4x128xf32>
    tpu.vector_store %arg4[%c0_9, %c0_10, %c0_11, %c0_12], %14 {strides = array<i32>} : memref<1x1x4x128xf32, #tpu.memory_space<vmem>>, vector<1x1x4x128xf32>,
    %cst_13 = arith.constant dense<0.000000e+00> : vector<128xf32>
    %15 = vector.multi_reduction <add>, %11, %cst_13 [0] : vector<4x128xf32> to vector<128xf32>
    %16 = vector.shape_cast %15 : vector<128xf32> to vector<1x128xf32>
    %c0_14 = arith.constant 0 : index
    %c0_15 = arith.constant 0 : index
    %c0_16 = arith.constant 0 : index
    %c0_17 = arith.constant 0 : index
    %17 = vector.load %arg5[%c0_14, %c0_15, %c0_16, %c0_17] : memref<1x1x1x128xf32, #tpu.memory_space<vmem>>, vector<1x1x1x128xf32>
    %18 = vector.shape_cast %17 : vector<1x1x1x128xf32> to vector<1x128xf32>
    %19 = vector.shape_cast %16 : vector<1x128xf32> to vector<1x1x1x128xf32>
    tpu.vector_store %arg5[%c0_14, %c0_15, %c0_16, %c0_17], %19 {strides = array<i32>} : memref<1x1x1x128xf32, #tpu.memory_space<vmem>>, vector<1x1x1x128xf32>,
    %20 = arith.mulf %11, %11 : vector<4x128xf32>
    %cst_18 = arith.constant dense<0.000000e+00> : vector<128xf32>
    %21 = vector.multi_reduction <add>, %20, %cst_18 [0] : vector<4x128xf32> to vector<128xf32>
    %22 = vector.shape_cast %21 : vector<128xf32> to vector<1x128xf32>
    %c0_19 = arith.constant 0 : index
    %c0_20 = arith.constant 0 : index
    %c0_21 = arith.constant 0 : index
    %c0_22 = arith.constant 0 : index
    %23 = vector.load %arg6[%c0_19, %c0_20, %c0_21, %c0_22] : memref<1x1x1x128xf32, #tpu.memory_space<vmem>>, vector<1x1x1x128xf32>
    %24 = vector.shape_cast %23 : vector<1x1x1x128xf32> to vector<1x128xf32>
    %25 = vector.shape_cast %22 : vector<1x128xf32> to vector<1x1x1x128xf32>
    tpu.vector_store %arg6[%c0_19, %c0_20, %c0_21, %c0_22], %25 {strides = array<i32>} : memref<1x1x1x128xf32, #tpu.memory_space<vmem>>, vector<1x1x1x128xf32>,
    return
  }
  func.func @transform_0(%arg0: i32, %arg1: i32) -> (i32, i32, i32, i32) {
    %c0_i32 = arith.constant 0 : i32
    %c0_i32_0 = arith.constant 0 : i32
    %c0_i32_1 = arith.constant 0 : i32
    return %arg0, %arg1, %c0_i32, %c0_i32_0 : i32, i32, i32, i32
  }
  func.func @transform_1(%arg0: i32, %arg1: i32) -> (i32, i32) {
    %c0_i32 = arith.constant 0 : i32
    %c0_i32_0 = arith.constant 0 : i32
    %c0_i32_1 = arith.constant 0 : i32
    return %c0_i32, %c0_i32_0 : i32, i32
  }
  func.func @transform_2(%arg0: i32, %arg1: i32) -> (i32, i32, i32, i32) {
    %c0_i32 = arith.constant 0 : i32
    %c0_i32_0 = arith.constant 0 : i32
    %c0_i32_1 = arith.constant 0 : i32
    return %arg0, %arg1, %c0_i32, %c0_i32_0 : i32, i32, i32, i32
  }
  func.func @transform_3(%arg0: i32, %arg1: i32) -> (i32, i32, i32, i32) {
    %c0_i32 = arith.constant 0 : i32
    %c0_i32_0 = arith.constant 0 : i32
    %c0_i32_1 = arith.constant 0 : i32
    return %arg0, %arg1, %c0_i32, %c0_i32_0 : i32, i32, i32, i32
  }
  func.func @transform_4(%arg0: i32, %arg1: i32) -> (i32, i32, i32, i32) {
    %c0_i32 = arith.constant 0 : i32
    %c0_i32_0 = arith.constant 0 : i32
    %c0_i32_1 = arith.constant 0 : i32
    return %arg0, %arg1, %c0_i32, %c0_i32_0 : i32, i32, i32, i32
  }
}

</mosaic_0001>

<llo_original>
// kernel: psp_dec_forward.2
$region0: #{psp_dec_forward.2}
  #allocation0 [shape = 'u32[]', space=smem, size = 0x4, offset = 0x4, fixed_abs, tag = 'smem constant byte address 0x4 - core index']
  #allocation1 [shape = 'u32[144,128]{1,0:T(1,128)}', space=vmem, size = 0x12000, scoped, tag = 'internal scratch']
  %s0 = inlined_call_operand.hbm [shape: f32[2,16,16,256], index: 0, kind: input, shape index: {}]
  %s1 = inlined_call_operand.hbm [shape: bf16[256,128], index: 1, kind: input, shape index: {}]
  %s2 = inlined_call_operand.vmem [shape: f32[2,4,4,128], index: 2, kind: output, shape index: {0}]
  %s3 = inlined_call_operand.vmem [shape: f32[2,4,1,128], index: 3, kind: output, shape index: {1}]
  %s4 = inlined_call_operand.vmem [shape: f32[2,4,1,128], index: 4, kind: output, shape index: {2}]
  %5 = xla_tuple %s2, %s3, %s4
  %s6 = sld [smem:[#allocation0]]
  $region65: #{psp_dec_forward.2} parent=0
    _
  %s8 = ssub.s32 1, %s6
  %s9 = scalar_select 0, %s8, %s6
  $region1: #{psp_dec_forward.2} parent=0
    #allocation2 [shape = 'u8[131072]{0}', space=vmem, size = 0x20000, scoped, tag = 'input window, operand 0']
    #allocation3 [shape = 's32[2]{0}', space=sflag, size = 0x8, scoped, tag = 'scoped memory for psp_dec_forward.2']
    #allocation4 [shape = 'u8[65536]{0}', space=vmem, size = 0x10000, scoped, tag = 'input window, operand 1, single buffered']
    #allocation5 [shape = 's32[1]{0}', space=sflag, size = 0x4, scoped, tag = 'scoped memory for psp_dec_forward.2']
    %10 = vsyncpa [#allocation3], 0
    %s11 = scalar_lea.sflag [#allocation3], 1
    %12 = vsyncpa %s11, 0
    %13 = vsyncpa [#allocation5], 0
    loop: start=0, step=1, limit=10
    $region2: #{psp_dec_forward.2} parent=1 // loop_pre_header
      _
    $region3: #{psp_dec_forward.2} parent=1 // loop_header
      %s15 = sphi 0, %s19
      %p16 = scmp.ge.s32.totalorder %s15, 10
      %s22 = sphi 0, %s34
      %s23 = sphi 0, %s30
      %s24 = sphi 0, %s22
      %s25 = sphi 0, %s23
      %s26 = sphi 0, %s24
      %s27 = sphi 0, %s25
      %s39 = sphi 0, %s41
      %s42 = sphi 0, %s39
      %s43 = sphi 0, %s42
      %s59 = sphi 0, %s43
      %s63 = sphi 0, %s63
      %s65 = sphi 0, %s63
      %s66 = sphi 0, %s65
      %s80 = sphi 0, %s66
      %s88 = sphi 0, %s90
      %s91 = sphi 0, %s88
      %s92 = sphi 0, %s91
      %s108 = sphi 0, %s92
      %s116 = sphi 0, %s118
      %s119 = sphi 0, %s116
      %s120 = sphi 0, %s119
      %s136 = sphi 0, %s120
      %s144 = sphi 0, %s146
      %s147 = sphi 0, %s144
      %s148 = sphi 0, %s147
      %s164 = sphi 0, %s148
    $region4: #{psp_dec_forward.2} parent=1 // loop_header_branch
      %18 = sbr.rel (%p16) target = $region8
    $region5: #{psp_dec_forward.2} parent=1 // loop_body
      %s20 = ssub.s32 %s15, 1
      %s21 = ssub.s32 %s15, 2
      %s28 = sadd.s32 1, %s23
      %p29 = scmp.ge.s32.totalorder %s28, 4
      %s30 = scalar_select %p29, 0, %s28
      %s31 = sadd.s32 1, %s22
      %s32 = scalar_select %p29, %s31, %s22
      %p33 = scmp.ge.s32.totalorder %s32, 2
      %s34 = scalar_select %p33, 0, %s32
      %s35 = ssub.s32 %s22, %s34
      %s36 = ssub.s32 %s23, %s30
      %s37 = sor.u32 %s35, %s36
      %p38 = scmp.eq.s32.totalorder %s37, 0
      %s40 = sadd.s32 %s39, 1
      %s41 = scalar_select %p38, %s39, %s40
      %p44 = pneg %p38
      %p45 = scmp.eq.s32.totalorder %s15, 7
      %p46 = por %p44, %p45
      %p47 = scmp.ne.s32.totalorder %s39, %s42
      %p48 = scmp.eq.s32.totalorder %s15, 0
      %p49 = por %p47, %p48
      %p50 = scmp.ne.s32.totalorder %s39, %s42
      %p51 = scmp.eq.s32.totalorder %s20, 7
      %p52 = por %p50, %p51
      %p53 = scmp.ne.s32.totalorder %s42, %s43
      %p54 = scmp.eq.s32.totalorder %s20, 0
      %p55 = por %p53, %p54
      %p56 = scmp.ne.s32.totalorder %s42, %s43
      %p57 = scmp.eq.s32.totalorder %s21, 7
      %p58 = por %p56, %p57
      %p60 = scmp.ne.s32.totalorder %s43, %s59
      %p61 = scmp.eq.s32.totalorder %s21, 0
      %p62 = por %p60, %p61
      %s64 = sadd.s32 %s63, 1
      %p67 = scmp.eq.s32.totalorder %s15, 7
      %p68 = scmp.ne.s32.totalorder %s63, %s65
      %p69 = scmp.eq.s32.totalorder %s15, 0
      %p70 = por %p68, %p69
      %p71 = scmp.ne.s32.totalorder %s63, %s65
      %p72 = scmp.eq.s32.totalorder %s20, 7
      %p73 = por %p71, %p72
      %p74 = scmp.ne.s32.totalorder %s65, %s66
      %p75 = scmp.eq.s32.totalorder %s20, 0
      %p76 = por %p74, %p75
      %p77 = scmp.ne.s32.totalorder %s65, %s66
      %p78 = scmp.eq.s32.totalorder %s21, 7
      %p79 = por %p77, %p78
      %p81 = scmp.ne.s32.totalorder %s66, %s80
      %p82 = scmp.eq.s32.totalorder %s21, 0
      %p83 = por %p81, %p82
      %s84 = ssub.s32 %s22, %s34
      %s85 = ssub.s32 %s23, %s30
      %s86 = sor.u32 %s84, %s85
      %p87 = scmp.eq.s32.totalorder %s86, 0
      %s89 = sadd.s32 %s88, 1
      %s90 = scalar_select %p87, %s88, %s89
      %p93 = pneg %p87
      %p94 = scmp.eq.s32.totalorder %s15, 7
      %p95 = por %p93, %p94
      %p96 = scmp.ne.s32.totalorder %s88, %s91
      %p97 = scmp.eq.s32.totalorder %s15, 0
      %p98 = por %p96, %p97
      %p99 = scmp.ne.s32.totalorder %s88, %s91
      %p100 = scmp.eq.s32.totalorder %s20, 7
      %p101 = por %p99, %p100
      %p102 = scmp.ne.s32.totalorder %s91, %s92
      %p103 = scmp.eq.s32.totalorder %s20, 0
      %p104 = por %p102, %p103
      %p105 = scmp.ne.s32.totalorder %s91, %s92
      %p106 = scmp.eq.s32.totalorder %s21, 7
      %p107 = por %p105, %p106
      %p109 = scmp.ne.s32.totalorder %s92, %s108
      %p110 = scmp.eq.s32.totalorder %s21, 0
      %p111 = por %p109, %p110
      %s112 = ssub.s32 %s22, %s34
      %s113 = ssub.s32 %s23, %s30
      %s114 = sor.u32 %s112, %s113
      %p115 = scmp.eq.s32.totalorder %s114, 0
      %s117 = sadd.s32 %s116, 1
      %s118 = scalar_select %p115, %s116, %s117
      %p121 = pneg %p115
      %p122 = scmp.eq.s32.totalorder %s15, 7
      %p123 = por %p121, %p122
      %p124 = scmp.ne.s32.totalorder %s116, %s119
      %p125 = scmp.eq.s32.totalorder %s15, 0
      %p126 = por %p124, %p125
      %p127 = scmp.ne.s32.totalorder %s116, %s119
      %p128 = scmp.eq.s32.totalorder %s20, 7
      %p129 = por %p127, %p128
      %p130 = scmp.ne.s32.totalorder %s119, %s120
      %p131 = scmp.eq.s32.totalorder %s20, 0
      %p132 = por %p130, %p131
      %p133 = scmp.ne.s32.totalorder %s119, %s120
      %p134 = scmp.eq.s32.totalorder %s21, 7
      %p135 = por %p133, %p134
      %p137 = scmp.ne.s32.totalorder %s120, %s136
      %p138 = scmp.eq.s32.totalorder %s21, 0
      %p139 = por %p137, %p138
      %s140 = ssub.s32 %s22, %s34
      %s141 = ssub.s32 %s23, %s30
      %s142 = sor.u32 %s140, %s141
      %p143 = scmp.eq.s32.totalorder %s142, 0
      %s145 = sadd.s32 %s144, 1
      %s146 = scalar_select %p143, %s144, %s145
      %p149 = pneg %p143
      %p150 = scmp.eq.s32.totalorder %s15, 7
      %p151 = por %p149, %p150
      %p152 = scmp.ne.s32.totalorder %s144, %s147
      %p153 = scmp.eq.s32.totalorder %s15, 0
      %p154 = por %p152, %p153
      %p155 = scmp.ne.s32.totalorder %s144, %s147
      %p156 = scmp.eq.s32.totalorder %s20, 7
      %p157 = por %p155, %p156
      %p158 = scmp.ne.s32.totalorder %s147, %s148
      %p159 = scmp.eq.s32.totalorder %s20, 0
      %p160 = por %p158, %p159
      %p161 = scmp.ne.s32.totalorder %s147, %s148
      %p162 = scmp.eq.s32.totalorder %s21, 7
      %p163 = por %p161, %p162
      %p165 = scmp.ne.s32.totalorder %s148, %s164
      %p166 = scmp.eq.s32.totalorder %s21, 0
      %p167 = por %p165, %p166
      %p168 = scmp.le.s32.totalorder 1, %s15
      %p169 = scmp.lt.s32.totalorder %s15, 9
      %p170 = pnand %p168, %p169
      %p171 = pneg %p170
      // Predicated region
      $region9: #{psp_dec_forward.2} parent=5 // pred_check
        _
      $region10: #{psp_dec_forward.2} parent=5 // pred_check_branch
        %173 = sbr.rel (%p170) target = $region12
      $region11: #{psp_dec_forward.2} parent=5 // pred_region
        %s174 = ssub.s32 %s15, 1
        // Predicated region
        $region13: #{psp_dec_forward.2} parent=11 // pred_check
          %p175 = pneg %p76
        $region14: #{psp_dec_forward.2} parent=11 // pred_check_branch
          %177 = sbr.rel (%p175) target = $region16
        $region15: #{psp_dec_forward.2} parent=11 // pred_region
          %s179 = ssub.s32 2048, 2048
          %180 = vsyncadd [#allocation5], %s179
          %s181 = sshll.u32 [#allocation4], 4
          %s182 = int_to_ptr.vmem [resolvable:$true] %s181
          %187 = dma.hbm_to_vmem [thread:$0]  %s1, 2048, %s182, [#allocation5], 64, 64, 4
        $region16: #{psp_dec_forward.2} parent=11 // pred_fallthru
          _
      $region12: #{psp_dec_forward.2} parent=5 // pred_fallthru
        _
      %p188 = scmp.lt.s32.totalorder %s15, 8
      // Predicated region
      $region17: #{psp_dec_forward.2} parent=5 // pred_check
        %p189 = pneg %p188
      $region18: #{psp_dec_forward.2} parent=5 // pred_check_branch
        %191 = sbr.rel (%p189) target = $region20
      $region19: #{psp_dec_forward.2} parent=5 // pred_region
        // Predicated region
        $region21: #{psp_dec_forward.2} parent=19 // pred_check
          %p192 = pneg %p49
        $region22: #{psp_dec_forward.2} parent=19 // pred_check_branch
          %194 = sbr.rel (%p192) target = $region24
        $region23: #{psp_dec_forward.2} parent=19 // pred_region
          %s195 = sand.u32 %s39, 1
          %s196 = scalar_lea.sflag [#allocation3], %s195
          %s197 = sand.u32 %s39, 1
          %s198 = smul.addr %s197, 128
          %s199 = scalar_lea.vmem [#allocation2], %s198
          %s200 = smul.u32 4, %s23
          %s202 = ssub.s32 2048, 2048
          %203 = vsyncadd %s196, %s202
          %s204 = smul.addr %s200, 4
          %s205 = smul.addr %s22, 64
          %s206 = sadd.s32 %s204, %s205
          %s207 = smul.addr %s206, 128
          %s208 = scalar_lea.hbm %s0, %s207
          %s209 = sshll.u32 %s199, 4
          %s210 = int_to_ptr.vmem [resolvable:$true] %s209
          %215 = dma.hbm_to_vmem [thread:$0]  %s208, 2048, %s210, %s196, 256, 256, 16
        $region24: #{psp_dec_forward.2} parent=19 // pred_fallthru
          _
      $region20: #{psp_dec_forward.2} parent=5 // pred_fallthru
        _
      %p216 = scmp.le.s32.totalorder 1, %s15
      %p217 = scmp.lt.s32.totalorder %s15, 9
      %p218 = pnand %p216, %p217
      %p219 = pneg %p218
      // Predicated region
      $region25: #{psp_dec_forward.2} parent=5 // pred_check
        _
      $region26: #{psp_dec_forward.2} parent=5 // pred_check_branch
        %221 = sbr.rel (%p218) target = $region28
      $region27: #{psp_dec_forward.2} parent=5 // pred_region
        %s222 = ssub.s32 %s15, 1
        %s223 = sand.u32 %s42, 1
        %s224 = scalar_lea.sflag [#allocation3], %s223
        %s225 = sand.u32 %s42, 1
        %s226 = smul.addr %s225, 128
        %s227 = scalar_lea.vmem [#allocation2], %s226
        // Predicated region
        $region29: #{psp_dec_forward.2} parent=27 // pred_check
          %p228 = pneg %p55
        $region30: #{psp_dec_forward.2} parent=27 // pred_check_branch
          %230 = sbr.rel (%p228) target = $region32
        $region31: #{psp_dec_forward.2} parent=27 // pred_region
          %231 = dma.done %s224, 2048
        $region32: #{psp_dec_forward.2} parent=27 // pred_fallthru
          _
        // Predicated region
        $region33: #{psp_dec_forward.2} parent=27 // pred_check
          %p232 = pneg %p76
        $region34: #{psp_dec_forward.2} parent=27 // pred_check_branch
          %234 = sbr.rel (%p232) target = $region36
        $region35: #{psp_dec_forward.2} parent=27 // pred_region
          %235 = dma.done [#allocation5], 2048
        $region36: #{psp_dec_forward.2} parent=27 // pred_fallthru
          _
        %s236 = sand.u32 %s42, 1
        %s237 = scalar_lea.sflag [#allocation3], %s236
        %s238 = sand.u32 %s42, 1
        %s239 = smul.addr %s238, 128
        %s240 = scalar_lea.vmem [#allocation2], %s239
        %p241 = pneg %p55
        %p242 = pneg %p52
        %p243 = pneg %p76
        %p244 = pneg %p73
        %p245 = pneg %p104
        %p246 = pneg %p101
        %p247 = scmp.lt.s32.totalorder %s24, 1
        %s248 = scalar_select %p247, %s24, 1
        %p249 = scmp.lt.s32.totalorder %s25, 3
        %s250 = scalar_select %p249, %s25, 3
        %s251 = smul.addr %s248, 4
        %s252 = sadd.s32 %s250, %s251
        %s253 = smul.addr %s252, 4
        %s254 = scalar_lea.vmem %s2, %s253
        %p255 = pneg %p132
        %p256 = pneg %p129
        %p257 = scmp.lt.s32.totalorder %s24, 1
        %s258 = scalar_select %p257, %s24, 1
        %p259 = scmp.lt.s32.totalorder %s25, 3
        %s260 = scalar_select %p259, %s25, 3
        %s261 = smul.addr %s258, 4
        %s262 = sadd.s32 %s260, %s261
        %s263 = scalar_lea.vmem %s3, %s262
        %p264 = pneg %p160
        %p265 = pneg %p157
        %p266 = scmp.lt.s32.totalorder %s24, 1
        %s267 = scalar_select %p266, %s24, 1
        %p268 = scmp.lt.s32.totalorder %s25, 3
        %s269 = scalar_select %p268, %s25, 3
        %s270 = smul.addr %s267, 4
        %s271 = sadd.s32 %s269, %s270
        %s272 = scalar_lea.vmem %s4, %s271
        %s273 = smul.u32 4, %s25
        %p274 = scmp.lt.s32.totalorder %s24, 1
        %s275 = scalar_select %p274, %s24, 1
        %p276 = scmp.lt.s32.totalorder %s25, 3
        %s277 = scalar_select %p276, %s25, 3
        %s278 = smul.addr %s275, 4
        %s279 = sadd.s32 %s277, %s278
        %s280 = smul.addr %s279, 4
        %s281 = scalar_lea.vmem %s2, %s280
        %p282 = scmp.lt.s32.totalorder %s24, 1
        %s283 = scalar_select %p282, %s24, 1
        %p284 = scmp.lt.s32.totalorder %s25, 3
        %s285 = scalar_select %p284, %s25, 3
        %s286 = smul.addr %s283, 4
        %s287 = sadd.s32 %s285, %s286
        %s288 = scalar_lea.vmem %s3, %s287
        %p289 = scmp.lt.s32.totalorder %s24, 1
        %s290 = scalar_select %p289, %s24, 1
        %p291 = scmp.lt.s32.totalorder %s25, 3
        %s292 = scalar_select %p291, %s25, 3
        %s293 = smul.addr %s290, 4
        %s294 = sadd.s32 %s292, %s293
        %s295 = scalar_lea.vmem %s4, %s294
        %v297 = vld [vmem:[%s227] sm:$0xff]
        %v298 = vld [vmem:[%s227 + $0x8] sm:$0xff]
        %v299 = vld [vmem:[%s227 + $0x10] sm:$0xff]
        %v300 = vld [vmem:[%s227 + $0x18] sm:$0xff]
        %v301 = vld [vmem:[%s227 + $0x20] sm:$0xff]
        %v302 = vld [vmem:[%s227 + $0x28] sm:$0xff]
        %v303 = vld [vmem:[%s227 + $0x30] sm:$0xff]
        %v304 = vld [vmem:[%s227 + $0x38] sm:$0xff]
        %v305 = vld [vmem:[%s227 + $0x40] sm:$0xff]
        %v306 = vld [vmem:[%s227 + $0x48] sm:$0xff]
        %v307 = vld [vmem:[%s227 + $0x50] sm:$0xff]
        %v308 = vld [vmem:[%s227 + $0x58] sm:$0xff]
        %v309 = vld [vmem:[%s227 + $0x60] sm:$0xff]
        %v310 = vld [vmem:[%s227 + $0x68] sm:$0xff]
        %v311 = vld [vmem:[%s227 + $0x70] sm:$0xff]
        %v312 = vld [vmem:[%s227 + $0x78] sm:$0xff]
        %v313 = vadd.f32 %v297, %v301
        %v314 = vadd.f32 %v313, %v305
        %v315 = vadd.f32 %v314, %v309
        %v316 = vadd.f32 %v298, %v302
        %v317 = vadd.f32 %v316, %v306
        %v318 = vadd.f32 %v317, %v310
        %v319 = vadd.f32 %v299, %v303
        %v320 = vadd.f32 %v319, %v307
        %v321 = vadd.f32 %v320, %v311
        %v322 = vadd.f32 %v300, %v304
        %v323 = vadd.f32 %v322, %v308
        %v324 = vadd.f32 %v323, %v312
        %v325 = vrcp.pop 4.0
        %v326 = vmul.f32 %v315, %v325
        %v327 = vmul.f32 %v318, %v325
        %v328 = vmul.f32 %v321, %v325
        %v329 = vmul.f32 %v324, %v325
        %v334 = vcombine.low %v326, %v327
        %v335 = vcombine.high %v326, %v327
        %v336 = vcombine.low %v328, %v329
        %v337 = vcombine.high %v328, %v329
        %v342 = vcombine.high %v334, %v334
        %v343 = vcombine.high %v335, %v335
        %v344 = vcombine.high %v336, %v336
        %v345 = vcombine.high %v337, %v337
        %vm350 = vcmask 1043456
        %v351 = vsel %vm350, %v334, 0.0
        %v352 = vrot.slane %v351, 4
        %v353 = vadd.f32 %v351, %v352
        %v354 = vrot.slane %v353, 2
        %v355 = vadd.f32 %v353, %v354
        %v356 = vrot.slane %v355, 1
        %v357 = vadd.f32 %v355, %v356
        %v358 = vsel %vm350, %v342, 0.0
        %v359 = vrot.slane %v358, 4
        %v360 = vadd.f32 %v358, %v359
        %v361 = vrot.slane %v360, 2
        %v362 = vadd.f32 %v360, %v361
        %v363 = vrot.slane %v362, 1
        %v364 = vadd.f32 %v362, %v363
        %v365 = vsel %vm350, %v335, 0.0
        %v366 = vrot.slane %v365, 4
        %v367 = vadd.f32 %v365, %v366
        %v368 = vrot.slane %v367, 2
        %v369 = vadd.f32 %v367, %v368
        %v370 = vrot.slane %v369, 1
        %v371 = vadd.f32 %v369, %v370
        %v372 = vsel %vm350, %v343, 0.0
        %v373 = vrot.slane %v372, 4
        %v374 = vadd.f32 %v372, %v373
        %v375 = vrot.slane %v374, 2
        %v376 = vadd.f32 %v374, %v375
        %v377 = vrot.slane %v376, 1
        %v378 = vadd.f32 %v376, %v377
        %v379 = vsel %vm350, %v336, 0.0
        %v380 = vrot.slane %v379, 4
        %v381 = vadd.f32 %v379, %v380
        %v382 = vrot.slane %v381, 2
        %v383 = vadd.f32 %v381, %v382
        %v384 = vrot.slane %v383, 1
        %v385 = vadd.f32 %v383, %v384
        %v386 = vsel %vm350, %v344, 0.0
        %v387 = vrot.slane %v386, 4
        %v388 = vadd.f32 %v386, %v387
        %v389 = vrot.slane %v388, 2
        %v390 = vadd.f32 %v388, %v389
        %v391 = vrot.slane %v390, 1
        %v392 = vadd.f32 %v390, %v391
        %v393 = vsel %vm350, %v337, 0.0
        %v394 = vrot.slane %v393, 4
        %v395 = vadd.f32 %v393, %v394
        %v396 = vrot.slane %v395, 2
        %v397 = vadd.f32 %v395, %v396
        %v398 = vrot.slane %v397, 1
        %v399 = vadd.f32 %v397, %v398
        %v400 = vsel %vm350, %v345, 0.0
        %v401 = vrot.slane %v400, 4
        %v402 = vadd.f32 %v400, %v401
        %v403 = vrot.slane %v402, 2
        %v404 = vadd.f32 %v402, %v403
        %v405 = vrot.slane %v404, 1
        %v406 = vadd.f32 %v404, %v405
        %v407 = vmul.f32 %v357, %v325
        %v408 = vmul.f32 %v364, %v325
        %v409 = vmul.f32 %v371, %v325
        %v410 = vmul.f32 %v378, %v325
        %v411 = vmul.f32 %v385, %v325
        %v412 = vmul.f32 %v392, %v325
        %v413 = vmul.f32 %v399, %v325
        %v414 = vmul.f32 %v406, %v325
        %v415 = vpack.c.bf16 %v407, %v407
        %v416 = vpack.c.bf16 %v408, %v408
        %v417 = vpack.c.bf16 %v409, %v409
        %v418 = vpack.c.bf16 %v410, %v410
        %v419 = vpack.c.bf16 %v411, %v411
        %v420 = vpack.c.bf16 %v412, %v412
        %v421 = vpack.c.bf16 %v413, %v413
        %v422 = vpack.c.bf16 %v414, %v414
        %v423 = vld [vmem:[#allocation4] sm:$0xf]
        %v424 = vld [vmem:[#allocation4 + $0x4] sm:$0xf]
        %v425 = vld [vmem:[#allocation4 + $0x8] sm:$0xf]
        %v426 = vld [vmem:[#allocation4 + $0xc] sm:$0xf]
        %v427 = vld [vmem:[#allocation4 + $0x10] sm:$0xf]
        %v428 = vld [vmem:[#allocation4 + $0x14] sm:$0xf]
        %v429 = vld [vmem:[#allocation4 + $0x18] sm:$0xf]
        %v430 = vld [vmem:[#allocation4 + $0x1c] sm:$0xf]
        %v431 = vld [vmem:[#allocation4 + $0x20] sm:$0xf]
        %v432 = vld [vmem:[#allocation4 + $0x24] sm:$0xf]
        %v433 = vld [vmem:[#allocation4 + $0x28] sm:$0xf]
        %v434 = vld [vmem:[#allocation4 + $0x2c] sm:$0xf]
        %v435 = vld [vmem:[#allocation4 + $0x30] sm:$0xf]
        %v436 = vld [vmem:[#allocation4 + $0x34] sm:$0xf]
        %v437 = vld [vmem:[#allocation4 + $0x38] sm:$0xf]
        %v438 = vld [vmem:[#allocation4 + $0x3c] sm:$0xf]
        %v439 = vld [vmem:[#allocation4 + $0x40] sm:$0xf]
        %v440 = vld [vmem:[#allocation4 + $0x44] sm:$0xf]
        %v441 = vld [vmem:[#allocation4 + $0x48] sm:$0xf]
        %v442 = vld [vmem:[#allocation4 + $0x4c] sm:$0xf]
        %v443 = vld [vmem:[#allocation4 + $0x50] sm:$0xf]
        %v444 = vld [vmem:[#allocation4 + $0x54] sm:$0xf]
        %v445 = vld [vmem:[#allocation4 + $0x58] sm:$0xf]
        %v446 = vld [vmem:[#allocation4 + $0x5c] sm:$0xf]
        %v447 = vld [vmem:[#allocation4 + $0x60] sm:$0xf]
        %v448 = vld [vmem:[#allocation4 + $0x64] sm:$0xf]
        %v449 = vld [vmem:[#allocation4 + $0x68] sm:$0xf]
        %v450 = vld [vmem:[#allocation4 + $0x6c] sm:$0xf]
        %v451 = vld [vmem:[#allocation4 + $0x70] sm:$0xf]
        %v452 = vld [vmem:[#allocation4 + $0x74] sm:$0xf]
        %v453 = vld [vmem:[#allocation4 + $0x78] sm:$0xf]
        %v454 = vld [vmem:[#allocation4 + $0x7c] sm:$0xf]
        %v463 = vunpack.c.l.b16 %v415
        %v464 = vunpack.c.l.b16 %v416
        %v465 = vunpack.c.l.b16 %v417
        %v466 = vunpack.c.l.b16 %v418
        %v467 = vunpack.c.l.b16 %v419
        %v468 = vunpack.c.l.b16 %v420
        %v469 = vunpack.c.l.b16 %v421
        %v470 = vunpack.c.l.b16 %v422
        %vm471 = vcmask 1041409
        %v472 = vsel %vm471, %v465, %v463
        %vm473 = vcmask 1042434
        %v474 = vsel %vm473, %v467, %v472
        %vm475 = vcmask 1043459
        %v476 = vsel %vm475, %v469, %v474
        %v477 = vsel %vm471, %v466, %v464
        %v478 = vsel %vm473, %v468, %v477
        %v479 = vsel %vm475, %v470, %v478
        %v480 = vpack.c.b16 %v476, %v476
        %v481 = vpack.c.b16 %v479, %v479
        %v516 = vunpack.c.l.b16 %v423
        %v517 = vunpack.c.l.b16 %v424
        %v518 = vunpack.c.l.b16 %v425
        %v519 = vunpack.c.l.b16 %v426
        %v520 = vunpack.c.l.b16 %v427
        %v521 = vunpack.c.l.b16 %v428
        %v522 = vunpack.c.l.b16 %v429
        %v523 = vunpack.c.l.b16 %v430
        %v524 = vunpack.c.l.b16 %v431
        %v525 = vunpack.c.l.b16 %v432
        %v526 = vunpack.c.l.b16 %v433
        %v527 = vunpack.c.l.b16 %v434
        %v528 = vunpack.c.l.b16 %v435
        %v529 = vunpack.c.l.b16 %v436
        %v530 = vunpack.c.l.b16 %v437
        %v531 = vunpack.c.l.b16 %v438
        %v532 = vunpack.c.l.b16 %v439
        %v533 = vunpack.c.l.b16 %v440
        %v534 = vunpack.c.l.b16 %v441
        %v535 = vunpack.c.l.b16 %v442
        %v536 = vunpack.c.l.b16 %v443
        %v537 = vunpack.c.l.b16 %v444
        %v538 = vunpack.c.l.b16 %v445
        %v539 = vunpack.c.l.b16 %v446
        %v540 = vunpack.c.l.b16 %v447
        %v541 = vunpack.c.l.b16 %v448
        %v542 = vunpack.c.l.b16 %v449
        %v543 = vunpack.c.l.b16 %v450
        %v544 = vunpack.c.l.b16 %v451
        %v545 = vunpack.c.l.b16 %v452
        %v546 = vunpack.c.l.b16 %v453
        %v547 = vunpack.c.l.b16 %v454
        %v548 = vpack.c.b16 %v517, %v516
        %v549 = vpack.c.b16 %v519, %v518
        %v550 = vpack.c.b16 %v521, %v520
        %v551 = vpack.c.b16 %v523, %v522
        %v552 = vpack.c.b16 %v525, %v524
        %v553 = vpack.c.b16 %v527, %v526
        %v554 = vpack.c.b16 %v529, %v528
        %v555 = vpack.c.b16 %v531, %v530
        %v556 = vpack.c.b16 %v533, %v532
        %v557 = vpack.c.b16 %v535, %v534
        %v558 = vpack.c.b16 %v537, %v536
        %v559 = vpack.c.b16 %v539, %v538
        %v560 = vpack.c.b16 %v541, %v540
        %v561 = vpack.c.b16 %v543, %v542
        %v562 = vpack.c.b16 %v545, %v544
        %v563 = vpack.c.b16 %v547, %v546
        %580 = vmatprep.subr.bf16.mxu0 0
        %581 = vmatpush1.bf16.msra.mxu0 %v548
        %582 = vmatprep.subr.bf16.mxu0 0
        %583 = vmatpush1.bf16.msra.mxu0 %v549
        %584 = vmatprep.subr.bf16.mxu0 0
        %585 = vmatpush1.bf16.msra.mxu0 %v550
        %586 = vmatprep.subr.bf16.mxu0 0
        %587 = vmatpush1.bf16.msra.mxu0 %v551
        %588 = vmatprep.subr.bf16.mxu0 0
        %589 = vmatpush1.bf16.msra.mxu0 %v552
        %590 = vmatprep.subr.bf16.mxu0 0
        %591 = vmatpush1.bf16.msra.mxu0 %v553
        %592 = vmatprep.subr.bf16.mxu0 0
        %593 = vmatpush1.bf16.msra.mxu0 %v554
        %594 = vmatprep.subr.bf16.mxu0 0
        %595 = vmatpush1.bf16.msra.mxu0 %v555
        %596 = vmatprep.subr.bf16.mxu0 0
        %597 = vmatpush1.bf16.msra.mxu0 %v556
        %598 = vmatprep.subr.bf16.mxu0 0
        %599 = vmatpush1.bf16.msra.mxu0 %v557
        %600 = vmatprep.subr.bf16.mxu0 0
        %601 = vmatpush1.bf16.msra.mxu0 %v558
        %602 = vmatprep.subr.bf16.mxu0 0
        %603 = vmatpush1.bf16.msra.mxu0 %v559
        %604 = vmatprep.subr.bf16.mxu0 0
        %605 = vmatpush1.bf16.msra.mxu0 %v560
        %606 = vmatprep.subr.bf16.mxu0 0
        %607 = vmatpush1.bf16.msra.mxu0 %v561
        %608 = vmatprep.subr.bf16.mxu0 0
        %609 = vmatpush1.bf16.msra.mxu0 %v562
        %610 = vmatprep.subr.bf16.mxu0 0
        %611 = vmatpush1.bf16.msra.mxu0 %v563
        %612 = vmatprep.mubr.bf16.mxu0 %v481
        %613 = vmatmul.mubr.bf16.gmra.mrb[0].mxu0 %v480
        %v614 = vpop.f32.mrb[0].mxu0
        %v615 = vadd.f32 0.0, %v614
        %v616 = vpop.f32.mrb[0].mxu0
        %v617 = vpop.f32.mrb[0].mxu0
        %v618 = vpop.f32.mrb[0].mxu0
        %619 = vdwg.mxu0
        %620 = vst [vmem:[%s281] sm:$0xf] %v615
        %v621 = vsel %vm350, %v615, 0.0
        %v622 = vrot.slane %v621, 4
        %v623 = vadd.f32 %v621, %v622
        %v624 = vrot.slane %v623, 2
        %v625 = vadd.f32 %v623, %v624
        %v626 = vrot.slane %v625, 1
        %v627 = vadd.f32 %v625, %v626
        %628 = vst [vmem:[%s288] sm:$0x1] %v627
        %v629 = vmul.f32 %v615, %v615
        %v630 = vsel %vm350, %v629, 0.0
        %v631 = vrot.slane %v630, 4
        %v632 = vadd.f32 %v630, %v631
        %v633 = vrot.slane %v632, 2
        %v634 = vadd.f32 %v632, %v633
        %v635 = vrot.slane %v634, 1
        %v636 = vadd.f32 %v634, %v635
        %637 = vst [vmem:[%s295] sm:$0x1] %v636
        %p638 = scmp.lt.s32.totalorder %s24, 1
        %s639 = scalar_select %p638, %s24, 1
        %p640 = scmp.lt.s32.totalorder %s25, 3
        %s641 = scalar_select %p640, %s25, 3
        %s642 = smul.addr %s639, 4
        %s643 = sadd.s32 %s641, %s642
        %s644 = smul.addr %s643, 4
        %s645 = scalar_lea.vmem %s2, %s644
        %p646 = scmp.lt.s32.totalorder %s24, 1
        %s647 = scalar_select %p646, %s24, 1
        %p648 = scmp.lt.s32.totalorder %s25, 3
        %s649 = scalar_select %p648, %s25, 3
        %s650 = smul.addr %s647, 4
        %s651 = sadd.s32 %s649, %s650
        %s652 = scalar_lea.vmem %s3, %s651
        %p653 = scmp.lt.s32.totalorder %s24, 1
        %s654 = scalar_select %p653, %s24, 1
        %p655 = scmp.lt.s32.totalorder %s25, 3
        %s656 = scalar_select %p655, %s25, 3
        %s657 = smul.addr %s654, 4
        %s658 = sadd.s32 %s656, %s657
        %s659 = scalar_lea.vmem %s4, %s658
        // Predicated region
        $region37: #{psp_dec_forward.2} parent=27 // pred_check
          %p660 = pneg %p101
        $region38: #{psp_dec_forward.2} parent=27 // pred_check_branch
          %662 = sbr.rel (%p660) target = $region40
        $region39: #{psp_dec_forward.2} parent=27 // pred_region
          _
        $region40: #{psp_dec_forward.2} parent=27 // pred_fallthru
          _
        // Predicated region
        $region41: #{psp_dec_forward.2} parent=27 // pred_check
          %p663 = pneg %p129
        $region42: #{psp_dec_forward.2} parent=27 // pred_check_branch
          %665 = sbr.rel (%p663) target = $region44
        $region43: #{psp_dec_forward.2} parent=27 // pred_region
          _
        $region44: #{psp_dec_forward.2} parent=27 // pred_fallthru
          _
        // Predicated region
        $region45: #{psp_dec_forward.2} parent=27 // pred_check
          %p666 = pneg %p157
        $region46: #{psp_dec_forward.2} parent=27 // pred_check_branch
          %668 = sbr.rel (%p666) target = $region48
        $region47: #{psp_dec_forward.2} parent=27 // pred_region
          _
        $region48: #{psp_dec_forward.2} parent=27 // pred_fallthru
          _
      $region28: #{psp_dec_forward.2} parent=5 // pred_fallthru
        _
      %p669 = scmp.le.s32.totalorder 2, %s15
      // Predicated region
      $region49: #{psp_dec_forward.2} parent=5 // pred_check
        %p670 = pneg %p669
      $region50: #{psp_dec_forward.2} parent=5 // pred_check_branch
        %672 = sbr.rel (%p670) target = $region52
      $region51: #{psp_dec_forward.2} parent=5 // pred_region
        %s673 = ssub.s32 %s15, 2
        // Predicated region
        $region53: #{psp_dec_forward.2} parent=51 // pred_check
          %p674 = pneg %p107
        $region54: #{psp_dec_forward.2} parent=51 // pred_check_branch
          %676 = sbr.rel (%p674) target = $region56
        $region55: #{psp_dec_forward.2} parent=51 // pred_region
          %p677 = scmp.lt.s32.totalorder %s26, 1
          %s678 = scalar_select %p677, %s26, 1
          %p679 = scmp.lt.s32.totalorder %s27, 3
          %s680 = scalar_select %p679, %s27, 3
          %s681 = smul.addr %s678, 4
          %s682 = sadd.s32 %s680, %s681
          %s683 = smul.addr %s682, 4
          %s684 = scalar_lea.vmem %s2, %s683
        $region56: #{psp_dec_forward.2} parent=51 // pred_fallthru
          _
        // Predicated region
        $region57: #{psp_dec_forward.2} parent=51 // pred_check
          %p685 = pneg %p135
        $region58: #{psp_dec_forward.2} parent=51 // pred_check_branch
          %687 = sbr.rel (%p685) target = $region60
        $region59: #{psp_dec_forward.2} parent=51 // pred_region
          %p688 = scmp.lt.s32.totalorder %s26, 1
          %s689 = scalar_select %p688, %s26, 1
          %p690 = scmp.lt.s32.totalorder %s27, 3
          %s691 = scalar_select %p690, %s27, 3
          %s692 = smul.addr %s689, 4
          %s693 = sadd.s32 %s691, %s692
          %s694 = scalar_lea.vmem %s3, %s693
        $region60: #{psp_dec_forward.2} parent=51 // pred_fallthru
          _
        // Predicated region
        $region61: #{psp_dec_forward.2} parent=51 // pred_check
          %p695 = pneg %p163
        $region62: #{psp_dec_forward.2} parent=51 // pred_check_branch
          %697 = sbr.rel (%p695) target = $region64
        $region63: #{psp_dec_forward.2} parent=51 // pred_region
          %p698 = scmp.lt.s32.totalorder %s26, 1
          %s699 = scalar_select %p698, %s26, 1
          %p700 = scmp.lt.s32.totalorder %s27, 3
          %s701 = scalar_select %p700, %s27, 3
          %s702 = smul.addr %s699, 4
          %s703 = sadd.s32 %s701, %s702
          %s704 = scalar_lea.vmem %s4, %s703
        $region64: #{psp_dec_forward.2} parent=51 // pred_fallthru
          _
      $region52: #{psp_dec_forward.2} parent=5 // pred_fallthru
        _
    $region6: #{psp_dec_forward.2} parent=1 // loop_footer
      %s19 = sadd.s32 1, %s15
    $region7: #{psp_dec_forward.2} parent=1 // loop_footer_branch
      %14 = sbr.rel target = $region3
    $region8: #{psp_dec_forward.2} parent=1 // loop_exit
      _
    %705 = vsyncpa [#allocation3], 1
    %s706 = scalar_lea.sflag [#allocation3], 1
    %707 = vsyncpa %s706, 1
    %708 = vsyncpa [#allocation5], 1

// kernel: psp_dec_forward.3
$region0: #{psp_dec_forward.3}
  #allocation0 [shape = 'u32[]', space=smem, size = 0x4, offset = 0x4, fixed_abs, tag = 'smem constant byte address 0x4 - core index']
  #allocation1 [shape = 'u32[144,128]{1,0:T(1,128)}', space=vmem, size = 0x12000, scoped, tag = 'internal scratch']
  %s0 = inlined_call_operand.vmem [shape: f32[2,4,4,128], index: 0, kind: input, shape index: {}]
  %s1 = inlined_call_operand.vmem [shape: f32[1,128], index: 1, kind: input, shape index: {}]
  %s2 = inlined_call_operand.vmem [shape: f32[1,128], index: 2, kind: input, shape index: {}]
  %s3 = inlined_call_operand.hbm [shape: f32[2,1800,16], index: 3, kind: input, shape index: {}]
  %s4 = inlined_call_operand.vmem [shape: f32[2,2,1800,128], index: 4, kind: output, shape index: {}]
  %s5 = sld [smem:[#allocation0]]
  $region53: #{psp_dec_forward.3} parent=0
    _
  %s7 = ssub.s32 1, %s5
  %s8 = scalar_select 0, %s7, %s5
  $region1: #{psp_dec_forward.3} parent=0
    #allocation2 [shape = 'u8[1843200]{0}', space=vmem, size = 0x1c2000, scoped, tag = 'input window, operand 3']
    #allocation3 [shape = 's32[2]{0}', space=sflag, size = 0x8, scoped, tag = 'scoped memory for psp_dec_forward.3']
    %9 = vsyncpa [#allocation3], 0
    %s10 = scalar_lea.sflag [#allocation3], 1
    %11 = vsyncpa %s10, 0
    loop: start=0, step=1, limit=6
    $region2: #{psp_dec_forward.3} parent=1 // loop_pre_header
      _
    $region3: #{psp_dec_forward.3} parent=1 // loop_header
      %s13 = sphi 0, %s17
      %p14 = scmp.ge.s32.totalorder %s13, 6
      %s20 = sphi 0, %s32
      %s21 = sphi 0, %s28
      %s22 = sphi 0, %s20
      %s23 = sphi 0, %s21
      %s24 = sphi 0, %s22
      %s25 = sphi 0, %s23
      %s35 = sphi 0, %s37
      %s38 = sphi 0, %s35
      %s39 = sphi 0, %s38
      %s55 = sphi 0, %s39
      %s59 = sphi 0, %s59
      %s61 = sphi 0, %s59
      %s62 = sphi 0, %s61
      %s76 = sphi 0, %s62
      %s80 = sphi 0, %s80
      %s82 = sphi 0, %s80
      %s83 = sphi 0, %s82
      %s97 = sphi 0, %s83
      %s103 = sphi 0, %s105
      %s106 = sphi 0, %s103
      %s107 = sphi 0, %s106
      %s123 = sphi 0, %s107
      %s131 = sphi 0, %s133
      %s134 = sphi 0, %s131
      %s135 = sphi 0, %s134
      %s151 = sphi 0, %s135
    $region4: #{psp_dec_forward.3} parent=1 // loop_header_branch
      %16 = sbr.rel (%p14) target = $region8
    $region5: #{psp_dec_forward.3} parent=1 // loop_body
      %s18 = ssub.s32 %s13, 1
      %s19 = ssub.s32 %s13, 2
      %s26 = sadd.s32 1, %s21
      %p27 = scmp.ge.s32.totalorder %s26, 2
      %s28 = scalar_select %p27, 0, %s26
      %s29 = sadd.s32 1, %s20
      %s30 = scalar_select %p27, %s29, %s20
      %p31 = scmp.ge.s32.totalorder %s30, 2
      %s32 = scalar_select %p31, 0, %s30
      %s33 = ssub.s32 %s20, %s32
      %p34 = scmp.eq.s32.totalorder %s33, 0
      %s36 = sadd.s32 %s35, 1
      %s37 = scalar_select %p34, %s35, %s36
      %p40 = pneg %p34
      %p41 = scmp.eq.s32.totalorder %s13, 3
      %p42 = por %p40, %p41
      %p43 = scmp.ne.s32.totalorder %s35, %s38
      %p44 = scmp.eq.s32.totalorder %s13, 0
      %p45 = por %p43, %p44
      %p46 = scmp.ne.s32.totalorder %s35, %s38
      %p47 = scmp.eq.s32.totalorder %s18, 3
      %p48 = por %p46, %p47
      %p49 = scmp.ne.s32.totalorder %s38, %s39
      %p50 = scmp.eq.s32.totalorder %s18, 0
      %p51 = por %p49, %p50
      %p52 = scmp.ne.s32.totalorder %s38, %s39
      %p53 = scmp.eq.s32.totalorder %s19, 3
      %p54 = por %p52, %p53
      %p56 = scmp.ne.s32.totalorder %s39, %s55
      %p57 = scmp.eq.s32.totalorder %s19, 0
      %p58 = por %p56, %p57
      %s60 = sadd.s32 %s59, 1
      %p63 = scmp.eq.s32.totalorder %s13, 3
      %p64 = scmp.ne.s32.totalorder %s59, %s61
      %p65 = scmp.eq.s32.totalorder %s13, 0
      %p66 = por %p64, %p65
      %p67 = scmp.ne.s32.totalorder %s59, %s61
      %p68 = scmp.eq.s32.totalorder %s18, 3
      %p69 = por %p67, %p68
      %p70 = scmp.ne.s32.totalorder %s61, %s62
      %p71 = scmp.eq.s32.totalorder %s18, 0
      %p72 = por %p70, %p71
      %p73 = scmp.ne.s32.totalorder %s61, %s62
      %p74 = scmp.eq.s32.totalorder %s19, 3
      %p75 = por %p73, %p74
      %p77 = scmp.ne.s32.totalorder %s62, %s76
      %p78 = scmp.eq.s32.totalorder %s19, 0
      %p79 = por %p77, %p78
      %s81 = sadd.s32 %s80, 1
      %p84 = scmp.eq.s32.totalorder %s13, 3
      %p85 = scmp.ne.s32.totalorder %s80, %s82
      %p86 = scmp.eq.s32.totalorder %s13, 0
      %p87 = por %p85, %p86
      %p88 = scmp.ne.s32.totalorder %s80, %s82
      %p89 = scmp.eq.s32.totalorder %s18, 3
      %p90 = por %p88, %p89
      %p91 = scmp.ne.s32.totalorder %s82, %s83
      %p92 = scmp.eq.s32.totalorder %s18, 0
      %p93 = por %p91, %p92
      %p94 = scmp.ne.s32.totalorder %s82, %s83
      %p95 = scmp.eq.s32.totalorder %s19, 3
      %p96 = por %p94, %p95
      %p98 = scmp.ne.s32.totalorder %s83, %s97
      %p99 = scmp.eq.s32.totalorder %s19, 0
      %p100 = por %p98, %p99
      %s101 = ssub.s32 %s21, %s28
      %p102 = scmp.eq.s32.totalorder %s101, 0
      %s104 = sadd.s32 %s103, 1
      %s105 = scalar_select %p102, %s103, %s104
      %p108 = pneg %p102
      %p109 = scmp.eq.s32.totalorder %s13, 3
      %p110 = por %p108, %p109
      %p111 = scmp.ne.s32.totalorder %s103, %s106
      %p112 = scmp.eq.s32.totalorder %s13, 0
      %p113 = por %p111, %p112
      %p114 = scmp.ne.s32.totalorder %s103, %s106
      %p115 = scmp.eq.s32.totalorder %s18, 3
      %p116 = por %p114, %p115
      %p117 = scmp.ne.s32.totalorder %s106, %s107
      %p118 = scmp.eq.s32.totalorder %s18, 0
      %p119 = por %p117, %p118
      %p120 = scmp.ne.s32.totalorder %s106, %s107
      %p121 = scmp.eq.s32.totalorder %s19, 3
      %p122 = por %p120, %p121
      %p124 = scmp.ne.s32.totalorder %s107, %s123
      %p125 = scmp.eq.s32.totalorder %s19, 0
      %p126 = por %p124, %p125
      %s127 = ssub.s32 %s20, %s32
      %s128 = ssub.s32 %s21, %s28
      %s129 = sor.u32 %s127, %s128
      %p130 = scmp.eq.s32.totalorder %s129, 0
      %s132 = sadd.s32 %s131, 1
      %s133 = scalar_select %p130, %s131, %s132
      %p136 = pneg %p130
      %p137 = scmp.eq.s32.totalorder %s13, 3
      %p138 = por %p136, %p137
      %p139 = scmp.ne.s32.totalorder %s131, %s134
      %p140 = scmp.eq.s32.totalorder %s13, 0
      %p141 = por %p139, %p140
      %p142 = scmp.ne.s32.totalorder %s131, %s134
      %p143 = scmp.eq.s32.totalorder %s18, 3
      %p144 = por %p142, %p143
      %p145 = scmp.ne.s32.totalorder %s134, %s135
      %p146 = scmp.eq.s32.totalorder %s18, 0
      %p147 = por %p145, %p146
      %p148 = scmp.ne.s32.totalorder %s134, %s135
      %p149 = scmp.eq.s32.totalorder %s19, 3
      %p150 = por %p148, %p149
      %p152 = scmp.ne.s32.totalorder %s135, %s151
      %p153 = scmp.eq.s32.totalorder %s19, 0
      %p154 = por %p152, %p153
      %p155 = scmp.le.s32.totalorder 1, %s13
      %p156 = scmp.lt.s32.totalorder %s13, 5
      %p157 = pnand %p155, %p156
      %p158 = pneg %p157
      // Predicated region
      $region9: #{psp_dec_forward.3} parent=5 // pred_check
        _
      $region10: #{psp_dec_forward.3} parent=5 // pred_check_branch
        %160 = sbr.rel (%p157) target = $region12
      $region11: #{psp_dec_forward.3} parent=5 // pred_region
        %s161 = ssub.s32 %s13, 1
        // Predicated region
        $region13: #{psp_dec_forward.3} parent=11 // pred_check
          %p162 = pneg %p72
        $region14: #{psp_dec_forward.3} parent=11 // pred_check_branch
          %164 = sbr.rel (%p162) target = $region16
        $region15: #{psp_dec_forward.3} parent=11 // pred_region
          _
        $region16: #{psp_dec_forward.3} parent=11 // pred_fallthru
          _
        // Predicated region
        $region17: #{psp_dec_forward.3} parent=11 // pred_check
          %p165 = pneg %p93
        $region18: #{psp_dec_forward.3} parent=11 // pred_check_branch
          %167 = sbr.rel (%p165) target = $region20
        $region19: #{psp_dec_forward.3} parent=11 // pred_region
          _
        $region20: #{psp_dec_forward.3} parent=11 // pred_fallthru
          _
      $region12: #{psp_dec_forward.3} parent=5 // pred_fallthru
        _
      %p168 = scmp.lt.s32.totalorder %s13, 4
      // Predicated region
      $region21: #{psp_dec_forward.3} parent=5 // pred_check
        %p169 = pneg %p168
      $region22: #{psp_dec_forward.3} parent=5 // pred_check_branch
        %171 = sbr.rel (%p169) target = $region24
      $region23: #{psp_dec_forward.3} parent=5 // pred_region
        // Predicated region
        $region25: #{psp_dec_forward.3} parent=23 // pred_check
          %p172 = pneg %p45
        $region26: #{psp_dec_forward.3} parent=23 // pred_check_branch
          %174 = sbr.rel (%p172) target = $region28
        $region27: #{psp_dec_forward.3} parent=23 // pred_region
          %p175 = scmp.lt.s32.totalorder %s20, 1
          %s176 = scalar_select %p175, %s20, 1
          %s177 = smul.addr %s176, 4
          %s178 = smul.addr %s177, 4
          %s179 = scalar_lea.vmem %s0, %s178
        $region28: #{psp_dec_forward.3} parent=23 // pred_fallthru
          _
        // Predicated region
        $region29: #{psp_dec_forward.3} parent=23 // pred_check
          %p180 = pneg %p113
        $region30: #{psp_dec_forward.3} parent=23 // pred_check_branch
          %182 = sbr.rel (%p180) target = $region32
        $region31: #{psp_dec_forward.3} parent=23 // pred_region
          %s183 = sand.u32 %s103, 1
          %s184 = scalar_lea.sflag [#allocation3], %s183
          %s185 = sand.u32 %s103, 1
          %s186 = smul.addr %s185, 1800
          %s187 = scalar_lea.vmem [#allocation2], %s186
          %s189 = ssub.s32 28800, 28800
          %190 = vsyncadd %s184, %s189
          %s191 = smul.addr %s21, 225
          %s192 = smul.addr %s191, 128
          %s193 = scalar_lea.hbm %s3, %s192
          %s194 = sshll.u32 %s187, 4
          %s195 = int_to_ptr.vmem [resolvable:$true] %s194
          %200 = dma.hbm_to_vmem [thread:$0]  %s193, 28800, %s195, %s184, 128, 128, 8
        $region32: #{psp_dec_forward.3} parent=23 // pred_fallthru
          _
      $region24: #{psp_dec_forward.3} parent=5 // pred_fallthru
        _
      %p201 = scmp.le.s32.totalorder 1, %s13
      %p202 = scmp.lt.s32.totalorder %s13, 5
      %p203 = pnand %p201, %p202
      %p204 = pneg %p203
      // Predicated region
      $region33: #{psp_dec_forward.3} parent=5 // pred_check
        _
      $region34: #{psp_dec_forward.3} parent=5 // pred_check_branch
        %206 = sbr.rel (%p203) target = $region36
      $region35: #{psp_dec_forward.3} parent=5 // pred_region
        %s207 = ssub.s32 %s13, 1
        %s208 = sand.u32 %s106, 1
        %s209 = scalar_lea.sflag [#allocation3], %s208
        %s210 = sand.u32 %s106, 1
        %s211 = smul.addr %s210, 1800
        %s212 = scalar_lea.vmem [#allocation2], %s211
        // Predicated region
        $region37: #{psp_dec_forward.3} parent=35 // pred_check
          %p213 = pneg %p119
        $region38: #{psp_dec_forward.3} parent=35 // pred_check_branch
          %215 = sbr.rel (%p213) target = $region40
        $region39: #{psp_dec_forward.3} parent=35 // pred_region
          %216 = dma.done %s209, 28800
        $region40: #{psp_dec_forward.3} parent=35 // pred_fallthru
          _
        %p217 = scmp.lt.s32.totalorder %s22, 1
        %s218 = scalar_select %p217, %s22, 1
        %s219 = smul.addr %s218, 4
        %s220 = smul.addr %s219, 4
        %s221 = scalar_lea.vmem %s0, %s220
        %p222 = pneg %p51
        %p223 = pneg %p48
        %p224 = pneg %p72
        %p225 = pneg %p69
        %p226 = pneg %p93
        %p227 = pneg %p90
        %s228 = sand.u32 %s106, 1
        %s229 = scalar_lea.sflag [#allocation3], %s228
        %s230 = sand.u32 %s106, 1
        %s231 = smul.addr %s230, 1800
        %s232 = scalar_lea.vmem [#allocation2], %s231
        %p233 = pneg %p119
        %p234 = pneg %p116
        %p235 = pneg %p147
        %p236 = pneg %p144
        %p237 = scmp.lt.s32.totalorder %s22, 1
        %s238 = scalar_select %p237, %s22, 1
        %p239 = scmp.lt.s32.totalorder %s23, 1
        %s240 = scalar_select %p239, %s23, 1
        %s241 = smul.addr %s240, 225
        %s242 = smul.addr %s238, 450
        %s243 = sadd.s32 %s241, %s242
        %s244 = smul.addr %s243, 8
        %s245 = scalar_lea.vmem %s4, %s244
        %p246 = scmp.lt.s32.totalorder %s22, 1
        %s247 = scalar_select %p246, %s22, 1
        %s248 = smul.addr %s247, 4
        %s249 = smul.addr %s248, 4
        %s250 = scalar_lea.vmem %s0, %s249
        %p251 = scmp.lt.s32.totalorder %s22, 1
        %s252 = scalar_select %p251, %s22, 1
        %p253 = scmp.lt.s32.totalorder %s23, 1
        %s254 = scalar_select %p253, %s23, 1
        %s255 = smul.addr %s254, 225
        %s256 = smul.addr %s252, 450
        %s257 = sadd.s32 %s255, %s256
        %s258 = smul.addr %s257, 8
        %s259 = scalar_lea.vmem %s4, %s258
        %v260 = vld [vmem:[%s250] sm:$0xf]
        %v261 = vld [vmem:[%s250 + $0x4] sm:$0xf]
        %v262 = vld [vmem:[%s250 + $0x8] sm:$0xf]
        %v263 = vld [vmem:[%s250 + $0xc] sm:$0xf]
        %v264 = vld [vmem:[%s1] sm:$0x1]
        %v266 = vlaneseq
        %v267 = vshrl.u32 %v266, 7
        %v268 = vsub.s32 0, %v267
        %v269 = vrot.slane %v264, %v268
        %v271 = vmul.f32 %v260, %v269
        %v272 = vmul.f32 %v261, %v269
        %v273 = vmul.f32 %v262, %v269
        %v274 = vmul.f32 %v263, %v269
        %v275 = vld [vmem:[%s2] sm:$0x1]
        %v277 = vlaneseq
        %v278 = vshrl.u32 %v277, 7
        %v279 = vsub.s32 0, %v278
        %v280 = vrot.slane %v275, %v279
        %v282 = vadd.f32 %v271, %v280
        %v283 = vadd.f32 %v272, %v280
        %v284 = vadd.f32 %v273, %v280
        %v285 = vadd.f32 %v274, %v280
        %v286 = vmax.f32 %v282, 0.0
        %v287 = vmax.f32 %v283, 0.0
        %v288 = vmax.f32 %v284, 0.0
        %v289 = vmax.f32 %v285, 0.0
        %v290 = vld [vmem:[%s212] sm:$0xff]
        %v291 = vld [vmem:[%s212 + $0x8] sm:$0xff]
        %v292 = vld [vmem:[%s212 + $0x10] sm:$0xff]
        %v293 = vld [vmem:[%s212 + $0x18] sm:$0xff]
        %v294 = vld [vmem:[%s212 + $0x20] sm:$0xff]
        %v295 = vld [vmem:[%s212 + $0x28] sm:$0xff]
        %v296 = vld [vmem:[%s212 + $0x30] sm:$0xff]
        %v297 = vld [vmem:[%s212 + $0x38] sm:$0xff]
        %v298 = vld [vmem:[%s212 + $0x40] sm:$0xff]
        %v299 = vld [vmem:[%s212 + $0x48] sm:$0xff]
        %v300 = vld [vmem:[%s212 + $0x50] sm:$0xff]
        %v301 = vld [vmem:[%s212 + $0x58] sm:$0xff]
        %v302 = vld [vmem:[%s212 + $0x60] sm:$0xff]
        %v303 = vld [vmem:[%s212 + $0x68] sm:$0xff]
        %v304 = vld [vmem:[%s212 + $0x70] sm:$0xff]
        %v305 = vld [vmem:[%s212 + $0x78] sm:$0xff]
        %v306 = vld [vmem:[%s212 + $0x80] sm:$0xff]
        %v307 = vld [vmem:[%s212 + $0x88] sm:$0xff]
        %v308 = vld [vmem:[%s212 + $0x90] sm:$0xff]
        %v309 = vld [vmem:[%s212 + $0x98] sm:$0xff]
        %v310 = vld [vmem:[%s212 + $0xa0] sm:$0xff]
        %v311 = vld [vmem:[%s212 + $0xa8] sm:$0xff]
        %v312 = vld [vmem:[%s212 + $0xb0] sm:$0xff]
        %v313 = vld [vmem:[%s212 + $0xb8] sm:$0xff]
        %v314 = vld [vmem:[%s212 + $0xc0] sm:$0xff]
        %v315 = vld [vmem:[%s212 + $0xc8] sm:$0xff]
        %v316 = vld [vmem:[%s212 + $0xd0] sm:$0xff]
        %v317 = vld [vmem:[%s212 + $0xd8] sm:$0xff]
        %v318 = vld [vmem:[%s212 + $0xe0] sm:$0xff]
        %v319 = vld [vmem:[%s212 + $0xe8] sm:$0xff]
        %v320 = vld [vmem:[%s212 + $0xf0] sm:$0xff]
        %v321 = vld [vmem:[%s212 + $0xf8] sm:$0xff]
        %v322 = vld [vmem:[%s212 + $0x100] sm:$0xff]
        %v323 = vld [vmem:[%s212 + $0x108] sm:$0xff]
        %v324 = vld [vmem:[%s212 + $0x110] sm:$0xff]
        %v325 = vld [vmem:[%s212 + $0x118] sm:$0xff]
        %v326 = vld [vmem:[%s212 + $0x120] sm:$0xff]
        %v327 = vld [vmem:[%s212 + $0x128] sm:$0xff]
        %v328 = vld [vmem:[%s212 + $0x130] sm:$0xff]
        %v329 = vld [vmem:[%s212 + $0x138] sm:$0xff]
        %v330 = vld [vmem:[%s212 + $0x140] sm:$0xff]
        %v331 = vld [vmem:[%s212 + $0x148] sm:$0xff]
        %v332 = vld [vmem:[%s212 + $0x150] sm:$0xff]
        %v333 = vld [vmem:[%s212 + $0x158] sm:$0xff]
        %v334 = vld [vmem:[%s212 + $0x160] sm:$0xff]
        %v335 = vld [vmem:[%s212 + $0x168] sm:$0xff]
        %v336 = vld [vmem:[%s212 + $0x170] sm:$0xff]
        %v337 = vld [vmem:[%s212 + $0x178] sm:$0xff]
        %v338 = vld [vmem:[%s212 + $0x180] sm:$0xff]
        %v339 = vld [vmem:[%s212 + $0x188] sm:$0xff]
        %v340 = vld [vmem:[%s212 + $0x190] sm:$0xff]
        %v341 = vld [vmem:[%s212 + $0x198] sm:$0xff]
        %v342 = vld [vmem:[%s212 + $0x1a0] sm:$0xff]
        %v343 = vld [vmem:[%s212 + $0x1a8] sm:$0xff]
        %v344 = vld [vmem:[%s212 + $0x1b0] sm:$0xff]
        %v345 = vld [vmem:[%s212 + $0x1b8] sm:$0xff]
        %v346 = vld [vmem:[%s212 + $0x1c0] sm:$0xff]
        %v347 = vld [vmem:[%s212 + $0x1c8] sm:$0xff]
        %v348 = vld [vmem:[%s212 + $0x1d0] sm:$0xff]
        %v349 = vld [vmem:[%s212 + $0x1d8] sm:$0xff]
        %v350 = vld [vmem:[%s212 + $0x1e0] sm:$0xff]
        %v351 = vld [vmem:[%s212 + $0x1e8] sm:$0xff]
        %v352 = vld [vmem:[%s212 + $0x1f0] sm:$0xff]
        %v353 = vld [vmem:[%s212 + $0x1f8] sm:$0xff]
        %v354 = vld [vmem:[%s212 + $0x200] sm:$0xff]
        %v355 = vld [vmem:[%s212 + $0x208] sm:$0xff]
        %v356 = vld [vmem:[%s212 + $0x210] sm:$0xff]
        %v357 = vld [vmem:[%s212 + $0x218] sm:$0xff]
        %v358 = vld [vmem:[%s212 + $0x220] sm:$0xff]
        %v359 = vld [vmem:[%s212 + $0x228] sm:$0xff]
        %v360 = vld [vmem:[%s212 + $0x230] sm:$0xff]
        %v361 = vld [vmem:[%s212 + $0x238] sm:$0xff]
        %v362 = vld [vmem:[%s212 + $0x240] sm:$0xff]
        %v363 = vld [vmem:[%s212 + $0x248] sm:$0xff]
        %v364 = vld [vmem:[%s212 + $0x250] sm:$0xff]
        %v365 = vld [vmem:[%s212 + $0x258] sm:$0xff]
        %v366 = vld [vmem:[%s212 + $0x260] sm:$0xff]
        %v367 = vld [vmem:[%s212 + $0x268] sm:$0xff]
        %v368 = vld [vmem:[%s212 + $0x270] sm:$0xff]
        %v369 = vld [vmem:[%s212 + $0x278] sm:$0xff]
        %v370 = vld [vmem:[%s212 + $0x280] sm:$0xff]
        %v371 = vld [vmem:[%s212 + $0x288] sm:$0xff]
        %v372 = vld [vmem:[%s212 + $0x290] sm:$0xff]
        %v373 = vld [vmem:[%s212 + $0x298] sm:$0xff]
        %v374 = vld [vmem:[%s212 + $0x2a0] sm:$0xff]
        %v375 = vld [vmem:[%s212 + $0x2a8] sm:$0xff]
        %v376 = vld [vmem:[%s212 + $0x2b0] sm:$0xff]
        %v377 = vld [vmem:[%s212 + $0x2b8] sm:$0xff]
        %v378 = vld [vmem:[%s212 + $0x2c0] sm:$0xff]
        %v379 = vld [vmem:[%s212 + $0x2c8] sm:$0xff]
        %v380 = vld [vmem:[%s212 + $0x2d0] sm:$0xff]
        %v381 = vld [vmem:[%s212 + $0x2d8] sm:$0xff]
        %v382 = vld [vmem:[%s212 + $0x2e0] sm:$0xff]
        %v383 = vld [vmem:[%s212 + $0x2e8] sm:$0xff]
        %v384 = vld [vmem:[%s212 + $0x2f0] sm:$0xff]
        %v385 = vld [vmem:[%s212 + $0x2f8] sm:$0xff]
        %v386 = vld [vmem:[%s212 + $0x300] sm:$0xff]
        %v387 = vld [vmem:[%s212 + $0x308] sm:$0xff]
        %v388 = vld [vmem:[%s212 + $0x310] sm:$0xff]
        %v389 = vld [vmem:[%s212 + $0x318] sm:$0xff]
        %v390 = vld [vmem:[%s212 + $0x320] sm:$0xff]
        %v391 = vld [vmem:[%s212 + $0x328] sm:$0xff]
        %v392 = vld [vmem:[%s212 + $0x330] sm:$0xff]
        %v393 = vld [vmem:[%s212 + $0x338] sm:$0xff]
        %v394 = vld [vmem:[%s212 + $0x340] sm:$0xff]
        %v395 = vld [vmem:[%s212 + $0x348] sm:$0xff]
        %v396 = vld [vmem:[%s212 + $0x350] sm:$0xff]
        %v397 = vld [vmem:[%s212 + $0x358] sm:$0xff]
        %v398 = vld [vmem:[%s212 + $0x360] sm:$0xff]
        %v399 = vld [vmem:[%s212 + $0x368] sm:$0xff]
        %v400 = vld [vmem:[%s212 + $0x370] sm:$0xff]
        %v401 = vld [vmem:[%s212 + $0x378] sm:$0xff]
        %v402 = vld [vmem:[%s212 + $0x380] sm:$0xff]
        %v403 = vld [vmem:[%s212 + $0x388] sm:$0xff]
        %v404 = vld [vmem:[%s212 + $0x390] sm:$0xff]
        %v405 = vld [vmem:[%s212 + $0x398] sm:$0xff]
        %v406 = vld [vmem:[%s212 + $0x3a0] sm:$0xff]
        %v407 = vld [vmem:[%s212 + $0x3a8] sm:$0xff]
        %v408 = vld [vmem:[%s212 + $0x3b0] sm:$0xff]
        %v409 = vld [vmem:[%s212 + $0x3b8] sm:$0xff]
        %v410 = vld [vmem:[%s212 + $0x3c0] sm:$0xff]
        %v411 = vld [vmem:[%s212 + $0x3c8] sm:$0xff]
        %v412 = vld [vmem:[%s212 + $0x3d0] sm:$0xff]
        %v413 = vld [vmem:[%s212 + $0x3d8] sm:$0xff]
        %v414 = vld [vmem:[%s212 + $0x3e0] sm:$0xff]
        %v415 = vld [vmem:[%s212 + $0x3e8] sm:$0xff]
        %v416 = vld [vmem:[%s212 + $0x3f0] sm:$0xff]
        %v417 = vld [vmem:[%s212 + $0x3f8] sm:$0xff]
        %v418 = vld [vmem:[%s212 + $0x400] sm:$0xff]
        %v419 = vld [vmem:[%s212 + $0x408] sm:$0xff]
        %v420 = vld [vmem:[%s212 + $0x410] sm:$0xff]
        %v421 = vld [vmem:[%s212 + $0x418] sm:$0xff]
        %v422 = vld [vmem:[%s212 + $0x420] sm:$0xff]
        %v423 = vld [vmem:[%s212 + $0x428] sm:$0xff]
        %v424 = vld [vmem:[%s212 + $0x430] sm:$0xff]
        %v425 = vld [vmem:[%s212 + $0x438] sm:$0xff]
        %v426 = vld [vmem:[%s212 + $0x440] sm:$0xff]
        %v427 = vld [vmem:[%s212 + $0x448] sm:$0xff]
        %v428 = vld [vmem:[%s212 + $0x450] sm:$0xff]
        %v429 = vld [vmem:[%s212 + $0x458] sm:$0xff]
        %v430 = vld [vmem:[%s212 + $0x460] sm:$0xff]
        %v431 = vld [vmem:[%s212 + $0x468] sm:$0xff]
        %v432 = vld [vmem:[%s212 + $0x470] sm:$0xff]
        %v433 = vld [vmem:[%s212 + $0x478] sm:$0xff]
        %v434 = vld [vmem:[%s212 + $0x480] sm:$0xff]
        %v435 = vld [vmem:[%s212 + $0x488] sm:$0xff]
        %v436 = vld [vmem:[%s212 + $0x490] sm:$0xff]
        %v437 = vld [vmem:[%s212 + $0x498] sm:$0xff]
        %v438 = vld [vmem:[%s212 + $0x4a0] sm:$0xff]
        %v439 = vld [vmem:[%s212 + $0x4a8] sm:$0xff]
        %v440 = vld [vmem:[%s212 + $0x4b0] sm:$0xff]
        %v441 = vld [vmem:[%s212 + $0x4b8] sm:$0xff]
        %v442 = vld [vmem:[%s212 + $0x4c0] sm:$0xff]
        %v443 = vld [vmem:[%s212 + $0x4c8] sm:$0xff]
        %v444 = vld [vmem:[%s212 + $0x4d0] sm:$0xff]
        %v445 = vld [vmem:[%s212 + $0x4d8] sm:$0xff]
        %v446 = vld [vmem:[%s212 + $0x4e0] sm:$0xff]
        %v447 = vld [vmem:[%s212 + $0x4e8] sm:$0xff]
        %v448 = vld [vmem:[%s212 + $0x4f0] sm:$0xff]
        %v449 = vld [vmem:[%s212 + $0x4f8] sm:$0xff]
        %v450 = vld [vmem:[%s212 + $0x500] sm:$0xff]
        %v451 = vld [vmem:[%s212 + $0x508] sm:$0xff]
        %v452 = vld [vmem:[%s212 + $0x510] sm:$0xff]
        %v453 = vld [vmem:[%s212 + $0x518] sm:$0xff]
        %v454 = vld [vmem:[%s212 + $0x520] sm:$0xff]
        %v455 = vld [vmem:[%s212 + $0x528] sm:$0xff]
        %v456 = vld [vmem:[%s212 + $0x530] sm:$0xff]
        %v457 = vld [vmem:[%s212 + $0x538] sm:$0xff]
        %v458 = vld [vmem:[%s212 + $0x540] sm:$0xff]
        %v459 = vld [vmem:[%s212 + $0x548] sm:$0xff]
        %v460 = vld [vmem:[%s212 + $0x550] sm:$0xff]
        %v461 = vld [vmem:[%s212 + $0x558] sm:$0xff]
        %v462 = vld [vmem:[%s212 + $0x560] sm:$0xff]
        %v463 = vld [vmem:[%s212 + $0x568] sm:$0xff]
        %v464 = vld [vmem:[%s212 + $0x570] sm:$0xff]
        %v465 = vld [vmem:[%s212 + $0x578] sm:$0xff]
        %v466 = vld [vmem:[%s212 + $0x580] sm:$0xff]
        %v467 = vld [vmem:[%s212 + $0x588] sm:$0xff]
        %v468 = vld [vmem:[%s212 + $0x590] sm:$0xff]
        %v469 = vld [vmem:[%s212 + $0x598] sm:$0xff]
        %v470 = vld [vmem:[%s212 + $0x5a0] sm:$0xff]
        %v471 = vld [vmem:[%s212 + $0x5a8] sm:$0xff]
        %v472 = vld [vmem:[%s212 + $0x5b0] sm:$0xff]
        %v473 = vld [vmem:[%s212 + $0x5b8] sm:$0xff]
        %v474 = vld [vmem:[%s212 + $0x5c0] sm:$0xff]
        %v475 = vld [vmem:[%s212 + $0x5c8] sm:$0xff]
        %v476 = vld [vmem:[%s212 + $0x5d0] sm:$0xff]
        %v477 = vld [vmem:[%s212 + $0x5d8] sm:$0xff]
        %v478 = vld [vmem:[%s212 + $0x5e0] sm:$0xff]
        %v479 = vld [vmem:[%s212 + $0x5e8] sm:$0xff]
        %v480 = vld [vmem:[%s212 + $0x5f0] sm:$0xff]
        %v481 = vld [vmem:[%s212 + $0x5f8] sm:$0xff]
        %v482 = vld [vmem:[%s212 + $0x600] sm:$0xff]
        %v483 = vld [vmem:[%s212 + $0x608] sm:$0xff]
        %v484 = vld [vmem:[%s212 + $0x610] sm:$0xff]
        %v485 = vld [vmem:[%s212 + $0x618] sm:$0xff]
        %v486 = vld [vmem:[%s212 + $0x620] sm:$0xff]
        %v487 = vld [vmem:[%s212 + $0x628] sm:$0xff]
        %v488 = vld [vmem:[%s212 + $0x630] sm:$0xff]
        %v489 = vld [vmem:[%s212 + $0x638] sm:$0xff]
        %v490 = vld [vmem:[%s212 + $0x640] sm:$0xff]
        %v491 = vld [vmem:[%s212 + $0x648] sm:$0xff]
        %v492 = vld [vmem:[%s212 + $0x650] sm:$0xff]
        %v493 = vld [vmem:[%s212 + $0x658] sm:$0xff]
        %v494 = vld [vmem:[%s212 + $0x660] sm:$0xff]
        %v495 = vld [vmem:[%s212 + $0x668] sm:$0xff]
        %v496 = vld [vmem:[%s212 + $0x670] sm:$0xff]
        %v497 = vld [vmem:[%s212 + $0x678] sm:$0xff]
        %v498 = vld [vmem:[%s212 + $0x680] sm:$0xff]
        %v499 = vld [vmem:[%s212 + $0x688] sm:$0xff]
        %v500 = vld [vmem:[%s212 + $0x690] sm:$0xff]
        %v501 = vld [vmem:[%s212 + $0x698] sm:$0xff]
        %v502 = vld [vmem:[%s212 + $0x6a0] sm:$0xff]
        %v503 = vld [vmem:[%s212 + $0x6a8] sm:$0xff]
        %v504 = vld [vmem:[%s212 + $0x6b0] sm:$0xff]
        %v505 = vld [vmem:[%s212 + $0x6b8] sm:$0xff]
        %v506 = vld [vmem:[%s212 + $0x6c0] sm:$0xff]
        %v507 = vld [vmem:[%s212 + $0x6c8] sm:$0xff]
        %v508 = vld [vmem:[%s212 + $0x6d0] sm:$0xff]
        %v509 = vld [vmem:[%s212 + $0x6d8] sm:$0xff]
        %v510 = vld [vmem:[%s212 + $0x6e0] sm:$0xff]
        %v511 = vld [vmem:[%s212 + $0x6e8] sm:$0xff]
        %v512 = vld [vmem:[%s212 + $0x6f0] sm:$0xff]
        %v513 = vld [vmem:[%s212 + $0x6f8] sm:$0xff]
        %v514 = vld [vmem:[%s212 + $0x700] sm:$0xff]
        %v519 = vcombine.low %v286, %v287
        %v520 = vcombine.low %v288, %v289
        %vm523 = vcmask 130048
        %v525 = vsel %vm523, %v290, 0
        %v528 = vsel %vm523, %v291, 0
        %v531 = vsel %vm523, %v292, 0
        %v534 = vsel %vm523, %v293, 0
        %v537 = vsel %vm523, %v294, 0
        %v540 = vsel %vm523, %v295, 0
        %v543 = vsel %vm523, %v296, 0
        %v546 = vsel %vm523, %v297, 0
        %v549 = vsel %vm523, %v298, 0
        %v552 = vsel %vm523, %v299, 0
        %v555 = vsel %vm523, %v300, 0
        %v558 = vsel %vm523, %v301, 0
        %v561 = vsel %vm523, %v302, 0
        %v564 = vsel %vm523, %v303, 0
        %v567 = vsel %vm523, %v304, 0
        %v570 = vsel %vm523, %v305, 0
        %v573 = vsel %vm523, %v306, 0
        %v576 = vsel %vm523, %v307, 0
        %v579 = vsel %vm523, %v308, 0
        %v582 = vsel %vm523, %v309, 0
        %v585 = vsel %vm523, %v310, 0
        %v588 = vsel %vm523, %v311, 0
        %v591 = vsel %vm523, %v312, 0
        %v594 = vsel %vm523, %v313, 0
        %v597 = vsel %vm523, %v314, 0
        %v600 = vsel %vm523, %v315, 0
        %v603 = vsel %vm523, %v316, 0
        %v606 = vsel %vm523, %v317, 0
        %v609 = vsel %vm523, %v318, 0
        %v612 = vsel %vm523, %v319, 0
        %v615 = vsel %vm523, %v320, 0
        %v618 = vsel %vm523, %v321, 0
        %v621 = vsel %vm523, %v322, 0
        %v624 = vsel %vm523, %v323, 0
        %v627 = vsel %vm523, %v324, 0
        %v630 = vsel %vm523, %v325, 0
        %v633 = vsel %vm523, %v326, 0
        %v636 = vsel %vm523, %v327, 0
        %v639 = vsel %vm523, %v328, 0
        %v642 = vsel %vm523, %v329, 0
        %v645 = vsel %vm523, %v330, 0
        %v648 = vsel %vm523, %v331, 0
        %v651 = vsel %vm523, %v332, 0
        %v654 = vsel %vm523, %v333, 0
        %v657 = vsel %vm523, %v334, 0
        %v660 = vsel %vm523, %v335, 0
        %v663 = vsel %vm523, %v336, 0
        %v666 = vsel %vm523, %v337, 0
        %v669 = vsel %vm523, %v338, 0
        %v672 = vsel %vm523, %v339, 0
        %v675 = vsel %vm523, %v340, 0
        %v678 = vsel %vm523, %v341, 0
        %v681 = vsel %vm523, %v342, 0
        %v684 = vsel %vm523, %v343, 0
        %v687 = vsel %vm523, %v344, 0
        %v690 = vsel %vm523, %v345, 0
        %v693 = vsel %vm523, %v346, 0
        %v696 = vsel %vm523, %v347, 0
        %v699 = vsel %vm523, %v348, 0
        %v702 = vsel %vm523, %v349, 0
        %v705 = vsel %vm523, %v350, 0
        %v708 = vsel %vm523, %v351, 0
        %v711 = vsel %vm523, %v352, 0
        %v714 = vsel %vm523, %v353, 0
        %v717 = vsel %vm523, %v354, 0
        %v720 = vsel %vm523, %v355, 0
        %v723 = vsel %vm523, %v356, 0
        %v726 = vsel %vm523, %v357, 0
        %v729 = vsel %vm523, %v358, 0
        %v732 = vsel %vm523, %v359, 0
        %v735 = vsel %vm523, %v360, 0
        %v738 = vsel %vm523, %v361, 0
        %v741 = vsel %vm523, %v362, 0
        %v744 = vsel %vm523, %v363, 0
        %v747 = vsel %vm523, %v364, 0
        %v750 = vsel %vm523, %v365, 0
        %v753 = vsel %vm523, %v366, 0
        %v756 = vsel %vm523, %v367, 0
        %v759 = vsel %vm523, %v368, 0
        %v762 = vsel %vm523, %v369, 0
        %v765 = vsel %vm523, %v370, 0
        %v768 = vsel %vm523, %v371, 0
        %v771 = vsel %vm523, %v372, 0
        %v774 = vsel %vm523, %v373, 0
        %v777 = vsel %vm523, %v374, 0
        %v780 = vsel %vm523, %v375, 0
        %v783 = vsel %vm523, %v376, 0
        %v786 = vsel %vm523, %v377, 0
        %v789 = vsel %vm523, %v378, 0
        %v792 = vsel %vm523, %v379, 0
        %v795 = vsel %vm523, %v380, 0
        %v798 = vsel %vm523, %v381, 0
        %v801 = vsel %vm523, %v382, 0
        %v804 = vsel %vm523, %v383, 0
        %v807 = vsel %vm523, %v384, 0
        %v810 = vsel %vm523, %v385, 0
        %v813 = vsel %vm523, %v386, 0
        %v816 = vsel %vm523, %v387, 0
        %v819 = vsel %vm523, %v388, 0
        %v822 = vsel %vm523, %v389, 0
        %v825 = vsel %vm523, %v390, 0
        %v828 = vsel %vm523, %v391, 0
        %v831 = vsel %vm523, %v392, 0
        %v834 = vsel %vm523, %v393, 0
        %v837 = vsel %vm523, %v394, 0
        %v840 = vsel %vm523, %v395, 0
        %v843 = vsel %vm523, %v396, 0
        %v846 = vsel %vm523, %v397, 0
        %v849 = vsel %vm523, %v398, 0
        %v852 = vsel %vm523, %v399, 0
        %v855 = vsel %vm523, %v400, 0
        %v858 = vsel %vm523, %v401, 0
        %v861 = vsel %vm523, %v402, 0
        %v864 = vsel %vm523, %v403, 0
        %v867 = vsel %vm523, %v404, 0
        %v870 = vsel %vm523, %v405, 0
        %v873 = vsel %vm523, %v406, 0
        %v876 = vsel %vm523, %v407, 0
        %v879 = vsel %vm523, %v408, 0
        %v882 = vsel %vm523, %v409, 0
        %v885 = vsel %vm523, %v410, 0
        %v888 = vsel %vm523, %v411, 0
        %v891 = vsel %vm523, %v412, 0
        %v894 = vsel %vm523, %v413, 0
        %v897 = vsel %vm523, %v414, 0
        %v900 = vsel %vm523, %v415, 0
        %v903 = vsel %vm523, %v416, 0
        %v906 = vsel %vm523, %v417, 0
        %v909 = vsel %vm523, %v418, 0
        %v912 = vsel %vm523, %v419, 0
        %v915 = vsel %vm523, %v420, 0
        %v918 = vsel %vm523, %v421, 0
        %v921 = vsel %vm523, %v422, 0
        %v924 = vsel %vm523, %v423, 0
        %v927 = vsel %vm523, %v424, 0
        %v930 = vsel %vm523, %v425, 0
        %v933 = vsel %vm523, %v426, 0
        %v936 = vsel %vm523, %v427, 0
        %v939 = vsel %vm523, %v428, 0
        %v942 = vsel %vm523, %v429, 0
        %v945 = vsel %vm523, %v430, 0
        %v948 = vsel %vm523, %v431, 0
        %v951 = vsel %vm523, %v432, 0
        %v954 = vsel %vm523, %v433, 0
        %v957 = vsel %vm523, %v434, 0
        %v960 = vsel %vm523, %v435, 0
        %v963 = vsel %vm523, %v436, 0
        %v966 = vsel %vm523, %v437, 0
        %v969 = vsel %vm523, %v438, 0
        %v972 = vsel %vm523, %v439, 0
        %v975 = vsel %vm523, %v440, 0
        %v978 = vsel %vm523, %v441, 0
        %v981 = vsel %vm523, %v442, 0
        %v984 = vsel %vm523, %v443, 0
        %v987 = vsel %vm523, %v444, 0
        %v990 = vsel %vm523, %v445, 0
        %v993 = vsel %vm523, %v446, 0
        %v996 = vsel %vm523, %v447, 0
        %v999 = vsel %vm523, %v448, 0
        %v1002 = vsel %vm523, %v449, 0
        %v1005 = vsel %vm523, %v450, 0
        %v1008 = vsel %vm523, %v451, 0
        %v1011 = vsel %vm523, %v452, 0
        %v1014 = vsel %vm523, %v453, 0
        %v1017 = vsel %vm523, %v454, 0
        %v1020 = vsel %vm523, %v455, 0
        %v1023 = vsel %vm523, %v456, 0
        %v1026 = vsel %vm523, %v457, 0
        %v1029 = vsel %vm523, %v458, 0
        %v1032 = vsel %vm523, %v459, 0
        %v1035 = vsel %vm523, %v460, 0
        %v1038 = vsel %vm523, %v461, 0
        %v1041 = vsel %vm523, %v462, 0
        %v1044 = vsel %vm523, %v463, 0
        %v1047 = vsel %vm523, %v464, 0
        %v1050 = vsel %vm523, %v465, 0
        %v1053 = vsel %vm523, %v466, 0
        %v1056 = vsel %vm523, %v467, 0
        %v1059 = vsel %vm523, %v468, 0
        %v1062 = vsel %vm523, %v469, 0
        %v1065 = vsel %vm523, %v470, 0
        %v1068 = vsel %vm523, %v471, 0
        %v1071 = vsel %vm523, %v472, 0
        %v1074 = vsel %vm523, %v473, 0
        %v1077 = vsel %vm523, %v474, 0
        %v1080 = vsel %vm523, %v475, 0
        %v1083 = vsel %vm523, %v476, 0
        %v1086 = vsel %vm523, %v477, 0
        %v1089 = vsel %vm523, %v478, 0
        %v1092 = vsel %vm523, %v479, 0
        %v1095 = vsel %vm523, %v480, 0
        %v1098 = vsel %vm523, %v481, 0
        %v1101 = vsel %vm523, %v482, 0
        %v1104 = vsel %vm523, %v483, 0
        %v1107 = vsel %vm523, %v484, 0
        %v1110 = vsel %vm523, %v485, 0
        %v1113 = vsel %vm523, %v486, 0
        %v1116 = vsel %vm523, %v487, 0
        %v1119 = vsel %vm523, %v488, 0
        %v1122 = vsel %vm523, %v489, 0
        %v1125 = vsel %vm523, %v490, 0
        %v1128 = vsel %vm523, %v491, 0
        %v1131 = vsel %vm523, %v492, 0
        %v1134 = vsel %vm523, %v493, 0
        %v1137 = vsel %vm523, %v494, 0
        %v1140 = vsel %vm523, %v495, 0
        %v1143 = vsel %vm523, %v496, 0
        %v1146 = vsel %vm523, %v497, 0
        %v1149 = vsel %vm523, %v498, 0
        %v1152 = vsel %vm523, %v499, 0
        %v1155 = vsel %vm523, %v500, 0
        %v1158 = vsel %vm523, %v501, 0
        %v1161 = vsel %vm523, %v502, 0
        %v1164 = vsel %vm523, %v503, 0
        %v1167 = vsel %vm523, %v504, 0
        %v1170 = vsel %vm523, %v505, 0
        %v1173 = vsel %vm523, %v506, 0
        %v1176 = vsel %vm523, %v507, 0
        %v1179 = vsel %vm523, %v508, 0
        %v1182 = vsel %vm523, %v509, 0
        %v1185 = vsel %vm523, %v510, 0
        %v1188 = vsel %vm523, %v511, 0
        %v1191 = vsel %vm523, %v512, 0
        %v1194 = vsel %vm523, %v513, 0
        %v1197 = vsel %vm523, %v514, 0
        %1199 = vmatprep.subr.mxu0 0.0
        %1200 = vmatpush1.msra.mxu0 %v519
        %1201 = vmatprep.subr.mxu0 0.0
        %1202 = vmatpush1.msra.mxu0 %v520
        %1203 = vmatprep.subr.mxu0 0.0
        %1204 = vmatpush1.msra.mxu0 0.0
        %1205 = vmatprep.subr.mxu0 0.0
        %1206 = vmatpush1.msra.mxu0 0.0
        %1207 = vmatprep.subr.mxu0 0.0
        %1208 = vmatpush1.msra.mxu0 0.0
        %1209 = vmatprep.subr.mxu0 0.0
        %1210 = vmatpush1.msra.mxu0 0.0
        %1211 = vmatprep.subr.mxu0 0.0
        %1212 = vmatpush1.msra.mxu0 0.0
        %1213 = vmatprep.subr.mxu0 0.0
        %1214 = vmatpush1.msra.mxu0 0.0
        %1215 = vmatprep.subr.mxu0 0.0
        %1216 = vmatpush1.msra.mxu0 0.0
        %1217 = vmatprep.subr.mxu0 0.0
        %1218 = vmatpush1.msra.mxu0 0.0
        %1219 = vmatprep.subr.mxu0 0.0
        %1220 = vmatpush1.msra.mxu0 0.0
        %1221 = vmatprep.subr.mxu0 0.0
        %1222 = vmatpush1.msra.mxu0 0.0
        %1223 = vmatprep.subr.mxu0 0.0
        %1224 = vmatpush1.msra.mxu0 0.0
        %1225 = vmatprep.subr.mxu0 0.0
        %1226 = vmatpush1.msra.mxu0 0.0
        %1227 = vmatprep.subr.mxu0 0.0
        %1228 = vmatpush1.msra.mxu0 0.0
        %1229 = vmatprep.subr.mxu0 0.0
        %1230 = vmatpush1.msra.mxu0 0.0
        %1231 = vmatprep.subr.mxu0 0.0
        %1232 = vmatpush1.msra.mxu0 0.0
        %1233 = vmatprep.subr.mxu0 0.0
        %1234 = vmatpush1.msra.mxu0 0.0
        %1235 = vmatprep.subr.mxu0 0.0
        %1236 = vmatpush1.msra.mxu0 0.0
        %1237 = vmatprep.subr.mxu0 0.0
        %1238 = vmatpush1.msra.mxu0 0.0
        %1239 = vmatprep.subr.mxu0 0.0
        %1240 = vmatpush1.msra.mxu0 0.0
        %1241 = vmatprep.subr.mxu0 0.0
        %1242 = vmatpush1.msra.mxu0 0.0
        %1243 = vmatprep.subr.mxu0 0.0
        %1244 = vmatpush1.msra.mxu0 0.0
        %1245 = vmatprep.subr.mxu0 0.0
        %1246 = vmatpush1.msra.mxu0 0.0
        %1247 = vmatprep.subr.mxu0 0.0
        %1248 = vmatpush1.msra.mxu0 0.0
        %1249 = vmatprep.subr.mxu0 0.0
        %1250 = vmatpush1.msra.mxu0 0.0
        %1251 = vmatprep.subr.mxu0 0.0
        %1252 = vmatpush1.msra.mxu0 0.0
        %1253 = vmatprep.subr.mxu0 0.0
        %1254 = vmatpush1.msra.mxu0 0.0
        %1255 = vmatprep.subr.mxu0 0.0
        %1256 = vmatpush1.msra.mxu0 0.0
        %1257 = vmatprep.subr.mxu0 0.0
        %1258 = vmatpush1.msra.mxu0 0.0
        %1259 = vmatprep.subr.mxu0 0.0
        %1260 = vmatpush1.msra.mxu0 0.0
        %1261 = vmatprep.subr.mxu0 0.0
        %1262 = vmatpush1.msra.mxu0 0.0
        %1263 = vmatprep.mubr.f32.mxu0 0.0
        %1264 = vmatmul.mubr.f32.gmra.mrb[0].mxu0 %v525
        %v1265 = vpop.f32.mrb[0].mxu0
        %v1266 = vadd.f32 0.0, %v1265
        %v1267 = vpop.f32.mrb[0].mxu0
        %1268 = vmatprep.mubr.f32.mxu0 0.0
        %1269 = vmatmul.mubr.f32.gmra.mrb[0].mxu0 %v528
        %v1270 = vpop.f32.mrb[0].mxu0
        %v1271 = vadd.f32 0.0, %v1270
        %v1272 = vpop.f32.mrb[0].mxu0
        %1273 = vmatprep.mubr.f32.mxu0 0.0
        %1274 = vmatmul.mubr.f32.gmra.mrb[0].mxu0 %v531
        %v1275 = vpop.f32.mrb[0].mxu0
        %v1276 = vadd.f32 0.0, %v1275
        %v1277 = vpop.f32.mrb[0].mxu0
        %1278 = vmatprep.mubr.f32.mxu0 0.0
        %1279 = vmatmul.mubr.f32.gmra.mrb[0].mxu0 %v534
        %v1280 = vpop.f32.mrb[0].mxu0
        %v1281 = vadd.f32 0.0, %v1280
        %v1282 = vpop.f32.mrb[0].mxu0
        %1283 = vmatprep.mubr.f32.mxu0 0.0
        %1284 = vmatmul.mubr.f32.gmra.mrb[0].mxu0 %v537
        %v1285 = vpop.f32.mrb[0].mxu0
        %v1286 = vadd.f32 0.0, %v1285
        %v1287 = vpop.f32.mrb[0].mxu0
        %1288 = vmatprep.mubr.f32.mxu0 0.0
        %1289 = vmatmul.mubr.f32.gmra.mrb[0].mxu0 %v540
        %v1290 = vpop.f32.mrb[0].mxu0
        %v1291 = vadd.f32 0.0, %v1290
        %v1292 = vpop.f32.mrb[0].mxu0
        %1293 = vmatprep.mubr.f32.mxu0 0.0
        %1294 = vmatmul.mubr.f32.gmra.mrb[0].mxu0 %v543
        %v1295 = vpop.f32.mrb[0].mxu0
        %v1296 = vadd.f32 0.0, %v1295
        %v1297 = vpop.f32.mrb[0].mxu0
        %1298 = vmatprep.mubr.f32.mxu0 0.0
        %1299 = vmatmul.mubr.f32.gmra.mrb[0].mxu0 %v546
        %v1300 = vpop.f32.mrb[0].mxu0
        %v1301 = vadd.f32 0.0, %v1300
        %v1302 = vpop.f32.mrb[0].mxu0
        %1303 = vmatprep.mubr.f32.mxu0 0.0
        %1304 = vmatmul.mubr.f32.gmra.mrb[0].mxu0 %v549
        %v1305 = vpop.f32.mrb[0].mxu0
        %v1306 = vadd.f32 0.0, %v1305
        %v1307 = vpop.f32.mrb[0].mxu0
        %1308 = vmatprep.mubr.f32.mxu0 0.0
        %1309 = vmatmul.mubr.f32.gmra.mrb[0].mxu0 %v552
        %v1310 = vpop.f32.mrb[0].mxu0
        %v1311 = vadd.f32 0.0, %v1310
        %v1312 = vpop.f32.mrb[0].mxu0
        %1313 = vmatprep.mubr.f32.mxu0 0.0
        %1314 = vmatmul.mubr.f32.gmra.mrb[0].mxu0 %v555
        %v1315 = vpop.f32.mrb[0].mxu0
        %v1316 = vadd.f32 0.0, %v1315
        %v1317 = vpop.f32.mrb[0].mxu0
        %1318 = vmatprep.mubr.f32.mxu0 0.0
        %1319 = vmatmul.mubr.f32.gmra.mrb[0].mxu0 %v558
        %v1320 = vpop.f32.mrb[0].mxu0
        %v1321 = vadd.f32 0.0, %v1320
        %v1322 = vpop.f32.mrb[0].mxu0
        %1323 = vmatprep.mubr.f32.mxu0 0.0
        %1324 = vmatmul.mubr.f32.gmra.mrb[0].mxu0 %v561
        %v1325 = vpop.f32.mrb[0].mxu0
        %v1326 = vadd.f32 0.0, %v1325
        %v1327 = vpop.f32.mrb[0].mxu0
        %1328 = vmatprep.mubr.f32.mxu0 0.0
        %1329 = vmatmul.mubr.f32.gmra.mrb[0].mxu0 %v564
        %v1330 = vpop.f32.mrb[0].mxu0
        %v1331 = vadd.f32 0.0, %v1330
        %v1332 = vpop.f32.mrb[0].mxu0
        %1333 = vmatprep.mubr.f32.mxu0 0.0
        %1334 = vmatmul.mubr.f32.gmra.mrb[0].mxu0 %v567
        %v1335 = vpop.f32.mrb[0].mxu0
        %v1336 = vadd.f32 0.0, %v1335
        %v1337 = vpop.f32.mrb[0].mxu0
        %1338 = vmatprep.mubr.f32.mxu0 0.0
        %1339 = vmatmul.mubr.f32.gmra.mrb[0].mxu0 %v570
        %v1340 = vpop.f32.mrb[0].mxu0
        %v1341 = vadd.f32 0.0, %v1340
        %v1342 = vpop.f32.mrb[0].mxu0
        %1343 = vmatprep.mubr.f32.mxu0 0.0
        %1344 = vmatmul.mubr.f32.gmra.mrb[0].mxu0 %v573
        %v1345 = vpop.f32.mrb[0].mxu0
        %v1346 = vadd.f32 0.0, %v1345
        %v1347 = vpop.f32.mrb[0].mxu0
        %1348 = vmatprep.mubr.f32.mxu0 0.0
        %1349 = vmatmul.mubr.f32.gmra.mrb[0].mxu0 %v576
        %v1350 = vpop.f32.mrb[0].mxu0
        %v1351 = vadd.f32 0.0, %v1350
        %v1352 = vpop.f32.mrb[0].mxu0
        %1353 = vmatprep.mubr.f32.mxu0 0.0
        %1354 = vmatmul.mubr.f32.gmra.mrb[0].mxu0 %v579
        %v1355 = vpop.f32.mrb[0].mxu0
        %v1356 = vadd.f32 0.0, %v1355
        %v1357 = vpop.f32.mrb[0].mxu0
        %1358 = vmatprep.mubr.f32.mxu0 0.0
        %1359 = vmatmul.mubr.f32.gmra.mrb[0].mxu0 %v582
        %v1360 = vpop.f32.mrb[0].mxu0
        %v1361 = vadd.f32 0.0, %v1360
        %v1362 = vpop.f32.mrb[0].mxu0
        %1363 = vmatprep.mubr.f32.mxu0 0.0
        %1364 = vmatmul.mubr.f32.gmra.mrb[0].mxu0 %v585
        %v1365 = vpop.f32.mrb[0].mxu0
        %v1366 = vadd.f32 0.0, %v1365
        %v1367 = vpop.f32.mrb[0].mxu0
        %1368 = vmatprep.mubr.f32.mxu0 0.0
        %1369 = vmatmul.mubr.f32.gmra.mrb[0].mxu0 %v588
        %v1370 = vpop.f32.mrb[0].mxu0
        %v1371 = vadd.f32 0.0, %v1370
        %v1372 = vpop.f32.mrb[0].mxu0
        %1373 = vmatprep.mubr.f32.mxu0 0.0
        %1374 = vmatmul.mubr.f32.gmra.mrb[0].mxu0 %v591
        %v1375 = vpop.f32.mrb[0].mxu0
        %v1376 = vadd.f32 0.0, %v1375
        %v1377 = vpop.f32.mrb[0].mxu0
        %1378 = vmatprep.mubr.f32.mxu0 0.0
        %1379 = vmatmul.mubr.f32.gmra.mrb[0].mxu0 %v594
        %v1380 = vpop.f32.mrb[0].mxu0
        %v1381 = vadd.f32 0.0, %v1380
        %v1382 = vpop.f32.mrb[0].mxu0
        %1383 = vmatprep.mubr.f32.mxu0 0.0
        %1384 = vmatmul.mubr.f32.gmra.mrb[0].mxu0 %v597
        %v1385 = vpop.f32.mrb[0].mxu0
        %v1386 = vadd.f32 0.0, %v1385
        %v1387 = vpop.f32.mrb[0].mxu0
        %1388 = vmatprep.mubr.f32.mxu0 0.0
        %1389 = vmatmul.mubr.f32.gmra.mrb[0].mxu0 %v600
        %v1390 = vpop.f32.mrb[0].mxu0
        %v1391 = vadd.f32 0.0, %v1390
        %v1392 = vpop.f32.mrb[0].mxu0
        %1393 = vmatprep.mubr.f32.mxu0 0.0
        %1394 = vmatmul.mubr.f32.gmra.mrb[0].mxu0 %v603
        %v1395 = vpop.f32.mrb[0].mxu0
        %v1396 = vadd.f32 0.0, %v1395
        %v1397 = vpop.f32.mrb[0].mxu0
        %1398 = vmatprep.mubr.f32.mxu0 0.0
        %1399 = vmatmul.mubr.f32.gmra.mrb[0].mxu0 %v606
        %v1400 = vpop.f32.mrb[0].mxu0
        %v1401 = vadd.f32 0.0, %v1400
        %v1402 = vpop.f32.mrb[0].mxu0
        %1403 = vmatprep.mubr.f32.mxu0 0.0
        %1404 = vmatmul.mubr.f32.gmra.mrb[0].mxu0 %v609
        %v1405 = vpop.f32.mrb[0].mxu0
        %v1406 = vadd.f32 0.0, %v1405
        %v1407 = vpop.f32.mrb[0].mxu0
        %1408 = vmatprep.mubr.f32.mxu0 0.0
        %1409 = vmatmul.mubr.f32.gmra.mrb[0].mxu0 %v612
        %v1410 = vpop.f32.mrb[0].mxu0
        %v1411 = vadd.f32 0.0, %v1410
        %v1412 = vpop.f32.mrb[0].mxu0
        %1413 = vmatprep.mubr.f32.mxu0 0.0
        %1414 = vmatmul.mubr.f32.gmra.mrb[0].mxu0 %v615
        %v1415 = vpop.f32.mrb[0].mxu0
        %v1416 = vadd.f32 0.0, %v1415
        %v1417 = vpop.f32.mrb[0].mxu0
        %1418 = vmatprep.mubr.f32.mxu0 0.0
        %1419 = vmatmul.mubr.f32.gmra.mrb[0].mxu0 %v618
        %v1420 = vpop.f32.mrb[0].mxu0
        %v1421 = vadd.f32 0.0, %v1420
        %v1422 = vpop.f32.mrb[0].mxu0
        %1423 = vmatprep.mubr.f32.mxu0 0.0
        %1424 = vmatmul.mubr.f32.gmra.mrb[0].mxu0 %v621
        %v1425 = vpop.f32.mrb[0].mxu0
        %v1426 = vadd.f32 0.0, %v1425
        %v1427 = vpop.f32.mrb[0].mxu0
        %1428 = vmatprep.mubr.f32.mxu0 0.0
        %1429 = vmatmul.mubr.f32.gmra.mrb[0].mxu0 %v624
        %v1430 = vpop.f32.mrb[0].mxu0
        %v1431 = vadd.f32 0.0, %v1430
        %v1432 = vpop.f32.mrb[0].mxu0
        %1433 = vmatprep.mubr.f32.mxu0 0.0
        %1434 = vmatmul.mubr.f32.gmra.mrb[0].mxu0 %v627
        %v1435 = vpop.f32.mrb[0].mxu0
        %v1436 = vadd.f32 0.0, %v1435
        %v1437 = vpop.f32.mrb[0].mxu0
        %1438 = vmatprep.mubr.f32.mxu0 0.0
        %1439 = vmatmul.mubr.f32.gmra.mrb[0].mxu0 %v630
        %v1440 = vpop.f32.mrb[0].mxu0
        %v1441 = vadd.f32 0.0, %v1440
        %v1442 = vpop.f32.mrb[0].mxu0
        %1443 = vmatprep.mubr.f32.mxu0 0.0
        %1444 = vmatmul.mubr.f32.gmra.mrb[0].mxu0 %v633
        %v1445 = vpop.f32.mrb[0].mxu0
        %v1446 = vadd.f32 0.0, %v1445
        %v1447 = vpop.f32.mrb[0].mxu0
        %1448 = vmatprep.mubr.f32.mxu0 0.0
        %1449 = vmatmul.mubr.f32.gmra.mrb[0].mxu0 %v636
        %v1450 = vpop.f32.mrb[0].mxu0
        %v1451 = vadd.f32 0.0, %v1450
        %v1452 = vpop.f32.mrb[0].mxu0
        %1453 = vmatprep.mubr.f32.mxu0 0.0
        %1454 = vmatmul.mubr.f32.gmra.mrb[0].mxu0 %v639
        %v1455 = vpop.f32.mrb[0].mxu0
        %v1456 = vadd.f32 0.0, %v1455
        %v1457 = vpop.f32.mrb[0].mxu0
        %1458 = vmatprep.mubr.f32.mxu0 0.0
        %1459 = vmatmul.mubr.f32.gmra.mrb[0].mxu0 %v642
        %v1460 = vpop.f32.mrb[0].mxu0
        %v1461 = vadd.f32 0.0, %v1460
        %v1462 = vpop.f32.mrb[0].mxu0
        %1463 = vmatprep.mubr.f32.mxu0 0.0
        %1464 = vmatmul.mubr.f32.gmra.mrb[0].mxu0 %v645
        %v1465 = vpop.f32.mrb[0].mxu0
        %v1466 = vadd.f32 0.0, %v1465
        %v1467 = vpop.f32.mrb[0].mxu0
        %1468 = vmatprep.mubr.f32.mxu0 0.0
        %1469 = vmatmul.mubr.f32.gmra.mrb[0].mxu0 %v648
        %v1470 = vpop.f32.mrb[0].mxu0
        %v1471 = vadd.f32 0.0, %v1470
        %v1472 = vpop.f32.mrb[0].mxu0
        %1473 = vmatprep.mubr.f32.mxu0 0.0
        %1474 = vmatmul.mubr.f32.gmra.mrb[0].mxu0 %v651
        %v1475 = vpop.f32.mrb[0].mxu0
        %v1476 = vadd.f32 0.0, %v1475
        %v1477 = vpop.f32.mrb[0].mxu0
        %1478 = vmatprep.mubr.f32.mxu0 0.0
        %1479 = vmatmul.mubr.f32.gmra.mrb[0].mxu0 %v654
        %v1480 = vpop.f32.mrb[0].mxu0
        %v1481 = vadd.f32 0.0, %v1480
        %v1482 = vpop.f32.mrb[0].mxu0
        %1483 = vmatprep.mubr.f32.mxu0 0.0
        %1484 = vmatmul.mubr.f32.gmra.mrb[0].mxu0 %v657
        %v1485 = vpop.f32.mrb[0].mxu0
        %v1486 = vadd.f32 0.0, %v1485
        %v1487 = vpop.f32.mrb[0].mxu0
        %1488 = vmatprep.mubr.f32.mxu0 0.0
        %1489 = vmatmul.mubr.f32.gmra.mrb[0].mxu0 %v660
        %v1490 = vpop.f32.mrb[0].mxu0
        %v1491 = vadd.f32 0.0, %v1490
        %v1492 = vpop.f32.mrb[0].mxu0
        %1493 = vmatprep.mubr.f32.mxu0 0.0
        %1494 = vmatmul.mubr.f32.gmra.mrb[0].mxu0 %v663
        %v1495 = vpop.f32.mrb[0].mxu0
        %v1496 = vadd.f32 0.0, %v1495
        %v1497 = vpop.f32.mrb[0].mxu0
        %1498 = vmatprep.mubr.f32.mxu0 0.0
        %1499 = vmatmul.mubr.f32.gmra.mrb[0].mxu0 %v666
        %v1500 = vpop.f32.mrb[0].mxu0
        %v1501 = vadd.f32 0.0, %v1500
        %v1502 = vpop.f32.mrb[0].mxu0
        %1503 = vmatprep.mubr.f32.mxu0 0.0
        %1504 = vmatmul.mubr.f32.gmra.mrb[0].mxu0 %v669
        %v1505 = vpop.f32.mrb[0].mxu0
        %v1506 = vadd.f32 0.0, %v1505
        %v1507 = vpop.f32.mrb[0].mxu0
        %1508 = vmatprep.mubr.f32.mxu0 0.0
        %1509 = vmatmul.mubr.f32.gmra.mrb[0].mxu0 %v672
        %v1510 = vpop.f32.mrb[0].mxu0
        %v1511 = vadd.f32 0.0, %v1510
        %v1512 = vpop.f32.mrb[0].mxu0
        %1513 = vmatprep.mubr.f32.mxu0 0.0
        %1514 = vmatmul.mubr.f32.gmra.mrb[0].mxu0 %v675
        %v1515 = vpop.f32.mrb[0].mxu0
        %v1516 = vadd.f32 0.0, %v1515
        %v1517 = vpop.f32.mrb[0].mxu0
        %1518 = vmatprep.mubr.f32.mxu0 0.0
        %1519 = vmatmul.mubr.f32.gmra.mrb[0].mxu0 %v678
        %v1520 = vpop.f32.mrb[0].mxu0
        %v1521 = vadd.f32 0.0, %v1520
        %v1522 = vpop.f32.mrb[0].mxu0
        %1523 = vmatprep.mubr.f32.mxu0 0.0
        %1524 = vmatmul.mubr.f32.gmra.mrb[0].mxu0 %v681
        %v1525 = vpop.f32.mrb[0].mxu0
        %v1526 = vadd.f32 0.0, %v1525
        %v1527 = vpop.f32.mrb[0].mxu0
        %1528 = vmatprep.mubr.f32.mxu0 0.0
        %1529 = vmatmul.mubr.f32.gmra.mrb[0].mxu0 %v684
        %v1530 = vpop.f32.mrb[0].mxu0
        %v1531 = vadd.f32 0.0, %v1530
        %v1532 = vpop.f32.mrb[0].mxu0
        %1533 = vmatprep.mubr.f32.mxu0 0.0
        %1534 = vmatmul.mubr.f32.gmra.mrb[0].mxu0 %v687
        %v1535 = vpop.f32.mrb[0].mxu0
        %v1536 = vadd.f32 0.0, %v1535
        %v1537 = vpop.f32.mrb[0].mxu0
        %1538 = vmatprep.mubr.f32.mxu0 0.0
        %1539 = vmatmul.mubr.f32.gmra.mrb[0].mxu0 %v690
        %v1540 = vpop.f32.mrb[0].mxu0
        %v1541 = vadd.f32 0.0, %v1540
        %v1542 = vpop.f32.mrb[0].mxu0
        %1543 = vmatprep.mubr.f32.mxu0 0.0
        %1544 = vmatmul.mubr.f32.gmra.mrb[0].mxu0 %v693
        %v1545 = vpop.f32.mrb[0].mxu0
        %v1546 = vadd.f32 0.0, %v1545
        %v1547 = vpop.f32.mrb[0].mxu0
        %1548 = vmatprep.mubr.f32.mxu0 0.0
        %1549 = vmatmul.mubr.f32.gmra.mrb[0].mxu0 %v696
        %v1550 = vpop.f32.mrb[0].mxu0
        %v1551 = vadd.f32 0.0, %v1550
        %v1552 = vpop.f32.mrb[0].mxu0
        %1553 = vmatprep.mubr.f32.mxu0 0.0
        %1554 = vmatmul.mubr.f32.gmra.mrb[0].mxu0 %v699
        %v1555 = vpop.f32.mrb[0].mxu0
        %v1556 = vadd.f32 0.0, %v1555
        %v1557 = vpop.f32.mrb[0].mxu0
        %1558 = vmatprep.mubr.f32.mxu0 0.0
        %1559 = vmatmul.mubr.f32.gmra.mrb[0].mxu0 %v702
        %v1560 = vpop.f32.mrb[0].mxu0
        %v1561 = vadd.f32 0.0, %v1560
        %v1562 = vpop.f32.mrb[0].mxu0
        %1563 = vmatprep.mubr.f32.mxu0 0.0
        %1564 = vmatmul.mubr.f32.gmra.mrb[0].mxu0 %v705
        %v1565 = vpop.f32.mrb[0].mxu0
        %v1566 = vadd.f32 0.0, %v1565
        %v1567 = vpop.f32.mrb[0].mxu0
        %1568 = vmatprep.mubr.f32.mxu0 0.0
        %1569 = vmatmul.mubr.f32.gmra.mrb[0].mxu0 %v708
        %v1570 = vpop.f32.mrb[0].mxu0
        %v1571 = vadd.f32 0.0, %v1570
        %v1572 = vpop.f32.mrb[0].mxu0
        %1573 = vmatprep.mubr.f32.mxu0 0.0
        %1574 = vmatmul.mubr.f32.gmra.mrb[0].mxu0 %v711
        %v1575 = vpop.f32.mrb[0].mxu0
        %v1576 = vadd.f32 0.0, %v1575
        %v1577 = vpop.f32.mrb[0].mxu0
        %1578 = vmatprep.mubr.f32.mxu0 0.0
        %1579 = vmatmul.mubr.f32.gmra.mrb[0].mxu0 %v714
        %v1580 = vpop.f32.mrb[0].mxu0
        %v1581 = vadd.f32 0.0, %v1580
        %v1582 = vpop.f32.mrb[0].mxu0
        %1583 = vmatprep.mubr.f32.mxu0 0.0
        %1584 = vmatmul.mubr.f32.gmra.mrb[0].mxu0 %v717
        %v1585 = vpop.f32.mrb[0].mxu0
        %v1586 = vadd.f32 0.0, %v1585
        %v1587 = vpop.f32.mrb[0].mxu0
        %1588 = vmatprep.mubr.f32.mxu0 0.0
        %1589 = vmatmul.mubr.f32.gmra.mrb[0].mxu0 %v720
        %v1590 = vpop.f32.mrb[0].mxu0
        %v1591 = vadd.f32 0.0, %v1590
        %v1592 = vpop.f32.mrb[0].mxu0
        %1593 = vmatprep.mubr.f32.mxu0 0.0
        %1594 = vmatmul.mubr.f32.gmra.mrb[0].mxu0 %v723
        %v1595 = vpop.f32.mrb[0].mxu0
        %v1596 = vadd.f32 0.0, %v1595
        %v1597 = vpop.f32.mrb[0].mxu0
        %1598 = vmatprep.mubr.f32.mxu0 0.0
        %1599 = vmatmul.mubr.f32.gmra.mrb[0].mxu0 %v726
        %v1600 = vpop.f32.mrb[0].mxu0
        %v1601 = vadd.f32 0.0, %v1600
        %v1602 = vpop.f32.mrb[0].mxu0
        %1603 = vmatprep.mubr.f32.mxu0 0.0
        %1604 = vmatmul.mubr.f32.gmra.mrb[0].mxu0 %v729
        %v1605 = vpop.f32.mrb[0].mxu0
        %v1606 = vadd.f32 0.0, %v1605
        %v1607 = vpop.f32.mrb[0].mxu0
        %1608 = vmatprep.mubr.f32.mxu0 0.0
        %1609 = vmatmul.mubr.f32.gmra.mrb[0].mxu0 %v732
        %v1610 = vpop.f32.mrb[0].mxu0
        %v1611 = vadd.f32 0.0, %v1610
        %v1612 = vpop.f32.mrb[0].mxu0
        %1613 = vmatprep.mubr.f32.mxu0 0.0
        %1614 = vmatmul.mubr.f32.gmra.mrb[0].mxu0 %v735
        %v1615 = vpop.f32.mrb[0].mxu0
        %v1616 = vadd.f32 0.0, %v1615
        %v1617 = vpop.f32.mrb[0].mxu0
        %1618 = vmatprep.mubr.f32.mxu0 0.0
        %1619 = vmatmul.mubr.f32.gmra.mrb[0].mxu0 %v738
        %v1620 = vpop.f32.mrb[0].mxu0
        %v1621 = vadd.f32 0.0, %v1620
        %v1622 = vpop.f32.mrb[0].mxu0
        %1623 = vmatprep.mubr.f32.mxu0 0.0
        %1624 = vmatmul.mubr.f32.gmra.mrb[0].mxu0 %v741
        %v1625 = vpop.f32.mrb[0].mxu0
        %v1626 = vadd.f32 0.0, %v1625
        %v1627 = vpop.f32.mrb[0].mxu0
        %1628 = vmatprep.mubr.f32.mxu0 0.0
        %1629 = vmatmul.mubr.f32.gmra.mrb[0].mxu0 %v744
        %v1630 = vpop.f32.mrb[0].mxu0
        %v1631 = vadd.f32 0.0, %v1630
        %v1632 = vpop.f32.mrb[0].mxu0
        %1633 = vmatprep.mubr.f32.mxu0 0.0
        %1634 = vmatmul.mubr.f32.gmra.mrb[0].mxu0 %v747
        %v1635 = vpop.f32.mrb[0].mxu0
        %v1636 = vadd.f32 0.0, %v1635
        %v1637 = vpop.f32.mrb[0].mxu0
        %1638 = vmatprep.mubr.f32.mxu0 0.0
        %1639 = vmatmul.mubr.f32.gmra.mrb[0].mxu0 %v750
        %v1640 = vpop.f32.mrb[0].mxu0
        %v1641 = vadd.f32 0.0, %v1640
        %v1642 = vpop.f32.mrb[0].mxu0
        %1643 = vmatprep.mubr.f32.mxu0 0.0
        %1644 = vmatmul.mubr.f32.gmra.mrb[0].mxu0 %v753
        %v1645 = vpop.f32.mrb[0].mxu0
        %v1646 = vadd.f32 0.0, %v1645
        %v1647 = vpop.f32.mrb[0].mxu0
        %1648 = vmatprep.mubr.f32.mxu0 0.0
        %1649 = vmatmul.mubr.f32.gmra.mrb[0].mxu0 %v756
        %v1650 = vpop.f32.mrb[0].mxu0
        %v1651 = vadd.f32 0.0, %v1650
        %v1652 = vpop.f32.mrb[0].mxu0
        %1653 = vmatprep.mubr.f32.mxu0 0.0
        %1654 = vmatmul.mubr.f32.gmra.mrb[0].mxu0 %v759
        %v1655 = vpop.f32.mrb[0].mxu0
        %v1656 = vadd.f32 0.0, %v1655
        %v1657 = vpop.f32.mrb[0].mxu0
        %1658 = vmatprep.mubr.f32.mxu0 0.0
        %1659 = vmatmul.mubr.f32.gmra.mrb[0].mxu0 %v762
        %v1660 = vpop.f32.mrb[0].mxu0
        %v1661 = vadd.f32 0.0, %v1660
        %v1662 = vpop.f32.mrb[0].mxu0
        %1663 = vmatprep.mubr.f32.mxu0 0.0
        %1664 = vmatmul.mubr.f32.gmra.mrb[0].mxu0 %v765
        %v1665 = vpop.f32.mrb[0].mxu0
        %v1666 = vadd.f32 0.0, %v1665
        %v1667 = vpop.f32.mrb[0].mxu0
        %1668 = vmatprep.mubr.f32.mxu0 0.0
        %1669 = vmatmul.mubr.f32.gmra.mrb[0].mxu0 %v768
        %v1670 = vpop.f32.mrb[0].mxu0
        %v1671 = vadd.f32 0.0, %v1670
        %v1672 = vpop.f32.mrb[0].mxu0
        %1673 = vmatprep.mubr.f32.mxu0 0.0
        %1674 = vmatmul.mubr.f32.gmra.mrb[0].mxu0 %v771
        %v1675 = vpop.f32.mrb[0].mxu0
        %v1676 = vadd.f32 0.0, %v1675
        %v1677 = vpop.f32.mrb[0].mxu0
        %1678 = vmatprep.mubr.f32.mxu0 0.0
        %1679 = vmatmul.mubr.f32.gmra.mrb[0].mxu0 %v774
        %v1680 = vpop.f32.mrb[0].mxu0
        %v1681 = vadd.f32 0.0, %v1680
        %v1682 = vpop.f32.mrb[0].mxu0
        %1683 = vmatprep.mubr.f32.mxu0 0.0
        %1684 = vmatmul.mubr.f32.gmra.mrb[0].mxu0 %v777
        %v1685 = vpop.f32.mrb[0].mxu0
        %v1686 = vadd.f32 0.0, %v1685
        %v1687 = vpop.f32.mrb[0].mxu0
        %1688 = vmatprep.mubr.f32.mxu0 0.0
        %1689 = vmatmul.mubr.f32.gmra.mrb[0].mxu0 %v780
        %v1690 = vpop.f32.mrb[0].mxu0
        %v1691 = vadd.f32 0.0, %v1690
        %v1692 = vpop.f32.mrb[0].mxu0
        %1693 = vmatprep.mubr.f32.mxu0 0.0
        %1694 = vmatmul.mubr.f32.gmra.mrb[0].mxu0 %v783
        %v1695 = vpop.f32.mrb[0].mxu0
        %v1696 = vadd.f32 0.0, %v1695
        %v1697 = vpop.f32.mrb[0].mxu0
        %1698 = vmatprep.mubr.f32.mxu0 0.0
        %1699 = vmatmul.mubr.f32.gmra.mrb[0].mxu0 %v786
        %v1700 = vpop.f32.mrb[0].mxu0
        %v1701 = vadd.f32 0.0, %v1700
        %v1702 = vpop.f32.mrb[0].mxu0
        %1703 = vmatprep.mubr.f32.mxu0 0.0
        %1704 = vmatmul.mubr.f32.gmra.mrb[0].mxu0 %v789
        %v1705 = vpop.f32.mrb[0].mxu0
        %v1706 = vadd.f32 0.0, %v1705
        %v1707 = vpop.f32.mrb[0].mxu0
        %1708 = vmatprep.mubr.f32.mxu0 0.0
        %1709 = vmatmul.mubr.f32.gmra.mrb[0].mxu0 %v792
        %v1710 = vpop.f32.mrb[0].mxu0
        %v1711 = vadd.f32 0.0, %v1710
        %v1712 = vpop.f32.mrb[0].mxu0
        %1713 = vmatprep.mubr.f32.mxu0 0.0
        %1714 = vmatmul.mubr.f32.gmra.mrb[0].mxu0 %v795
        %v1715 = vpop.f32.mrb[0].mxu0
        %v1716 = vadd.f32 0.0, %v1715
        %v1717 = vpop.f32.mrb[0].mxu0
        %1718 = vmatprep.mubr.f32.mxu0 0.0
        %1719 = vmatmul.mubr.f32.gmra.mrb[0].mxu0 %v798
        %v1720 = vpop.f32.mrb[0].mxu0
        %v1721 = vadd.f32 0.0, %v1720
        %v1722 = vpop.f32.mrb[0].mxu0
        %1723 = vmatprep.mubr.f32.mxu0 0.0
        %1724 = vmatmul.mubr.f32.gmra.mrb[0].mxu0 %v801
        %v1725 = vpop.f32.mrb[0].mxu0
        %v1726 = vadd.f32 0.0, %v1725
        %v1727 = vpop.f32.mrb[0].mxu0
        %1728 = vmatprep.mubr.f32.mxu0 0.0
        %1729 = vmatmul.mubr.f32.gmra.mrb[0].mxu0 %v804
        %v1730 = vpop.f32.mrb[0].mxu0
        %v1731 = vadd.f32 0.0, %v1730
        %v1732 = vpop.f32.mrb[0].mxu0
        %1733 = vmatprep.mubr.f32.mxu0 0.0
        %1734 = vmatmul.mubr.f32.gmra.mrb[0].mxu0 %v807
        %v1735 = vpop.f32.mrb[0].mxu0
        %v1736 = vadd.f32 0.0, %v1735
        %v1737 = vpop.f32.mrb[0].mxu0
        %1738 = vmatprep.mubr.f32.mxu0 0.0
        %1739 = vmatmul.mubr.f32.gmra.mrb[0].mxu0 %v810
        %v1740 = vpop.f32.mrb[0].mxu0
        %v1741 = vadd.f32 0.0, %v1740
        %v1742 = vpop.f32.mrb[0].mxu0
        %1743 = vmatprep.mubr.f32.mxu0 0.0
        %1744 = vmatmul.mubr.f32.gmra.mrb[0].mxu0 %v813
        %v1745 = vpop.f32.mrb[0].mxu0
        %v1746 = vadd.f32 0.0, %v1745
        %v1747 = vpop.f32.mrb[0].mxu0
        %1748 = vmatprep.mubr.f32.mxu0 0.0
        %1749 = vmatmul.mubr.f32.gmra.mrb[0].mxu0 %v816
        %v1750 = vpop.f32.mrb[0].mxu0
        %v1751 = vadd.f32 0.0, %v1750
        %v1752 = vpop.f32.mrb[0].mxu0
        %1753 = vmatprep.mubr.f32.mxu0 0.0
        %1754 = vmatmul.mubr.f32.gmra.mrb[0].mxu0 %v819
        %v1755 = vpop.f32.mrb[0].mxu0
        %v1756 = vadd.f32 0.0, %v1755
        %v1757 = vpop.f32.mrb[0].mxu0
        %1758 = vmatprep.mubr.f32.mxu0 0.0
        %1759 = vmatmul.mubr.f32.gmra.mrb[0].mxu0 %v822
        %v1760 = vpop.f32.mrb[0].mxu0
        %v1761 = vadd.f32 0.0, %v1760
        %v1762 = vpop.f32.mrb[0].mxu0
        %1763 = vmatprep.mubr.f32.mxu0 0.0
        %1764 = vmatmul.mubr.f32.gmra.mrb[0].mxu0 %v825
        %v1765 = vpop.f32.mrb[0].mxu0
        %v1766 = vadd.f32 0.0, %v1765
        %v1767 = vpop.f32.mrb[0].mxu0
        %1768 = vmatprep.mubr.f32.mxu0 0.0
        %1769 = vmatmul.mubr.f32.gmra.mrb[0].mxu0 %v828
        %v1770 = vpop.f32.mrb[0].mxu0
        %v1771 = vadd.f32 0.0, %v1770
        %v1772 = vpop.f32.mrb[0].mxu0
        %1773 = vmatprep.mubr.f32.mxu0 0.0
        %1774 = vmatmul.mubr.f32.gmra.mrb[0].mxu0 %v831
        %v1775 = vpop.f32.mrb[0].mxu0
        %v1776 = vadd.f32 0.0, %v1775
        %v1777 = vpop.f32.mrb[0].mxu0
        %1778 = vmatprep.mubr.f32.mxu0 0.0
        %1779 = vmatmul.mubr.f32.gmra.mrb[0].mxu0 %v834
        %v1780 = vpop.f32.mrb[0].mxu0
        %v1781 = vadd.f32 0.0, %v1780
        %v1782 = vpop.f32.mrb[0].mxu0
        %1783 = vmatprep.mubr.f32.mxu0 0.0
        %1784 = vmatmul.mubr.f32.gmra.mrb[0].mxu0 %v837
        %v1785 = vpop.f32.mrb[0].mxu0
        %v1786 = vadd.f32 0.0, %v1785
        %v1787 = vpop.f32.mrb[0].mxu0
        %1788 = vmatprep.mubr.f32.mxu0 0.0
        %1789 = vmatmul.mubr.f32.gmra.mrb[0].mxu0 %v840
        %v1790 = vpop.f32.mrb[0].mxu0
        %v1791 = vadd.f32 0.0, %v1790
        %v1792 = vpop.f32.mrb[0].mxu0
        %1793 = vmatprep.mubr.f32.mxu0 0.0
        %1794 = vmatmul.mubr.f32.gmra.mrb[0].mxu0 %v843
        %v1795 = vpop.f32.mrb[0].mxu0
        %v1796 = vadd.f32 0.0, %v1795
        %v1797 = vpop.f32.mrb[0].mxu0
        %1798 = vmatprep.mubr.f32.mxu0 0.0
        %1799 = vmatmul.mubr.f32.gmra.mrb[0].mxu0 %v846
        %v1800 = vpop.f32.mrb[0].mxu0
        %v1801 = vadd.f32 0.0, %v1800
        %v1802 = vpop.f32.mrb[0].mxu0
        %1803 = vmatprep.mubr.f32.mxu0 0.0
        %1804 = vmatmul.mubr.f32.gmra.mrb[0].mxu0 %v849
        %v1805 = vpop.f32.mrb[0].mxu0
        %v1806 = vadd.f32 0.0, %v1805
        %v1807 = vpop.f32.mrb[0].mxu0
        %1808 = vmatprep.mubr.f32.mxu0 0.0
        %1809 = vmatmul.mubr.f32.gmra.mrb[0].mxu0 %v852
        %v1810 = vpop.f32.mrb[0].mxu0
        %v1811 = vadd.f32 0.0, %v1810
        %v1812 = vpop.f32.mrb[0].mxu0
        %1813 = vmatprep.mubr.f32.mxu0 0.0
        %1814 = vmatmul.mubr.f32.gmra.mrb[0].mxu0 %v855
        %v1815 = vpop.f32.mrb[0].mxu0
        %v1816 = vadd.f32 0.0, %v1815
        %v1817 = vpop.f32.mrb[0].mxu0
        %1818 = vmatprep.mubr.f32.mxu0 0.0
        %1819 = vmatmul.mubr.f32.gmra.mrb[0].mxu0 %v858
        %v1820 = vpop.f32.mrb[0].mxu0
        %v1821 = vadd.f32 0.0, %v1820
        %v1822 = vpop.f32.mrb[0].mxu0
        %1823 = vmatprep.mubr.f32.mxu0 0.0
        %1824 = vmatmul.mubr.f32.gmra.mrb[0].mxu0 %v861
        %v1825 = vpop.f32.mrb[0].mxu0
        %v1826 = vadd.f32 0.0, %v1825
        %v1827 = vpop.f32.mrb[0].mxu0
        %1828 = vmatprep.mubr.f32.mxu0 0.0
        %1829 = vmatmul.mubr.f32.gmra.mrb[0].mxu0 %v864
        %v1830 = vpop.f32.mrb[0].mxu0
        %v1831 = vadd.f32 0.0, %v1830
        %v1832 = vpop.f32.mrb[0].mxu0
        %1833 = vmatprep.mubr.f32.mxu0 0.0
        %1834 = vmatmul.mubr.f32.gmra.mrb[0].mxu0 %v867
        %v1835 = vpop.f32.mrb[0].mxu0
        %v1836 = vadd.f32 0.0, %v1835
        %v1837 = vpop.f32.mrb[0].mxu0
        %1838 = vmatprep.mubr.f32.mxu0 0.0
        %1839 = vmatmul.mubr.f32.gmra.mrb[0].mxu0 %v870
        %v1840 = vpop.f32.mrb[0].mxu0
        %v1841 = vadd.f32 0.0, %v1840
        %v1842 = vpop.f32.mrb[0].mxu0
        %1843 = vmatprep.mubr.f32.mxu0 0.0
        %1844 = vmatmul.mubr.f32.gmra.mrb[0].mxu0 %v873
        %v1845 = vpop.f32.mrb[0].mxu0
        %v1846 = vadd.f32 0.0, %v1845
        %v1847 = vpop.f32.mrb[0].mxu0
        %1848 = vmatprep.mubr.f32.mxu0 0.0
        %1849 = vmatmul.mubr.f32.gmra.mrb[0].mxu0 %v876
        %v1850 = vpop.f32.mrb[0].mxu0
        %v1851 = vadd.f32 0.0, %v1850
        %v1852 = vpop.f32.mrb[0].mxu0
        %1853 = vmatprep.mubr.f32.mxu0 0.0
        %1854 = vmatmul.mubr.f32.gmra.mrb[0].mxu0 %v879
        %v1855 = vpop.f32.mrb[0].mxu0
        %v1856 = vadd.f32 0.0, %v1855
        %v1857 = vpop.f32.mrb[0].mxu0
        %1858 = vmatprep.mubr.f32.mxu0 0.0
        %1859 = vmatmul.mubr.f32.gmra.mrb[0].mxu0 %v882
        %v1860 = vpop.f32.mrb[0].mxu0
        %v1861 = vadd.f32 0.0, %v1860
        %v1862 = vpop.f32.mrb[0].mxu0
        %1863 = vmatprep.mubr.f32.mxu0 0.0
        %1864 = vmatmul.mubr.f32.gmra.mrb[0].mxu0 %v885
        %v1865 = vpop.f32.mrb[0].mxu0
        %v1866 = vadd.f32 0.0, %v1865
        %v1867 = vpop.f32.mrb[0].mxu0
        %1868 = vmatprep.mubr.f32.mxu0 0.0
        %1869 = vmatmul.mubr.f32.gmra.mrb[0].mxu0 %v888
        %v1870 = vpop.f32.mrb[0].mxu0
        %v1871 = vadd.f32 0.0, %v1870
        %v1872 = vpop.f32.mrb[0].mxu0
        %1873 = vmatprep.mubr.f32.mxu0 0.0
        %1874 = vmatmul.mubr.f32.gmra.mrb[0].mxu0 %v891
        %v1875 = vpop.f32.mrb[0].mxu0
        %v1876 = vadd.f32 0.0, %v1875
        %v1877 = vpop.f32.mrb[0].mxu0
        %1878 = vmatprep.mubr.f32.mxu0 0.0
        %1879 = vmatmul.mubr.f32.gmra.mrb[0].mxu0 %v894
        %v1880 = vpop.f32.mrb[0].mxu0
        %v1881 = vadd.f32 0.0, %v1880
        %v1882 = vpop.f32.mrb[0].mxu0
        %1883 = vmatprep.mubr.f32.mxu0 0.0
        %1884 = vmatmul.mubr.f32.gmra.mrb[0].mxu0 %v897
        %v1885 = vpop.f32.mrb[0].mxu0
        %v1886 = vadd.f32 0.0, %v1885
        %v1887 = vpop.f32.mrb[0].mxu0
        %1888 = vmatprep.mubr.f32.mxu0 0.0
        %1889 = vmatmul.mubr.f32.gmra.mrb[0].mxu0 %v900
        %v1890 = vpop.f32.mrb[0].mxu0
        %v1891 = vadd.f32 0.0, %v1890
        %v1892 = vpop.f32.mrb[0].mxu0
        %1893 = vmatprep.mubr.f32.mxu0 0.0
        %1894 = vmatmul.mubr.f32.gmra.mrb[0].mxu0 %v903
        %v1895 = vpop.f32.mrb[0].mxu0
        %v1896 = vadd.f32 0.0, %v1895
        %v1897 = vpop.f32.mrb[0].mxu0
        %1898 = vmatprep.mubr.f32.mxu0 0.0
        %1899 = vmatmul.mubr.f32.gmra.mrb[0].mxu0 %v906
        %v1900 = vpop.f32.mrb[0].mxu0
        %v1901 = vadd.f32 0.0, %v1900
        %v1902 = vpop.f32.mrb[0].mxu0
        %1903 = vmatprep.mubr.f32.mxu0 0.0
        %1904 = vmatmul.mubr.f32.gmra.mrb[0].mxu0 %v909
        %v1905 = vpop.f32.mrb[0].mxu0
        %v1906 = vadd.f32 0.0, %v1905
        %v1907 = vpop.f32.mrb[0].mxu0
        %1908 = vmatprep.mubr.f32.mxu0 0.0
        %1909 = vmatmul.mubr.f32.gmra.mrb[0].mxu0 %v912
        %v1910 = vpop.f32.mrb[0].mxu0
        %v1911 = vadd.f32 0.0, %v1910
        %v1912 = vpop.f32.mrb[0].mxu0
        %1913 = vmatprep.mubr.f32.mxu0 0.0
        %1914 = vmatmul.mubr.f32.gmra.mrb[0].mxu0 %v915
        %v1915 = vpop.f32.mrb[0].mxu0
        %v1916 = vadd.f32 0.0, %v1915
        %v1917 = vpop.f32.mrb[0].mxu0
        %1918 = vmatprep.mubr.f32.mxu0 0.0
        %1919 = vmatmul.mubr.f32.gmra.mrb[0].mxu0 %v918
        %v1920 = vpop.f32.mrb[0].mxu0
        %v1921 = vadd.f32 0.0, %v1920
        %v1922 = vpop.f32.mrb[0].mxu0
        %1923 = vmatprep.mubr.f32.mxu0 0.0
        %1924 = vmatmul.mubr.f32.gmra.mrb[0].mxu0 %v921
        %v1925 = vpop.f32.mrb[0].mxu0
        %v1926 = vadd.f32 0.0, %v1925
        %v1927 = vpop.f32.mrb[0].mxu0
        %1928 = vmatprep.mubr.f32.mxu0 0.0
        %1929 = vmatmul.mubr.f32.gmra.mrb[0].mxu0 %v924
        %v1930 = vpop.f32.mrb[0].mxu0
        %v1931 = vadd.f32 0.0, %v1930
        %v1932 = vpop.f32.mrb[0].mxu0
        %1933 = vmatprep.mubr.f32.mxu0 0.0
        %1934 = vmatmul.mubr.f32.gmra.mrb[0].mxu0 %v927
        %v1935 = vpop.f32.mrb[0].mxu0
        %v1936 = vadd.f32 0.0, %v1935
        %v1937 = vpop.f32.mrb[0].mxu0
        %1938 = vmatprep.mubr.f32.mxu0 0.0
        %1939 = vmatmul.mubr.f32.gmra.mrb[0].mxu0 %v930
        %v1940 = vpop.f32.mrb[0].mxu0
        %v1941 = vadd.f32 0.0, %v1940
        %v1942 = vpop.f32.mrb[0].mxu0
        %1943 = vmatprep.mubr.f32.mxu0 0.0
        %1944 = vmatmul.mubr.f32.gmra.mrb[0].mxu0 %v933
        %v1945 = vpop.f32.mrb[0].mxu0
        %v1946 = vadd.f32 0.0, %v1945
        %v1947 = vpop.f32.mrb[0].mxu0
        %1948 = vmatprep.mubr.f32.mxu0 0.0
        %1949 = vmatmul.mubr.f32.gmra.mrb[0].mxu0 %v936
        %v1950 = vpop.f32.mrb[0].mxu0
        %v1951 = vadd.f32 0.0, %v1950
        %v1952 = vpop.f32.mrb[0].mxu0
        %1953 = vmatprep.mubr.f32.mxu0 0.0
        %1954 = vmatmul.mubr.f32.gmra.mrb[0].mxu0 %v939
        %v1955 = vpop.f32.mrb[0].mxu0
        %v1956 = vadd.f32 0.0, %v1955
        %v1957 = vpop.f32.mrb[0].mxu0
        %1958 = vmatprep.mubr.f32.mxu0 0.0
        %1959 = vmatmul.mubr.f32.gmra.mrb[0].mxu0 %v942
        %v1960 = vpop.f32.mrb[0].mxu0
        %v1961 = vadd.f32 0.0, %v1960
        %v1962 = vpop.f32.mrb[0].mxu0
        %1963 = vmatprep.mubr.f32.mxu0 0.0
        %1964 = vmatmul.mubr.f32.gmra.mrb[0].mxu0 %v945
        %v1965 = vpop.f32.mrb[0].mxu0
        %v1966 = vadd.f32 0.0, %v1965
        %v1967 = vpop.f32.mrb[0].mxu0
        %1968 = vmatprep.mubr.f32.mxu0 0.0
        %1969 = vmatmul.mubr.f32.gmra.mrb[0].mxu0 %v948
        %v1970 = vpop.f32.mrb[0].mxu0
        %v1971 = vadd.f32 0.0, %v1970
        %v1972 = vpop.f32.mrb[0].mxu0
        %1973 = vmatprep.mubr.f32.mxu0 0.0
        %1974 = vmatmul.mubr.f32.gmra.mrb[0].mxu0 %v951
        %v1975 = vpop.f32.mrb[0].mxu0
        %v1976 = vadd.f32 0.0, %v1975
        %v1977 = vpop.f32.mrb[0].mxu0
        %1978 = vmatprep.mubr.f32.mxu0 0.0
        %1979 = vmatmul.mubr.f32.gmra.mrb[0].mxu0 %v954
        %v1980 = vpop.f32.mrb[0].mxu0
        %v1981 = vadd.f32 0.0, %v1980
        %v1982 = vpop.f32.mrb[0].mxu0
        %1983 = vmatprep.mubr.f32.mxu0 0.0
        %1984 = vmatmul.mubr.f32.gmra.mrb[0].mxu0 %v957
        %v1985 = vpop.f32.mrb[0].mxu0
        %v1986 = vadd.f32 0.0, %v1985
        %v1987 = vpop.f32.mrb[0].mxu0
        %1988 = vmatprep.mubr.f32.mxu0 0.0
        %1989 = vmatmul.mubr.f32.gmra.mrb[0].mxu0 %v960
        %v1990 = vpop.f32.mrb[0].mxu0
        %v1991 = vadd.f32 0.0, %v1990
        %v1992 = vpop.f32.mrb[0].mxu0
        %1993 = vmatprep.mubr.f32.mxu0 0.0
        %1994 = vmatmul.mubr.f32.gmra.mrb[0].mxu0 %v963
        %v1995 = vpop.f32.mrb[0].mxu0
        %v1996 = vadd.f32 0.0, %v1995
        %v1997 = vpop.f32.mrb[0].mxu0
        %1998 = vmatprep.mubr.f32.mxu0 0.0
        %1999 = vmatmul.mubr.f32.gmra.mrb[0].mxu0 %v966
        %v2000 = vpop.f32.mrb[0].mxu0
        %v2001 = vadd.f32 0.0, %v2000
        %v2002 = vpop.f32.mrb[0].mxu0
        %2003 = vmatprep.mubr.f32.mxu0 0.0
        %2004 = vmatmul.mubr.f32.gmra.mrb[0].mxu0 %v969
        %v2005 = vpop.f32.mrb[0].mxu0
        %v2006 = vadd.f32 0.0, %v2005
        %v2007 = vpop.f32.mrb[0].mxu0
        %2008 = vmatprep.mubr.f32.mxu0 0.0
        %2009 = vmatmul.mubr.f32.gmra.mrb[0].mxu0 %v972
        %v2010 = vpop.f32.mrb[0].mxu0
        %v2011 = vadd.f32 0.0, %v2010
        %v2012 = vpop.f32.mrb[0].mxu0
        %2013 = vmatprep.mubr.f32.mxu0 0.0
        %2014 = vmatmul.mubr.f32.gmra.mrb[0].mxu0 %v975
        %v2015 = vpop.f32.mrb[0].mxu0
        %v2016 = vadd.f32 0.0, %v2015
        %v2017 = vpop.f32.mrb[0].mxu0
        %2018 = vmatprep.mubr.f32.mxu0 0.0
        %2019 = vmatmul.mubr.f32.gmra.mrb[0].mxu0 %v978
        %v2020 = vpop.f32.mrb[0].mxu0
        %v2021 = vadd.f32 0.0, %v2020
        %v2022 = vpop.f32.mrb[0].mxu0
        %2023 = vmatprep.mubr.f32.mxu0 0.0
        %2024 = vmatmul.mubr.f32.gmra.mrb[0].mxu0 %v981
        %v2025 = vpop.f32.mrb[0].mxu0
        %v2026 = vadd.f32 0.0, %v2025
        %v2027 = vpop.f32.mrb[0].mxu0
        %2028 = vmatprep.mubr.f32.mxu0 0.0
        %2029 = vmatmul.mubr.f32.gmra.mrb[0].mxu0 %v984
        %v2030 = vpop.f32.mrb[0].mxu0
        %v2031 = vadd.f32 0.0, %v2030
        %v2032 = vpop.f32.mrb[0].mxu0
        %2033 = vmatprep.mubr.f32.mxu0 0.0
        %2034 = vmatmul.mubr.f32.gmra.mrb[0].mxu0 %v987
        %v2035 = vpop.f32.mrb[0].mxu0
        %v2036 = vadd.f32 0.0, %v2035
        %v2037 = vpop.f32.mrb[0].mxu0
        %2038 = vmatprep.mubr.f32.mxu0 0.0
        %2039 = vmatmul.mubr.f32.gmra.mrb[0].mxu0 %v990
        %v2040 = vpop.f32.mrb[0].mxu0
        %v2041 = vadd.f32 0.0, %v2040
        %v2042 = vpop.f32.mrb[0].mxu0
        %2043 = vmatprep.mubr.f32.mxu0 0.0
        %2044 = vmatmul.mubr.f32.gmra.mrb[0].mxu0 %v993
        %v2045 = vpop.f32.mrb[0].mxu0
        %v2046 = vadd.f32 0.0, %v2045
        %v2047 = vpop.f32.mrb[0].mxu0
        %2048 = vmatprep.mubr.f32.mxu0 0.0
        %2049 = vmatmul.mubr.f32.gmra.mrb[0].mxu0 %v996
        %v2050 = vpop.f32.mrb[0].mxu0
        %v2051 = vadd.f32 0.0, %v2050
        %v2052 = vpop.f32.mrb[0].mxu0
        %2053 = vmatprep.mubr.f32.mxu0 0.0
        %2054 = vmatmul.mubr.f32.gmra.mrb[0].mxu0 %v999
        %v2055 = vpop.f32.mrb[0].mxu0
        %v2056 = vadd.f32 0.0, %v2055
        %v2057 = vpop.f32.mrb[0].mxu0
        %2058 = vmatprep.mubr.f32.mxu0 0.0
        %2059 = vmatmul.mubr.f32.gmra.mrb[0].mxu0 %v1002
        %v2060 = vpop.f32.mrb[0].mxu0
        %v2061 = vadd.f32 0.0, %v2060
        %v2062 = vpop.f32.mrb[0].mxu0
        %2063 = vmatprep.mubr.f32.mxu0 0.0
        %2064 = vmatmul.mubr.f32.gmra.mrb[0].mxu0 %v1005
        %v2065 = vpop.f32.mrb[0].mxu0
        %v2066 = vadd.f32 0.0, %v2065
        %v2067 = vpop.f32.mrb[0].mxu0
        %2068 = vmatprep.mubr.f32.mxu0 0.0
        %2069 = vmatmul.mubr.f32.gmra.mrb[0].mxu0 %v1008
        %v2070 = vpop.f32.mrb[0].mxu0
        %v2071 = vadd.f32 0.0, %v2070
        %v2072 = vpop.f32.mrb[0].mxu0
        %2073 = vmatprep.mubr.f32.mxu0 0.0
        %2074 = vmatmul.mubr.f32.gmra.mrb[0].mxu0 %v1011
        %v2075 = vpop.f32.mrb[0].mxu0
        %v2076 = vadd.f32 0.0, %v2075
        %v2077 = vpop.f32.mrb[0].mxu0
        %2078 = vmatprep.mubr.f32.mxu0 0.0
        %2079 = vmatmul.mubr.f32.gmra.mrb[0].mxu0 %v1014
        %v2080 = vpop.f32.mrb[0].mxu0
        %v2081 = vadd.f32 0.0, %v2080
        %v2082 = vpop.f32.mrb[0].mxu0
        %2083 = vmatprep.mubr.f32.mxu0 0.0
        %2084 = vmatmul.mubr.f32.gmra.mrb[0].mxu0 %v1017
        %v2085 = vpop.f32.mrb[0].mxu0
        %v2086 = vadd.f32 0.0, %v2085
        %v2087 = vpop.f32.mrb[0].mxu0
        %2088 = vmatprep.mubr.f32.mxu0 0.0
        %2089 = vmatmul.mubr.f32.gmra.mrb[0].mxu0 %v1020
        %v2090 = vpop.f32.mrb[0].mxu0
        %v2091 = vadd.f32 0.0, %v2090
        %v2092 = vpop.f32.mrb[0].mxu0
        %2093 = vmatprep.mubr.f32.mxu0 0.0
        %2094 = vmatmul.mubr.f32.gmra.mrb[0].mxu0 %v1023
        %v2095 = vpop.f32.mrb[0].mxu0
        %v2096 = vadd.f32 0.0, %v2095
        %v2097 = vpop.f32.mrb[0].mxu0
        %2098 = vmatprep.mubr.f32.mxu0 0.0
        %2099 = vmatmul.mubr.f32.gmra.mrb[0].mxu0 %v1026
        %v2100 = vpop.f32.mrb[0].mxu0
        %v2101 = vadd.f32 0.0, %v2100
        %v2102 = vpop.f32.mrb[0].mxu0
        %2103 = vmatprep.mubr.f32.mxu0 0.0
        %2104 = vmatmul.mubr.f32.gmra.mrb[0].mxu0 %v1029
        %v2105 = vpop.f32.mrb[0].mxu0
        %v2106 = vadd.f32 0.0, %v2105
        %v2107 = vpop.f32.mrb[0].mxu0
        %2108 = vmatprep.mubr.f32.mxu0 0.0
        %2109 = vmatmul.mubr.f32.gmra.mrb[0].mxu0 %v1032
        %v2110 = vpop.f32.mrb[0].mxu0
        %v2111 = vadd.f32 0.0, %v2110
        %v2112 = vpop.f32.mrb[0].mxu0
        %2113 = vmatprep.mubr.f32.mxu0 0.0
        %2114 = vmatmul.mubr.f32.gmra.mrb[0].mxu0 %v1035
        %v2115 = vpop.f32.mrb[0].mxu0
        %v2116 = vadd.f32 0.0, %v2115
        %v2117 = vpop.f32.mrb[0].mxu0
        %2118 = vmatprep.mubr.f32.mxu0 0.0
        %2119 = vmatmul.mubr.f32.gmra.mrb[0].mxu0 %v1038
        %v2120 = vpop.f32.mrb[0].mxu0
        %v2121 = vadd.f32 0.0, %v2120
        %v2122 = vpop.f32.mrb[0].mxu0
        %2123 = vmatprep.mubr.f32.mxu0 0.0
        %2124 = vmatmul.mubr.f32.gmra.mrb[0].mxu0 %v1041
        %v2125 = vpop.f32.mrb[0].mxu0
        %v2126 = vadd.f32 0.0, %v2125
        %v2127 = vpop.f32.mrb[0].mxu0
        %2128 = vmatprep.mubr.f32.mxu0 0.0
        %2129 = vmatmul.mubr.f32.gmra.mrb[0].mxu0 %v1044
        %v2130 = vpop.f32.mrb[0].mxu0
        %v2131 = vadd.f32 0.0, %v2130
        %v2132 = vpop.f32.mrb[0].mxu0
        %2133 = vmatprep.mubr.f32.mxu0 0.0
        %2134 = vmatmul.mubr.f32.gmra.mrb[0].mxu0 %v1047
        %v2135 = vpop.f32.mrb[0].mxu0
        %v2136 = vadd.f32 0.0, %v2135
        %v2137 = vpop.f32.mrb[0].mxu0
        %2138 = vmatprep.mubr.f32.mxu0 0.0
        %2139 = vmatmul.mubr.f32.gmra.mrb[0].mxu0 %v1050
        %v2140 = vpop.f32.mrb[0].mxu0
        %v2141 = vadd.f32 0.0, %v2140
        %v2142 = vpop.f32.mrb[0].mxu0
        %2143 = vmatprep.mubr.f32.mxu0 0.0
        %2144 = vmatmul.mubr.f32.gmra.mrb[0].mxu0 %v1053
        %v2145 = vpop.f32.mrb[0].mxu0
        %v2146 = vadd.f32 0.0, %v2145
        %v2147 = vpop.f32.mrb[0].mxu0
        %2148 = vmatprep.mubr.f32.mxu0 0.0
        %2149 = vmatmul.mubr.f32.gmra.mrb[0].mxu0 %v1056
        %v2150 = vpop.f32.mrb[0].mxu0
        %v2151 = vadd.f32 0.0, %v2150
        %v2152 = vpop.f32.mrb[0].mxu0
        %2153 = vmatprep.mubr.f32.mxu0 0.0
        %2154 = vmatmul.mubr.f32.gmra.mrb[0].mxu0 %v1059
        %v2155 = vpop.f32.mrb[0].mxu0
        %v2156 = vadd.f32 0.0, %v2155
        %v2157 = vpop.f32.mrb[0].mxu0
        %2158 = vmatprep.mubr.f32.mxu0 0.0
        %2159 = vmatmul.mubr.f32.gmra.mrb[0].mxu0 %v1062
        %v2160 = vpop.f32.mrb[0].mxu0
        %v2161 = vadd.f32 0.0, %v2160
        %v2162 = vpop.f32.mrb[0].mxu0
        %2163 = vmatprep.mubr.f32.mxu0 0.0
        %2164 = vmatmul.mubr.f32.gmra.mrb[0].mxu0 %v1065
        %v2165 = vpop.f32.mrb[0].mxu0
        %v2166 = vadd.f32 0.0, %v2165
        %v2167 = vpop.f32.mrb[0].mxu0
        %2168 = vmatprep.mubr.f32.mxu0 0.0
        %2169 = vmatmul.mubr.f32.gmra.mrb[0].mxu0 %v1068
        %v2170 = vpop.f32.mrb[0].mxu0
        %v2171 = vadd.f32 0.0, %v2170
        %v2172 = vpop.f32.mrb[0].mxu0
        %2173 = vmatprep.mubr.f32.mxu0 0.0
        %2174 = vmatmul.mubr.f32.gmra.mrb[0].mxu0 %v1071
        %v2175 = vpop.f32.mrb[0].mxu0
        %v2176 = vadd.f32 0.0, %v2175
        %v2177 = vpop.f32.mrb[0].mxu0
        %2178 = vmatprep.mubr.f32.mxu0 0.0
        %2179 = vmatmul.mubr.f32.gmra.mrb[0].mxu0 %v1074
        %v2180 = vpop.f32.mrb[0].mxu0
        %v2181 = vadd.f32 0.0, %v2180
        %v2182 = vpop.f32.mrb[0].mxu0
        %2183 = vmatprep.mubr.f32.mxu0 0.0
        %2184 = vmatmul.mubr.f32.gmra.mrb[0].mxu0 %v1077
        %v2185 = vpop.f32.mrb[0].mxu0
        %v2186 = vadd.f32 0.0, %v2185
        %v2187 = vpop.f32.mrb[0].mxu0
        %2188 = vmatprep.mubr.f32.mxu0 0.0
        %2189 = vmatmul.mubr.f32.gmra.mrb[0].mxu0 %v1080
        %v2190 = vpop.f32.mrb[0].mxu0
        %v2191 = vadd.f32 0.0, %v2190
        %v2192 = vpop.f32.mrb[0].mxu0
        %2193 = vmatprep.mubr.f32.mxu0 0.0
        %2194 = vmatmul.mubr.f32.gmra.mrb[0].mxu0 %v1083
        %v2195 = vpop.f32.mrb[0].mxu0
        %v2196 = vadd.f32 0.0, %v2195
        %v2197 = vpop.f32.mrb[0].mxu0
        %2198 = vmatprep.mubr.f32.mxu0 0.0
        %2199 = vmatmul.mubr.f32.gmra.mrb[0].mxu0 %v1086
        %v2200 = vpop.f32.mrb[0].mxu0
        %v2201 = vadd.f32 0.0, %v2200
        %v2202 = vpop.f32.mrb[0].mxu0
        %2203 = vmatprep.mubr.f32.mxu0 0.0
        %2204 = vmatmul.mubr.f32.gmra.mrb[0].mxu0 %v1089
        %v2205 = vpop.f32.mrb[0].mxu0
        %v2206 = vadd.f32 0.0, %v2205
        %v2207 = vpop.f32.mrb[0].mxu0
        %2208 = vmatprep.mubr.f32.mxu0 0.0
        %2209 = vmatmul.mubr.f32.gmra.mrb[0].mxu0 %v1092
        %v2210 = vpop.f32.mrb[0].mxu0
        %v2211 = vadd.f32 0.0, %v2210
        %v2212 = vpop.f32.mrb[0].mxu0
        %2213 = vmatprep.mubr.f32.mxu0 0.0
        %2214 = vmatmul.mubr.f32.gmra.mrb[0].mxu0 %v1095
        %v2215 = vpop.f32.mrb[0].mxu0
        %v2216 = vadd.f32 0.0, %v2215
        %v2217 = vpop.f32.mrb[0].mxu0
        %2218 = vmatprep.mubr.f32.mxu0 0.0
        %2219 = vmatmul.mubr.f32.gmra.mrb[0].mxu0 %v1098
        %v2220 = vpop.f32.mrb[0].mxu0
        %v2221 = vadd.f32 0.0, %v2220
        %v2222 = vpop.f32.mrb[0].mxu0
        %2223 = vmatprep.mubr.f32.mxu0 0.0
        %2224 = vmatmul.mubr.f32.gmra.mrb[0].mxu0 %v1101
        %v2225 = vpop.f32.mrb[0].mxu0
        %v2226 = vadd.f32 0.0, %v2225
        %v2227 = vpop.f32.mrb[0].mxu0
        %2228 = vmatprep.mubr.f32.mxu0 0.0
        %2229 = vmatmul.mubr.f32.gmra.mrb[0].mxu0 %v1104
        %v2230 = vpop.f32.mrb[0].mxu0
        %v2231 = vadd.f32 0.0, %v2230
        %v2232 = vpop.f32.mrb[0].mxu0
        %2233 = vmatprep.mubr.f32.mxu0 0.0
        %2234 = vmatmul.mubr.f32.gmra.mrb[0].mxu0 %v1107
        %v2235 = vpop.f32.mrb[0].mxu0
        %v2236 = vadd.f32 0.0, %v2235
        %v2237 = vpop.f32.mrb[0].mxu0
        %2238 = vmatprep.mubr.f32.mxu0 0.0
        %2239 = vmatmul.mubr.f32.gmra.mrb[0].mxu0 %v1110
        %v2240 = vpop.f32.mrb[0].mxu0
        %v2241 = vadd.f32 0.0, %v2240
        %v2242 = vpop.f32.mrb[0].mxu0
        %2243 = vmatprep.mubr.f32.mxu0 0.0
        %2244 = vmatmul.mubr.f32.gmra.mrb[0].mxu0 %v1113
        %v2245 = vpop.f32.mrb[0].mxu0
        %v2246 = vadd.f32 0.0, %v2245
        %v2247 = vpop.f32.mrb[0].mxu0
        %2248 = vmatprep.mubr.f32.mxu0 0.0
        %2249 = vmatmul.mubr.f32.gmra.mrb[0].mxu0 %v1116
        %v2250 = vpop.f32.mrb[0].mxu0
        %v2251 = vadd.f32 0.0, %v2250
        %v2252 = vpop.f32.mrb[0].mxu0
        %2253 = vmatprep.mubr.f32.mxu0 0.0
        %2254 = vmatmul.mubr.f32.gmra.mrb[0].mxu0 %v1119
        %v2255 = vpop.f32.mrb[0].mxu0
        %v2256 = vadd.f32 0.0, %v2255
        %v2257 = vpop.f32.mrb[0].mxu0
        %2258 = vmatprep.mubr.f32.mxu0 0.0
        %2259 = vmatmul.mubr.f32.gmra.mrb[0].mxu0 %v1122
        %v2260 = vpop.f32.mrb[0].mxu0
        %v2261 = vadd.f32 0.0, %v2260
        %v2262 = vpop.f32.mrb[0].mxu0
        %2263 = vmatprep.mubr.f32.mxu0 0.0
        %2264 = vmatmul.mubr.f32.gmra.mrb[0].mxu0 %v1125
        %v2265 = vpop.f32.mrb[0].mxu0
        %v2266 = vadd.f32 0.0, %v2265
        %v2267 = vpop.f32.mrb[0].mxu0
        %2268 = vmatprep.mubr.f32.mxu0 0.0
        %2269 = vmatmul.mubr.f32.gmra.mrb[0].mxu0 %v1128
        %v2270 = vpop.f32.mrb[0].mxu0
        %v2271 = vadd.f32 0.0, %v2270
        %v2272 = vpop.f32.mrb[0].mxu0
        %2273 = vmatprep.mubr.f32.mxu0 0.0
        %2274 = vmatmul.mubr.f32.gmra.mrb[0].mxu0 %v1131
        %v2275 = vpop.f32.mrb[0].mxu0
        %v2276 = vadd.f32 0.0, %v2275
        %v2277 = vpop.f32.mrb[0].mxu0
        %2278 = vmatprep.mubr.f32.mxu0 0.0
        %2279 = vmatmul.mubr.f32.gmra.mrb[0].mxu0 %v1134
        %v2280 = vpop.f32.mrb[0].mxu0
        %v2281 = vadd.f32 0.0, %v2280
        %v2282 = vpop.f32.mrb[0].mxu0
        %2283 = vmatprep.mubr.f32.mxu0 0.0
        %2284 = vmatmul.mubr.f32.gmra.mrb[0].mxu0 %v1137
        %v2285 = vpop.f32.mrb[0].mxu0
        %v2286 = vadd.f32 0.0, %v2285
        %v2287 = vpop.f32.mrb[0].mxu0
        %2288 = vmatprep.mubr.f32.mxu0 0.0
        %2289 = vmatmul.mubr.f32.gmra.mrb[0].mxu0 %v1140
        %v2290 = vpop.f32.mrb[0].mxu0
        %v2291 = vadd.f32 0.0, %v2290
        %v2292 = vpop.f32.mrb[0].mxu0
        %2293 = vmatprep.mubr.f32.mxu0 0.0
        %2294 = vmatmul.mubr.f32.gmra.mrb[0].mxu0 %v1143
        %v2295 = vpop.f32.mrb[0].mxu0
        %v2296 = vadd.f32 0.0, %v2295
        %v2297 = vpop.f32.mrb[0].mxu0
        %2298 = vmatprep.mubr.f32.mxu0 0.0
        %2299 = vmatmul.mubr.f32.gmra.mrb[0].mxu0 %v1146
        %v2300 = vpop.f32.mrb[0].mxu0
        %v2301 = vadd.f32 0.0, %v2300
        %v2302 = vpop.f32.mrb[0].mxu0
        %2303 = vmatprep.mubr.f32.mxu0 0.0
        %2304 = vmatmul.mubr.f32.gmra.mrb[0].mxu0 %v1149
        %v2305 = vpop.f32.mrb[0].mxu0
        %v2306 = vadd.f32 0.0, %v2305
        %v2307 = vpop.f32.mrb[0].mxu0
        %2308 = vmatprep.mubr.f32.mxu0 0.0
        %2309 = vmatmul.mubr.f32.gmra.mrb[0].mxu0 %v1152
        %v2310 = vpop.f32.mrb[0].mxu0
        %v2311 = vadd.f32 0.0, %v2310
        %v2312 = vpop.f32.mrb[0].mxu0
        %2313 = vmatprep.mubr.f32.mxu0 0.0
        %2314 = vmatmul.mubr.f32.gmra.mrb[0].mxu0 %v1155
        %v2315 = vpop.f32.mrb[0].mxu0
        %v2316 = vadd.f32 0.0, %v2315
        %v2317 = vpop.f32.mrb[0].mxu0
        %2318 = vmatprep.mubr.f32.mxu0 0.0
        %2319 = vmatmul.mubr.f32.gmra.mrb[0].mxu0 %v1158
        %v2320 = vpop.f32.mrb[0].mxu0
        %v2321 = vadd.f32 0.0, %v2320
        %v2322 = vpop.f32.mrb[0].mxu0
        %2323 = vmatprep.mubr.f32.mxu0 0.0
        %2324 = vmatmul.mubr.f32.gmra.mrb[0].mxu0 %v1161
        %v2325 = vpop.f32.mrb[0].mxu0
        %v2326 = vadd.f32 0.0, %v2325
        %v2327 = vpop.f32.mrb[0].mxu0
        %2328 = vmatprep.mubr.f32.mxu0 0.0
        %2329 = vmatmul.mubr.f32.gmra.mrb[0].mxu0 %v1164
        %v2330 = vpop.f32.mrb[0].mxu0
        %v2331 = vadd.f32 0.0, %v2330
        %v2332 = vpop.f32.mrb[0].mxu0
        %2333 = vmatprep.mubr.f32.mxu0 0.0
        %2334 = vmatmul.mubr.f32.gmra.mrb[0].mxu0 %v1167
        %v2335 = vpop.f32.mrb[0].mxu0
        %v2336 = vadd.f32 0.0, %v2335
        %v2337 = vpop.f32.mrb[0].mxu0
        %2338 = vmatprep.mubr.f32.mxu0 0.0
        %2339 = vmatmul.mubr.f32.gmra.mrb[0].mxu0 %v1170
        %v2340 = vpop.f32.mrb[0].mxu0
        %v2341 = vadd.f32 0.0, %v2340
        %v2342 = vpop.f32.mrb[0].mxu0
        %2343 = vmatprep.mubr.f32.mxu0 0.0
        %2344 = vmatmul.mubr.f32.gmra.mrb[0].mxu0 %v1173
        %v2345 = vpop.f32.mrb[0].mxu0
        %v2346 = vadd.f32 0.0, %v2345
        %v2347 = vpop.f32.mrb[0].mxu0
        %2348 = vmatprep.mubr.f32.mxu0 0.0
        %2349 = vmatmul.mubr.f32.gmra.mrb[0].mxu0 %v1176
        %v2350 = vpop.f32.mrb[0].mxu0
        %v2351 = vadd.f32 0.0, %v2350
        %v2352 = vpop.f32.mrb[0].mxu0
        %2353 = vmatprep.mubr.f32.mxu0 0.0
        %2354 = vmatmul.mubr.f32.gmra.mrb[0].mxu0 %v1179
        %v2355 = vpop.f32.mrb[0].mxu0
        %v2356 = vadd.f32 0.0, %v2355
        %v2357 = vpop.f32.mrb[0].mxu0
        %2358 = vmatprep.mubr.f32.mxu0 0.0
        %2359 = vmatmul.mubr.f32.gmra.mrb[0].mxu0 %v1182
        %v2360 = vpop.f32.mrb[0].mxu0
        %v2361 = vadd.f32 0.0, %v2360
        %v2362 = vpop.f32.mrb[0].mxu0
        %2363 = vmatprep.mubr.f32.mxu0 0.0
        %2364 = vmatmul.mubr.f32.gmra.mrb[0].mxu0 %v1185
        %v2365 = vpop.f32.mrb[0].mxu0
        %v2366 = vadd.f32 0.0, %v2365
        %v2367 = vpop.f32.mrb[0].mxu0
        %2368 = vmatprep.mubr.f32.mxu0 0.0
        %2369 = vmatmul.mubr.f32.gmra.mrb[0].mxu0 %v1188
        %v2370 = vpop.f32.mrb[0].mxu0
        %v2371 = vadd.f32 0.0, %v2370
        %v2372 = vpop.f32.mrb[0].mxu0
        %2373 = vmatprep.mubr.f32.mxu0 0.0
        %2374 = vmatmul.mubr.f32.gmra.mrb[0].mxu0 %v1191
        %v2375 = vpop.f32.mrb[0].mxu0
        %v2376 = vadd.f32 0.0, %v2375
        %v2377 = vpop.f32.mrb[0].mxu0
        %2378 = vmatprep.mubr.f32.mxu0 0.0
        %2379 = vmatmul.mubr.f32.gmra.mrb[0].mxu0 %v1194
        %v2380 = vpop.f32.mrb[0].mxu0
        %v2381 = vadd.f32 0.0, %v2380
        %v2382 = vpop.f32.mrb[0].mxu0
        %2383 = vmatprep.mubr.f32.mxu0 0.0
        %2384 = vmatmul.mubr.f32.gmra.mrb[0].mxu0 %v1197
        %v2385 = vpop.f32.mrb[0].mxu0
        %v2386 = vadd.f32 0.0, %v2385
        %v2387 = vpop.f32.mrb[0].mxu0
        %2388 = vdwg.mxu0
        %2389 = vst [vmem:[%s259] sm:$0xff] %v1266
        %2390 = vst [vmem:[%s259 + $0x8] sm:$0xff] %v1271
        %2391 = vst [vmem:[%s259 + $0x10] sm:$0xff] %v1276
        %2392 = vst [vmem:[%s259 + $0x18] sm:$0xff] %v1281
        %2393 = vst [vmem:[%s259 + $0x20] sm:$0xff] %v1286
        %2394 = vst [vmem:[%s259 + $0x28] sm:$0xff] %v1291
        %2395 = vst [vmem:[%s259 + $0x30] sm:$0xff] %v1296
        %2396 = vst [vmem:[%s259 + $0x38] sm:$0xff] %v1301
        %2397 = vst [vmem:[%s259 + $0x40] sm:$0xff] %v1306
        %2398 = vst [vmem:[%s259 + $0x48] sm:$0xff] %v1311
        %2399 = vst [vmem:[%s259 + $0x50] sm:$0xff] %v1316
        %2400 = vst [vmem:[%s259 + $0x58] sm:$0xff] %v1321
        %2401 = vst [vmem:[%s259 + $0x60] sm:$0xff] %v1326
        %2402 = vst [vmem:[%s259 + $0x68] sm:$0xff] %v1331
        %2403 = vst [vmem:[%s259 + $0x70] sm:$0xff] %v1336
        %2404 = vst [vmem:[%s259 + $0x78] sm:$0xff] %v1341
        %2405 = vst [vmem:[%s259 + $0x80] sm:$0xff] %v1346
        %2406 = vst [vmem:[%s259 + $0x88] sm:$0xff] %v1351
        %2407 = vst [vmem:[%s259 + $0x90] sm:$0xff] %v1356
        %2408 = vst [vmem:[%s259 + $0x98] sm:$0xff] %v1361
        %2409 = vst [vmem:[%s259 + $0xa0] sm:$0xff] %v1366
        %2410 = vst [vmem:[%s259 + $0xa8] sm:$0xff] %v1371
        %2411 = vst [vmem:[%s259 + $0xb0] sm:$0xff] %v1376
        %2412 = vst [vmem:[%s259 + $0xb8] sm:$0xff] %v1381
        %2413 = vst [vmem:[%s259 + $0xc0] sm:$0xff] %v1386
        %2414 = vst [vmem:[%s259 + $0xc8] sm:$0xff] %v1391
        %2415 = vst [vmem:[%s259 + $0xd0] sm:$0xff] %v1396
        %2416 = vst [vmem:[%s259 + $0xd8] sm:$0xff] %v1401
        %2417 = vst [vmem:[%s259 + $0xe0] sm:$0xff] %v1406
        %2418 = vst [vmem:[%s259 + $0xe8] sm:$0xff] %v1411
        %2419 = vst [vmem:[%s259 + $0xf0] sm:$0xff] %v1416
        %2420 = vst [vmem:[%s259 + $0xf8] sm:$0xff] %v1421
        %2421 = vst [vmem:[%s259 + $0x100] sm:$0xff] %v1426
        %2422 = vst [vmem:[%s259 + $0x108] sm:$0xff] %v1431
        %2423 = vst [vmem:[%s259 + $0x110] sm:$0xff] %v1436
        %2424 = vst [vmem:[%s259 + $0x118] sm:$0xff] %v1441
        %2425 = vst [vmem:[%s259 + $0x120] sm:$0xff] %v1446
        %2426 = vst [vmem:[%s259 + $0x128] sm:$0xff] %v1451
        %2427 = vst [vmem:[%s259 + $0x130] sm:$0xff] %v1456
        %2428 = vst [vmem:[%s259 + $0x138] sm:$0xff] %v1461
        %2429 = vst [vmem:[%s259 + $0x140] sm:$0xff] %v1466
        %2430 = vst [vmem:[%s259 + $0x148] sm:$0xff] %v1471
        %2431 = vst [vmem:[%s259 + $0x150] sm:$0xff] %v1476
        %2432 = vst [vmem:[%s259 + $0x158] sm:$0xff] %v1481
        %2433 = vst [vmem:[%s259 + $0x160] sm:$0xff] %v1486
        %2434 = vst [vmem:[%s259 + $0x168] sm:$0xff] %v1491
        %2435 = vst [vmem:[%s259 + $0x170] sm:$0xff] %v1496
        %2436 = vst [vmem:[%s259 + $0x178] sm:$0xff] %v1501
        %2437 = vst [vmem:[%s259 + $0x180] sm:$0xff] %v1506
        %2438 = vst [vmem:[%s259 + $0x188] sm:$0xff] %v1511
        %2439 = vst [vmem:[%s259 + $0x190] sm:$0xff] %v1516
        %2440 = vst [vmem:[%s259 + $0x198] sm:$0xff] %v1521
        %2441 = vst [vmem:[%s259 + $0x1a0] sm:$0xff] %v1526
        %2442 = vst [vmem:[%s259 + $0x1a8] sm:$0xff] %v1531
        %2443 = vst [vmem:[%s259 + $0x1b0] sm:$0xff] %v1536
        %2444 = vst [vmem:[%s259 + $0x1b8] sm:$0xff] %v1541
        %2445 = vst [vmem:[%s259 + $0x1c0] sm:$0xff] %v1546
        %2446 = vst [vmem:[%s259 + $0x1c8] sm:$0xff] %v1551
        %2447 = vst [vmem:[%s259 + $0x1d0] sm:$0xff] %v1556
        %2448 = vst [vmem:[%s259 + $0x1d8] sm:$0xff] %v1561
        %2449 = vst [vmem:[%s259 + $0x1e0] sm:$0xff] %v1566
        %2450 = vst [vmem:[%s259 + $0x1e8] sm:$0xff] %v1571
        %2451 = vst [vmem:[%s259 + $0x1f0] sm:$0xff] %v1576
        %2452 = vst [vmem:[%s259 + $0x1f8] sm:$0xff] %v1581
        %2453 = vst [vmem:[%s259 + $0x200] sm:$0xff] %v1586
        %2454 = vst [vmem:[%s259 + $0x208] sm:$0xff] %v1591
        %2455 = vst [vmem:[%s259 + $0x210] sm:$0xff] %v1596
        %2456 = vst [vmem:[%s259 + $0x218] sm:$0xff] %v1601
        %2457 = vst [vmem:[%s259 + $0x220] sm:$0xff] %v1606
        %2458 = vst [vmem:[%s259 + $0x228] sm:$0xff] %v1611
        %2459 = vst [vmem:[%s259 + $0x230] sm:$0xff] %v1616
        %2460 = vst [vmem:[%s259 + $0x238] sm:$0xff] %v1621
        %2461 = vst [vmem:[%s259 + $0x240] sm:$0xff] %v1626
        %2462 = vst [vmem:[%s259 + $0x248] sm:$0xff] %v1631
        %2463 = vst [vmem:[%s259 + $0x250] sm:$0xff] %v1636
        %2464 = vst [vmem:[%s259 + $0x258] sm:$0xff] %v1641
        %2465 = vst [vmem:[%s259 + $0x260] sm:$0xff] %v1646
        %2466 = vst [vmem:[%s259 + $0x268] sm:$0xff] %v1651
        %2467 = vst [vmem:[%s259 + $0x270] sm:$0xff] %v1656
        %2468 = vst [vmem:[%s259 + $0x278] sm:$0xff] %v1661
        %2469 = vst [vmem:[%s259 + $0x280] sm:$0xff] %v1666
        %2470 = vst [vmem:[%s259 + $0x288] sm:$0xff] %v1671
        %2471 = vst [vmem:[%s259 + $0x290] sm:$0xff] %v1676
        %2472 = vst [vmem:[%s259 + $0x298] sm:$0xff] %v1681
        %2473 = vst [vmem:[%s259 + $0x2a0] sm:$0xff] %v1686
        %2474 = vst [vmem:[%s259 + $0x2a8] sm:$0xff] %v1691
        %2475 = vst [vmem:[%s259 + $0x2b0] sm:$0xff] %v1696
        %2476 = vst [vmem:[%s259 + $0x2b8] sm:$0xff] %v1701
        %2477 = vst [vmem:[%s259 + $0x2c0] sm:$0xff] %v1706
        %2478 = vst [vmem:[%s259 + $0x2c8] sm:$0xff] %v1711
        %2479 = vst [vmem:[%s259 + $0x2d0] sm:$0xff] %v1716
        %2480 = vst [vmem:[%s259 + $0x2d8] sm:$0xff] %v1721
        %2481 = vst [vmem:[%s259 + $0x2e0] sm:$0xff] %v1726
        %2482 = vst [vmem:[%s259 + $0x2e8] sm:$0xff] %v1731
        %2483 = vst [vmem:[%s259 + $0x2f0] sm:$0xff] %v1736
        %2484 = vst [vmem:[%s259 + $0x2f8] sm:$0xff] %v1741
        %2485 = vst [vmem:[%s259 + $0x300] sm:$0xff] %v1746
        %2486 = vst [vmem:[%s259 + $0x308] sm:$0xff] %v1751
        %2487 = vst [vmem:[%s259 + $0x310] sm:$0xff] %v1756
        %2488 = vst [vmem:[%s259 + $0x318] sm:$0xff] %v1761
        %2489 = vst [vmem:[%s259 + $0x320] sm:$0xff] %v1766
        %2490 = vst [vmem:[%s259 + $0x328] sm:$0xff] %v1771
        %2491 = vst [vmem:[%s259 + $0x330] sm:$0xff] %v1776
        %2492 = vst [vmem:[%s259 + $0x338] sm:$0xff] %v1781
        %2493 = vst [vmem:[%s259 + $0x340] sm:$0xff] %v1786
        %2494 = vst [vmem:[%s259 + $0x348] sm:$0xff] %v1791
        %2495 = vst [vmem:[%s259 + $0x350] sm:$0xff] %v1796
        %2496 = vst [vmem:[%s259 + $0x358] sm:$0xff] %v1801
        %2497 = vst [vmem:[%s259 + $0x360] sm:$0xff] %v1806
        %2498 = vst [vmem:[%s259 + $0x368] sm:$0xff] %v1811
        %2499 = vst [vmem:[%s259 + $0x370] sm:$0xff] %v1816
        %2500 = vst [vmem:[%s259 + $0x378] sm:$0xff] %v1821
        %2501 = vst [vmem:[%s259 + $0x380] sm:$0xff] %v1826
        %2502 = vst [vmem:[%s259 + $0x388] sm:$0xff] %v1831
        %2503 = vst [vmem:[%s259 + $0x390] sm:$0xff] %v1836
        %2504 = vst [vmem:[%s259 + $0x398] sm:$0xff] %v1841
        %2505 = vst [vmem:[%s259 + $0x3a0] sm:$0xff] %v1846
        %2506 = vst [vmem:[%s259 + $0x3a8] sm:$0xff] %v1851
        %2507 = vst [vmem:[%s259 + $0x3b0] sm:$0xff] %v1856
        %2508 = vst [vmem:[%s259 + $0x3b8] sm:$0xff] %v1861
        %2509 = vst [vmem:[%s259 + $0x3c0] sm:$0xff] %v1866
        %2510 = vst [vmem:[%s259 + $0x3c8] sm:$0xff] %v1871
        %2511 = vst [vmem:[%s259 + $0x3d0] sm:$0xff] %v1876
        %2512 = vst [vmem:[%s259 + $0x3d8] sm:$0xff] %v1881
        %2513 = vst [vmem:[%s259 + $0x3e0] sm:$0xff] %v1886
        %2514 = vst [vmem:[%s259 + $0x3e8] sm:$0xff] %v1891
        %2515 = vst [vmem:[%s259 + $0x3f0] sm:$0xff] %v1896
        %2516 = vst [vmem:[%s259 + $0x3f8] sm:$0xff] %v1901
        %2517 = vst [vmem:[%s259 + $0x400] sm:$0xff] %v1906
        %2518 = vst [vmem:[%s259 + $0x408] sm:$0xff] %v1911
        %2519 = vst [vmem:[%s259 + $0x410] sm:$0xff] %v1916
        %2520 = vst [vmem:[%s259 + $0x418] sm:$0xff] %v1921
        %2521 = vst [vmem:[%s259 + $0x420] sm:$0xff] %v1926
        %2522 = vst [vmem:[%s259 + $0x428] sm:$0xff] %v1931
        %2523 = vst [vmem:[%s259 + $0x430] sm:$0xff] %v1936
        %2524 = vst [vmem:[%s259 + $0x438] sm:$0xff] %v1941
        %2525 = vst [vmem:[%s259 + $0x440] sm:$0xff] %v1946
        %2526 = vst [vmem:[%s259 + $0x448] sm:$0xff] %v1951
        %2527 = vst [vmem:[%s259 + $0x450] sm:$0xff] %v1956
        %2528 = vst [vmem:[%s259 + $0x458] sm:$0xff] %v1961
        %2529 = vst [vmem:[%s259 + $0x460] sm:$0xff] %v1966
        %2530 = vst [vmem:[%s259 + $0x468] sm:$0xff] %v1971
        %2531 = vst [vmem:[%s259 + $0x470] sm:$0xff] %v1976
        %2532 = vst [vmem:[%s259 + $0x478] sm:$0xff] %v1981
        %2533 = vst [vmem:[%s259 + $0x480] sm:$0xff] %v1986
        %2534 = vst [vmem:[%s259 + $0x488] sm:$0xff] %v1991
        %2535 = vst [vmem:[%s259 + $0x490] sm:$0xff] %v1996
        %2536 = vst [vmem:[%s259 + $0x498] sm:$0xff] %v2001
        %2537 = vst [vmem:[%s259 + $0x4a0] sm:$0xff] %v2006
        %2538 = vst [vmem:[%s259 + $0x4a8] sm:$0xff] %v2011
        %2539 = vst [vmem:[%s259 + $0x4b0] sm:$0xff] %v2016
        %2540 = vst [vmem:[%s259 + $0x4b8] sm:$0xff] %v2021
        %2541 = vst [vmem:[%s259 + $0x4c0] sm:$0xff] %v2026
        %2542 = vst [vmem:[%s259 + $0x4c8] sm:$0xff] %v2031
        %2543 = vst [vmem:[%s259 + $0x4d0] sm:$0xff] %v2036
        %2544 = vst [vmem:[%s259 + $0x4d8] sm:$0xff] %v2041
        %2545 = vst [vmem:[%s259 + $0x4e0] sm:$0xff] %v2046
        %2546 = vst [vmem:[%s259 + $0x4e8] sm:$0xff] %v2051
        %2547 = vst [vmem:[%s259 + $0x4f0] sm:$0xff] %v2056
        %2548 = vst [vmem:[%s259 + $0x4f8] sm:$0xff] %v2061
        %2549 = vst [vmem:[%s259 + $0x500] sm:$0xff] %v2066
        %2550 = vst [vmem:[%s259 + $0x508] sm:$0xff] %v2071
        %2551 = vst [vmem:[%s259 + $0x510] sm:$0xff] %v2076
        %2552 = vst [vmem:[%s259 + $0x518] sm:$0xff] %v2081
        %2553 = vst [vmem:[%s259 + $0x520] sm:$0xff] %v2086
        %2554 = vst [vmem:[%s259 + $0x528] sm:$0xff] %v2091
        %2555 = vst [vmem:[%s259 + $0x530] sm:$0xff] %v2096
        %2556 = vst [vmem:[%s259 + $0x538] sm:$0xff] %v2101
        %2557 = vst [vmem:[%s259 + $0x540] sm:$0xff] %v2106
        %2558 = vst [vmem:[%s259 + $0x548] sm:$0xff] %v2111
        %2559 = vst [vmem:[%s259 + $0x550] sm:$0xff] %v2116
        %2560 = vst [vmem:[%s259 + $0x558] sm:$0xff] %v2121
        %2561 = vst [vmem:[%s259 + $0x560] sm:$0xff] %v2126
        %2562 = vst [vmem:[%s259 + $0x568] sm:$0xff] %v2131
        %2563 = vst [vmem:[%s259 + $0x570] sm:$0xff] %v2136
        %2564 = vst [vmem:[%s259 + $0x578] sm:$0xff] %v2141
        %2565 = vst [vmem:[%s259 + $0x580] sm:$0xff] %v2146
        %2566 = vst [vmem:[%s259 + $0x588] sm:$0xff] %v2151
        %2567 = vst [vmem:[%s259 + $0x590] sm:$0xff] %v2156
        %2568 = vst [vmem:[%s259 + $0x598] sm:$0xff] %v2161
        %2569 = vst [vmem:[%s259 + $0x5a0] sm:$0xff] %v2166
        %2570 = vst [vmem:[%s259 + $0x5a8] sm:$0xff] %v2171
        %2571 = vst [vmem:[%s259 + $0x5b0] sm:$0xff] %v2176
        %2572 = vst [vmem:[%s259 + $0x5b8] sm:$0xff] %v2181
        %2573 = vst [vmem:[%s259 + $0x5c0] sm:$0xff] %v2186
        %2574 = vst [vmem:[%s259 + $0x5c8] sm:$0xff] %v2191
        %2575 = vst [vmem:[%s259 + $0x5d0] sm:$0xff] %v2196
        %2576 = vst [vmem:[%s259 + $0x5d8] sm:$0xff] %v2201
        %2577 = vst [vmem:[%s259 + $0x5e0] sm:$0xff] %v2206
        %2578 = vst [vmem:[%s259 + $0x5e8] sm:$0xff] %v2211
        %2579 = vst [vmem:[%s259 + $0x5f0] sm:$0xff] %v2216
        %2580 = vst [vmem:[%s259 + $0x5f8] sm:$0xff] %v2221
        %2581 = vst [vmem:[%s259 + $0x600] sm:$0xff] %v2226
        %2582 = vst [vmem:[%s259 + $0x608] sm:$0xff] %v2231
        %2583 = vst [vmem:[%s259 + $0x610] sm:$0xff] %v2236
        %2584 = vst [vmem:[%s259 + $0x618] sm:$0xff] %v2241
        %2585 = vst [vmem:[%s259 + $0x620] sm:$0xff] %v2246
        %2586 = vst [vmem:[%s259 + $0x628] sm:$0xff] %v2251
        %2587 = vst [vmem:[%s259 + $0x630] sm:$0xff] %v2256
        %2588 = vst [vmem:[%s259 + $0x638] sm:$0xff] %v2261
        %2589 = vst [vmem:[%s259 + $0x640] sm:$0xff] %v2266
        %2590 = vst [vmem:[%s259 + $0x648] sm:$0xff] %v2271
        %2591 = vst [vmem:[%s259 + $0x650] sm:$0xff] %v2276
        %2592 = vst [vmem:[%s259 + $0x658] sm:$0xff] %v2281
        %2593 = vst [vmem:[%s259 + $0x660] sm:$0xff] %v2286
        %2594 = vst [vmem:[%s259 + $0x668] sm:$0xff] %v2291
        %2595 = vst [vmem:[%s259 + $0x670] sm:$0xff] %v2296
        %2596 = vst [vmem:[%s259 + $0x678] sm:$0xff] %v2301
        %2597 = vst [vmem:[%s259 + $0x680] sm:$0xff] %v2306
        %2598 = vst [vmem:[%s259 + $0x688] sm:$0xff] %v2311
        %2599 = vst [vmem:[%s259 + $0x690] sm:$0xff] %v2316
        %2600 = vst [vmem:[%s259 + $0x698] sm:$0xff] %v2321
        %2601 = vst [vmem:[%s259 + $0x6a0] sm:$0xff] %v2326
        %2602 = vst [vmem:[%s259 + $0x6a8] sm:$0xff] %v2331
        %2603 = vst [vmem:[%s259 + $0x6b0] sm:$0xff] %v2336
        %2604 = vst [vmem:[%s259 + $0x6b8] sm:$0xff] %v2341
        %2605 = vst [vmem:[%s259 + $0x6c0] sm:$0xff] %v2346
        %2606 = vst [vmem:[%s259 + $0x6c8] sm:$0xff] %v2351
        %2607 = vst [vmem:[%s259 + $0x6d0] sm:$0xff] %v2356
        %2608 = vst [vmem:[%s259 + $0x6d8] sm:$0xff] %v2361
        %2609 = vst [vmem:[%s259 + $0x6e0] sm:$0xff] %v2366
        %2610 = vst [vmem:[%s259 + $0x6e8] sm:$0xff] %v2371
        %2611 = vst [vmem:[%s259 + $0x6f0] sm:$0xff] %v2376
        %2612 = vst [vmem:[%s259 + $0x6f8] sm:$0xff] %v2381
        %2613 = vst [vmem:[%s259 + $0x700] sm:$0xff] %v2386
        %p2614 = scmp.lt.s32.totalorder %s22, 1
        %s2615 = scalar_select %p2614, %s22, 1
        %p2616 = scmp.lt.s32.totalorder %s23, 1
        %s2617 = scalar_select %p2616, %s23, 1
        %s2618 = smul.addr %s2617, 225
        %s2619 = smul.addr %s2615, 450
        %s2620 = sadd.s32 %s2618, %s2619
        %s2621 = smul.addr %s2620, 8
        %s2622 = scalar_lea.vmem %s4, %s2621
        // Predicated region
        $region41: #{psp_dec_forward.3} parent=35 // pred_check
          %p2623 = pneg %p144
        $region42: #{psp_dec_forward.3} parent=35 // pred_check_branch
          %2625 = sbr.rel (%p2623) target = $region44
        $region43: #{psp_dec_forward.3} parent=35 // pred_region
          _
        $region44: #{psp_dec_forward.3} parent=35 // pred_fallthru
          _
      $region36: #{psp_dec_forward.3} parent=5 // pred_fallthru
        _
      %p2626 = scmp.le.s32.totalorder 2, %s13
      // Predicated region
      $region45: #{psp_dec_forward.3} parent=5 // pred_check
        %p2627 = pneg %p2626
      $region46: #{psp_dec_forward.3} parent=5 // pred_check_branch
        %2629 = sbr.rel (%p2627) target = $region48
      $region47: #{psp_dec_forward.3} parent=5 // pred_region
        %s2630 = ssub.s32 %s13, 2
        // Predicated region
        $region49: #{psp_dec_forward.3} parent=47 // pred_check
          %p2631 = pneg %p150
        $region50: #{psp_dec_forward.3} parent=47 // pred_check_branch
          %2633 = sbr.rel (%p2631) target = $region52
        $region51: #{psp_dec_forward.3} parent=47 // pred_region
          %p2634 = scmp.lt.s32.totalorder %s24, 1
          %s2635 = scalar_select %p2634, %s24, 1
          %p2636 = scmp.lt.s32.totalorder %s25, 1
          %s2637 = scalar_select %p2636, %s25, 1
          %s2638 = smul.addr %s2637, 225
          %s2639 = smul.addr %s2635, 450
          %s2640 = sadd.s32 %s2638, %s2639
          %s2641 = smul.addr %s2640, 8
          %s2642 = scalar_lea.vmem %s4, %s2641
        $region52: #{psp_dec_forward.3} parent=47 // pred_fallthru
          _
      $region48: #{psp_dec_forward.3} parent=5 // pred_fallthru
        _
    $region6: #{psp_dec_forward.3} parent=1 // loop_footer
      %s17 = sadd.s32 1, %s13
    $region7: #{psp_dec_forward.3} parent=1 // loop_footer_branch
      %12 = sbr.rel target = $region3
    $region8: #{psp_dec_forward.3} parent=1 // loop_exit
      _
    %2643 = vsyncpa [#allocation3], 1
    %s2644 = scalar_lea.sflag [#allocation3], 1
    %2645 = vsyncpa %s2644, 1

</llo_original>
